<compile_context>
chip_gen: v7x
topology: tpu7x:2x2x1
jax: 0.10.0
libtpu: 0.0.40
codegen_flags: <defaults>
</compile_context>

<pallas_src>
from functools import partial

import jax
import jax.numpy as jnp
from jax.experimental import pallas as pl
from jax.experimental.pallas import tpu as pltpu

EPS = 1e-5
VMEM_LIMIT = 48 * 1024 * 1024   # fits v7x (64 MiB/TC) with headroom; fine on v5e/v6e
TM_TARGET = 1024                # row-tile target for the final 1x1 matmul


def _pick_tm(m, target):
    """Largest divisor of m that is <= target and sublane-aligned (or m itself)."""
    for t in range(min(m, target), 0, -1):
        if m % t == 0 and (t % 8 == 0 or t == m):
            return t
    return None


def _fold_bn(gamma, beta, mean, var):
    scale = gamma / jnp.sqrt(var + EPS)
    return scale, beta - mean * scale


# ---------------------------------------------------------------------------
# Kernel A: fused  conv1(1x1)+BN1+ReLU  ->  conv2(3x3, pad=1, stride=1)+BN2+ReLU
# Grid = (batch,).  One batch item per grid step (whole image resident in VMEM).
#   x_ref : (H, W, Cin)          activation block (batch dim squeezed)
#   w1    : (Cin, Cmid)          BN1 scale folded
#   b1    : (1, Cmid)
#   w2    : (9, Cmid, Cmid)      tap-major (dy*3+dx), BN2 scale folded
#   b2    : (1, Cmid)
#   o_ref : (H*W, Cmid)          lane-dense 2-D slab, consumed directly by conv3
#   y1_scr: (H+2, W+2, Cmid)     zero-haloed conv1 output (VMEM scratch)
# ---------------------------------------------------------------------------
def _fused_conv1_conv2_kernel(x_ref, w1_ref, b1_ref, w2_ref, b2_ref, o_ref, y1_scr,
                              *, h, w, cmid):
    cin = x_ref.shape[-1]

    # conv1 (1x1) + bias + ReLU into the zero-haloed scratch (halo = conv2's padding=1).
    y1_scr[...] = jnp.zeros_like(y1_scr)
    x2d = x_ref[...].reshape(h * w, cin)
    y1 = jnp.dot(x2d, w1_ref[...], preferred_element_type=jnp.float32)
    y1 = jnp.maximum(y1 + b1_ref[...], 0.0)
    y1_scr[pl.ds(1, h), pl.ds(1, w), :] = y1.reshape(h, w, cmid).astype(y1_scr.dtype)

    # conv2 (3x3, stride=1, pad=1): 9 accumulating matmuls, no im2col materialization.
    acc = jnp.zeros((h * w, cmid), jnp.float32)
    for dy in range(3):
        for dx in range(3):
            tap = y1_scr[pl.ds(dy, h), pl.ds(dx, w), :].reshape(h * w, cmid)
            acc = acc + jnp.dot(tap, w2_ref[dy * 3 + dx],
                                preferred_element_type=jnp.float32)
    o_ref[...] = jnp.maximum(acc + b2_ref[...], 0.0).astype(o_ref.dtype)


def fused_conv1_conv2(x_nhwc, w1, b1, w2, b2, *, compute_dtype):
    n, h, w, cin = x_nhwc.shape
    cmid = w1.shape[-1]
    isz = jnp.dtype(compute_dtype).itemsize

    # VMEM residency estimate (x / y2 blocks are double-buffered across the batch grid).
    est = (2 * h * w * cin * isz + 2 * h * w * cmid * isz
           + (h + 2) * (w + 2) * cmid * isz + h * w * cmid * 4
           + (cin * cmid + 9 * cmid * cmid) * isz)
    assert est < VMEM_LIMIT, f"fused conv1+conv2 VMEM estimate {est} > {VMEM_LIMIT}"

    return pl.pallas_call(
        partial(_fused_conv1_conv2_kernel, h=h, w=w, cmid=cmid),
        out_shape=jax.ShapeDtypeStruct((n, h * w, cmid), compute_dtype),
        grid_spec=pltpu.PrefetchScalarGridSpec(
            num_scalar_prefetch=0,
            grid=(n,),
            in_specs=[
                pl.BlockSpec((None, h, w, cin), lambda b: (b, 0, 0, 0)),
                pl.BlockSpec((cin, cmid), lambda b: (0, 0)),
                pl.BlockSpec((1, cmid), lambda b: (0, 0)),
                pl.BlockSpec((9, cmid, cmid), lambda b: (0, 0, 0)),
                pl.BlockSpec((1, cmid), lambda b: (0, 0)),
            ],
            out_specs=pl.BlockSpec((None, h * w, cmid), lambda b: (b, 0, 0)),
            scratch_shapes=[pltpu.VMEM((h + 2, w + 2, cmid), compute_dtype)],
        ),
        compiler_params=pltpu.CompilerParams(
            dimension_semantics=("parallel",),
            vmem_limit_bytes=VMEM_LIMIT),
    )(x_nhwc, w1, b1, w2, b2)


# ---------------------------------------------------------------------------
# Kernel B: conv3 (1x1) + BN3(bias only, scale folded) + residual add + ReLU.
# Grid over M = N*H*W row tiles (tm is a divisor of M -> no per-call pad/slice).
# ---------------------------------------------------------------------------
def _conv1x1_add_relu_kernel(x_ref, w_ref, b_ref, id_ref, o_ref):
    y = jnp.dot(x_ref[...], w_ref[...], preferred_element_type=jnp.float32)
    y = y + b_ref[...] + id_ref[...].astype(jnp.float32)
    o_ref[...] = jnp.maximum(y, 0.0).astype(o_ref.dtype)


def conv1x1_add_relu(x2d, w, b, id2d, *, out_dtype):
    m, cmid = x2d.shape
    cexp = w.shape[-1]
    tm = _pick_tm(m, TM_TARGET)
    m_pad = m
    if tm is None:
        # Rare fallback (no sublane-aligned divisor <= target): pad once, slice once.
        tm = min(TM_TARGET, ((m + 7) // 8) * 8)
        m_pad = ((m + tm - 1) // tm) * tm
        x2d = jnp.pad(x2d, ((0, m_pad - m), (0, 0)))
        id2d = jnp.pad(id2d, ((0, m_pad - m), (0, 0)))

    out = pl.pallas_call(
        _conv1x1_add_relu_kernel,
        out_shape=jax.ShapeDtypeStruct((m_pad, cexp), out_dtype),
        grid_spec=pltpu.PrefetchScalarGridSpec(
            num_scalar_prefetch=0,
            grid=(m_pad // tm,),
            in_specs=[pl.BlockSpec((tm, cmid), lambda i: (i, 0)),
                      pl.BlockSpec((cmid, cexp), lambda i: (0, 0)),
                      pl.BlockSpec((1, cexp), lambda i: (0, 0)),
                      pl.BlockSpec((tm, cexp), lambda i: (i, 0))],
            out_specs=pl.BlockSpec((tm, cexp), lambda i: (i, 0)),
        ),
        compiler_params=pltpu.CompilerParams(
            dimension_semantics=("parallel",),
            vmem_limit_bytes=VMEM_LIMIT),
    )(x2d, w, b, id2d)
    return out[:m] if m_pad != m else out


# ---------------------------------------------------------------------------
# Parameter preparation (one-time): BN folding into weights, layout transposes.
# ---------------------------------------------------------------------------
def prepare_params(p, *, compute_dtype=jnp.float32):
    cmid, cin = p["conv1_w"].shape[:2]        # conv1: OIHW (cmid, cin, 1, 1)
    cexp = p["conv3_w"].shape[0]              # conv3: OIHW (cexp, cmid, 1, 1)

    s1, b1 = _fold_bn(p["bn1_g"], p["bn1_b"], p["bn1_m"], p["bn1_v"])
    s2, b2 = _fold_bn(p["bn2_g"], p["bn2_b"], p["bn2_m"], p["bn2_v"])
    s3, b3 = _fold_bn(p["bn3_g"], p["bn3_b"], p["bn3_m"], p["bn3_v"])

    # BN scales folded into the conv weights -> kernel epilogues are bias-add only.
    w1 = (p["conv1_w"][:, :, 0, 0].T * s1[None, :]).astype(compute_dtype)       # (cin, cmid)
    w2 = jnp.transpose(p["conv2_w"], (2, 3, 1, 0)) * s2[None, None, None, :]    # (3,3,ci,co)
    w2 = w2.reshape(9, cmid, cmid).astype(compute_dtype)                        # tap-major
    w3 = (p["conv3_w"][:, :, 0, 0].T * s3[None, :]).astype(compute_dtype)       # (cmid, cexp)

    row = lambda v: v.reshape(1, -1).astype(jnp.float32)
    return {"cin": cin, "cmid": cmid, "cexp": cexp,
            "w1": w1, "b1": row(b1),
            "w2": w2, "b2": row(b2),
            "w3": w3, "b3": row(b3),
            "compute_dtype": compute_dtype}


# ---------------------------------------------------------------------------
# Forward pass (BasicBlock2 with downsample=None => stride must be 1)
# ---------------------------------------------------------------------------
def basic_block2_forward(x_nchw, pp, *, stride=1):
    if stride != 1:
        # TODO(synk): strided conv2 + a downsample branch are not implemented
        # (downsample=None requires matching spatial dims for the residual add).
        raise NotImplementedError("BasicBlock2 with downsample=None requires stride==1")
    cdt = pp["compute_dtype"]
    x = jnp.transpose(x_nchw, (0, 2, 3, 1))     # NCHW -> NHWC (single boundary pass)
    x_c = x.astype(cdt)                          # bf16 path: cast once, reused as identity
    n, h, w, cin = x_c.shape
    assert cin == pp["cin"] == pp["cexp"], "residual add requires cin == cexp"

    y2 = fused_conv1_conv2(x_c, pp["w1"], pp["b1"], pp["w2"], pp["b2"],
                           compute_dtype=cdt)    # (n, h*w, cmid)

    m = n * h * w
    out = conv1x1_add_relu(y2.reshape(m, pp["cmid"]), pp["w3"], pp["b3"],
                           x_c.reshape(m, pp["cexp"]), out_dtype=jnp.float32)
    out = out.reshape(n, h, w, pp["cexp"])
    return jnp.transpose(out, (0, 3, 1, 2))      # NHWC -> NCHW


# ---------------------------------------------------------------------------
# Pure-JAX reference (mirrors the PyTorch module in eval mode) for verification
# ---------------------------------------------------------------------------
def _ref_forward(x, p, *, stride=1):
    def conv(x, w, stride=1, pad=0):
        return jax.lax.conv_general_dilated(
            x, w, (stride, stride), [(pad, pad), (pad, pad)],
            dimension_numbers=("NCHW", "OIHW", "NCHW"))

    def bn(x, g, b, m, v):
        s = g / jnp.sqrt(v + EPS)
        return x * s[None, :, None, None] + (b - m * s)[None, :, None, None]

    identity = x
    y = jax.nn.relu(bn(conv(x, p["conv1_w"]), p["bn1_g"], p["bn1_b"], p["bn1_m"], p["bn1_v"]))
    y = jax.nn.relu(bn(conv(y, p["conv2_w"], stride=stride, pad=1),
                       p["bn2_g"], p["bn2_b"], p["bn2_m"], p["bn2_v"]))
    y = bn(conv(y, p["conv3_w"]), p["bn3_g"], p["bn3_b"], p["bn3_m"], p["bn3_v"])
    return jax.nn.relu(y + identity)


# ---------------------------------------------------------------------------
if __name__ == "__main__":
    # downsample=None => in_channels == out_channels * expansion, stride == 1
    N, H, W = 2, 16, 16
    out_channels = 8
    expansion = 4
    in_channels = out_channels * expansion   # 32

    key = jax.random.PRNGKey(0)
    ks = jax.random.split(key, 16)

    def bn_params(k0, k1, k2, k3, c):
        return (1.0 + 0.1 * jax.random.normal(k0, (c,), jnp.float32),   # gamma
                0.1 * jax.random.normal(k1, (c,), jnp.float32),         # beta
                0.1 * jax.random.normal(k2, (c,), jnp.float32),         # running_mean
                jax.random.uniform(k3, (c,), jnp.float32, 0.5, 1.5))    # running_var

    g1, b1, m1, v1 = bn_params(ks[3], ks[4], ks[5], ks[6], out_channels)
    g2, b2, m2, v2 = bn_params(ks[7], ks[8], ks[9], ks[10], out_channels)
    g3, b3, m3, v3 = bn_params(ks[11], ks[12], ks[13], ks[14], in_channels)

    params = {
        "conv1_w": 0.1 * jax.random.normal(ks[0], (out_channels, in_channels, 1, 1), jnp.float32),
        "conv2_w": 0.1 * jax.random.normal(ks[1], (out_channels, out_channels, 3, 3), jnp.float32),
        "conv3_w": 0.1 * jax.random.normal(ks[2], (in_channels, out_channels, 1, 1), jnp.float32),
        "bn1_g": g1, "bn1_b": b1, "bn1_m": m1, "bn1_v": v1,
        "bn2_g": g2, "bn2_b": b2, "bn2_m": m2, "bn2_v": v2,
        "bn3_g": g3, "bn3_b": b3, "bn3_m": m3, "bn3_v": v3,
    }

    x = jax.random.normal(ks[15], (N, in_channels, H, W), jnp.float32)

    ref = jax.block_until_ready(_ref_forward(x, params, stride=1))

    # f32 compute path: exact eval-mode module semantics.
    pp32 = prepare_params(params, compute_dtype=jnp.float32)
    fwd32 = jax.jit(lambda xx: basic_block2_forward(xx, pp32, stride=1))
    out32 = jax.block_until_ready(fwd32(x))
    assert out32.shape == ref.shape == (N, in_channels, H, W)
    err32 = float(jnp.max(jnp.abs(out32 - ref)))
    assert err32 < 1e-3, f"f32 max abs err {err32}"

    # bf16 MXU path: activations/weights/identity in bf16, f32 accumulation + epilogue.
    ppbf = prepare_params(params, compute_dtype=jnp.bfloat16)
    fwdbf = jax.jit(lambda xx: basic_block2_forward(xx, ppbf, stride=1))
    outbf = jax.block_until_ready(fwdbf(x))
    errbf = float(jnp.max(jnp.abs(outbf - ref)))
    assert errbf < 0.2, f"bf16 max abs err {errbf}"

    print("KERNEL_OK")
</pallas_src>

<mosaic_0001>
module attributes {stable_mosaic.version = 11 : i64} {
  func.func @_fused_conv1_conv2_kernel(%arg0: i32, %arg1: memref<1x16x16x32xf32, #tpu.memory_space<vmem>>, %arg2: memref<32x8xf32, #tpu.memory_space<vmem>>, %arg3: memref<1x8xf32, #tpu.memory_space<vmem>>, %arg4: memref<9x8x8xf32, #tpu.memory_space<vmem>>, %arg5: memref<1x8xf32, #tpu.memory_space<vmem>>, %arg6: memref<1x256x8xf32, #tpu.memory_space<vmem>>, %arg7: memref<18x18x8xf32, #tpu.memory_space<vmem>>) attributes {dimension_semantics = [#tpu.dimension_semantics<parallel>], iteration_bounds = array<i64: 2>, scalar_prefetch = 0 : i64, scratch_operands = 1 : i64, tpu.core_type = #tpu.core_type<tc>, window_params = [{transform_indices = @transform_0, window_bounds = array<i64: 1, 16, 16, 32>}, {pipeline_mode = #tpu.pipeline_mode<synchronous>, transform_indices = @transform_1, window_bounds = array<i64: 32, 8>}, {pipeline_mode = #tpu.pipeline_mode<synchronous>, transform_indices = @transform_2, window_bounds = array<i64: 1, 8>}, {pipeline_mode = #tpu.pipeline_mode<synchronous>, transform_indices = @transform_3, window_bounds = array<i64: 9, 8, 8>}, {pipeline_mode = #tpu.pipeline_mode<synchronous>, transform_indices = @transform_4, window_bounds = array<i64: 1, 8>}, {transform_indices = @transform_5, window_bounds = array<i64: 1, 256, 8>}]} {
    %cst = arith.constant 0.000000e+00 : f32
    %0 = vector.broadcast %cst : f32 to vector<18x18x8xf32>
    %c0 = arith.constant 0 : index
    %c0_0 = arith.constant 0 : index
    %c0_1 = arith.constant 0 : index
    %1 = vector.load %arg7[%c0, %c0_0, %c0_1] : memref<18x18x8xf32, #tpu.memory_space<vmem>>, vector<18x18x8xf32>
    tpu.vector_store %arg7[%c0, %c0_0, %c0_1], %0 {strides = array<i32>} : memref<18x18x8xf32, #tpu.memory_space<vmem>>, vector<18x18x8xf32>,
    %c0_2 = arith.constant 0 : index
    %c0_3 = arith.constant 0 : index
    %c0_4 = arith.constant 0 : index
    %c0_5 = arith.constant 0 : index
    %2 = vector.load %arg1[%c0_2, %c0_3, %c0_4, %c0_5] : memref<1x16x16x32xf32, #tpu.memory_space<vmem>>, vector<1x16x16x32xf32>
    %3 = vector.shape_cast %2 : vector<1x16x16x32xf32> to vector<16x16x32xf32>
    %4 = vector.shape_cast %3 : vector<16x16x32xf32> to vector<256x32xf32>
    %c0_6 = arith.constant 0 : index
    %c0_7 = arith.constant 0 : index
    %5 = vector.load %arg2[%c0_6, %c0_7] : memref<32x8xf32, #tpu.memory_space<vmem>>, vector<32x8xf32>
    %cst_8 = arith.constant dense<0.000000e+00> : vector<256x8xf32>
    %6 = tpu.matmul %4, %5, %cst_8 {dimension_numbers = #tpu.dot_dimension_numbers<[1], [0], [0], [1], [0, 0, 1, 1], [], []>} : vector<256x32xf32>, vector<32x8xf32>, vector<256x8xf32> -> vector<256x8xf32>
    %c0_9 = arith.constant 0 : index
    %c0_10 = arith.constant 0 : index
    %7 = vector.load %arg3[%c0_9, %c0_10] : memref<1x8xf32, #tpu.memory_space<vmem>>, vector<1x8xf32>
    %8 = vector.broadcast %7 : vector<1x8xf32> to vector<256x8xf32>
    %9 = arith.addf %6, %8 : vector<256x8xf32>
    %cst_11 = arith.constant 0.000000e+00 : f32
    %10 = vector.broadcast %cst_11 : f32 to vector<256x8xf32>
    %11 = arith.maximumf %9, %10 : vector<256x8xf32>
    %12 = vector.shape_cast %11 : vector<256x8xf32> to vector<16x16x8xf32>
    %c1 = arith.constant 1 : index
    %c1_12 = arith.constant 1 : index
    %c0_13 = arith.constant 0 : index
    %13 = vector.load %arg7[%c1, %c1_12, %c0_13] : memref<18x18x8xf32, #tpu.memory_space<vmem>>, vector<16x16x8xf32>
    tpu.vector_store %arg7[%c1, %c1_12, %c0_13], %12 {strides = array<i32>} : memref<18x18x8xf32, #tpu.memory_space<vmem>>, vector<16x16x8xf32>,
    %cst_14 = arith.constant 0.000000e+00 : f32
    %14 = vector.broadcast %cst_14 : f32 to vector<256x8xf32>
    %c0_15 = arith.constant 0 : index
    %c0_16 = arith.constant 0 : index
    %c0_17 = arith.constant 0 : index
    %15 = vector.load %arg7[%c0_15, %c0_16, %c0_17] : memref<18x18x8xf32, #tpu.memory_space<vmem>>, vector<16x16x8xf32>
    %16 = vector.shape_cast %15 : vector<16x16x8xf32> to vector<256x8xf32>
    %c0_18 = arith.constant 0 : index
    %c0_19 = arith.constant 0 : index
    %c0_20 = arith.constant 0 : index
    %17 = vector.load %arg4[%c0_18, %c0_19, %c0_20] : memref<9x8x8xf32, #tpu.memory_space<vmem>>, vector<1x8x8xf32>
    %18 = vector.shape_cast %17 : vector<1x8x8xf32> to vector<8x8xf32>
    %cst_21 = arith.constant dense<0.000000e+00> : vector<256x8xf32>
    %19 = tpu.matmul %16, %18, %cst_21 {dimension_numbers = #tpu.dot_dimension_numbers<[1], [0], [0], [1], [0, 0, 1, 1], [], []>} : vector<256x8xf32>, vector<8x8xf32>, vector<256x8xf32> -> vector<256x8xf32>
    %20 = arith.addf %14, %19 : vector<256x8xf32>
    %c0_22 = arith.constant 0 : index
    %c1_23 = arith.constant 1 : index
    %c0_24 = arith.constant 0 : index
    %21 = vector.load %arg7[%c0_22, %c1_23, %c0_24] : memref<18x18x8xf32, #tpu.memory_space<vmem>>, vector<16x16x8xf32>
    %22 = vector.shape_cast %21 : vector<16x16x8xf32> to vector<256x8xf32>
    %c1_25 = arith.constant 1 : index
    %c0_26 = arith.constant 0 : index
    %c0_27 = arith.constant 0 : index
    %23 = vector.load %arg4[%c1_25, %c0_26, %c0_27] : memref<9x8x8xf32, #tpu.memory_space<vmem>>, vector<1x8x8xf32>
    %24 = vector.shape_cast %23 : vector<1x8x8xf32> to vector<8x8xf32>
    %cst_28 = arith.constant dense<0.000000e+00> : vector<256x8xf32>
    %25 = tpu.matmul %22, %24, %cst_28 {dimension_numbers = #tpu.dot_dimension_numbers<[1], [0], [0], [1], [0, 0, 1, 1], [], []>} : vector<256x8xf32>, vector<8x8xf32>, vector<256x8xf32> -> vector<256x8xf32>
    %26 = arith.addf %20, %25 : vector<256x8xf32>
    %c0_29 = arith.constant 0 : index
    %c2 = arith.constant 2 : index
    %c0_30 = arith.constant 0 : index
    %27 = vector.load %arg7[%c0_29, %c2, %c0_30] : memref<18x18x8xf32, #tpu.memory_space<vmem>>, vector<16x16x8xf32>
    %28 = vector.shape_cast %27 : vector<16x16x8xf32> to vector<256x8xf32>
    %c2_31 = arith.constant 2 : index
    %c0_32 = arith.constant 0 : index
    %c0_33 = arith.constant 0 : index
    %29 = vector.load %arg4[%c2_31, %c0_32, %c0_33] : memref<9x8x8xf32, #tpu.memory_space<vmem>>, vector<1x8x8xf32>
    %30 = vector.shape_cast %29 : vector<1x8x8xf32> to vector<8x8xf32>
    %cst_34 = arith.constant dense<0.000000e+00> : vector<256x8xf32>
    %31 = tpu.matmul %28, %30, %cst_34 {dimension_numbers = #tpu.dot_dimension_numbers<[1], [0], [0], [1], [0, 0, 1, 1], [], []>} : vector<256x8xf32>, vector<8x8xf32>, vector<256x8xf32> -> vector<256x8xf32>
    %32 = arith.addf %26, %31 : vector<256x8xf32>
    %c1_35 = arith.constant 1 : index
    %c0_36 = arith.constant 0 : index
    %c0_37 = arith.constant 0 : index
    %33 = vector.load %arg7[%c1_35, %c0_36, %c0_37] : memref<18x18x8xf32, #tpu.memory_space<vmem>>, vector<16x16x8xf32>
    %34 = vector.shape_cast %33 : vector<16x16x8xf32> to vector<256x8xf32>
    %c3 = arith.constant 3 : index
    %c0_38 = arith.constant 0 : index
    %c0_39 = arith.constant 0 : index
    %35 = vector.load %arg4[%c3, %c0_38, %c0_39] : memref<9x8x8xf32, #tpu.memory_space<vmem>>, vector<1x8x8xf32>
    %36 = vector.shape_cast %35 : vector<1x8x8xf32> to vector<8x8xf32>
    %cst_40 = arith.constant dense<0.000000e+00> : vector<256x8xf32>
    %37 = tpu.matmul %34, %36, %cst_40 {dimension_numbers = #tpu.dot_dimension_numbers<[1], [0], [0], [1], [0, 0, 1, 1], [], []>} : vector<256x8xf32>, vector<8x8xf32>, vector<256x8xf32> -> vector<256x8xf32>
    %38 = arith.addf %32, %37 : vector<256x8xf32>
    %c1_41 = arith.constant 1 : index
    %c1_42 = arith.constant 1 : index
    %c0_43 = arith.constant 0 : index
    %39 = vector.load %arg7[%c1_41, %c1_42, %c0_43] : memref<18x18x8xf32, #tpu.memory_space<vmem>>, vector<16x16x8xf32>
    %40 = vector.shape_cast %39 : vector<16x16x8xf32> to vector<256x8xf32>
    %c4 = arith.constant 4 : index
    %c0_44 = arith.constant 0 : index
    %c0_45 = arith.constant 0 : index
    %41 = vector.load %arg4[%c4, %c0_44, %c0_45] : memref<9x8x8xf32, #tpu.memory_space<vmem>>, vector<1x8x8xf32>
    %42 = vector.shape_cast %41 : vector<1x8x8xf32> to vector<8x8xf32>
    %cst_46 = arith.constant dense<0.000000e+00> : vector<256x8xf32>
    %43 = tpu.matmul %40, %42, %cst_46 {dimension_numbers = #tpu.dot_dimension_numbers<[1], [0], [0], [1], [0, 0, 1, 1], [], []>} : vector<256x8xf32>, vector<8x8xf32>, vector<256x8xf32> -> vector<256x8xf32>
    %44 = arith.addf %38, %43 : vector<256x8xf32>
    %c1_47 = arith.constant 1 : index
    %c2_48 = arith.constant 2 : index
    %c0_49 = arith.constant 0 : index
    %45 = vector.load %arg7[%c1_47, %c2_48, %c0_49] : memref<18x18x8xf32, #tpu.memory_space<vmem>>, vector<16x16x8xf32>
    %46 = vector.shape_cast %45 : vector<16x16x8xf32> to vector<256x8xf32>
    %c5 = arith.constant 5 : index
    %c0_50 = arith.constant 0 : index
    %c0_51 = arith.constant 0 : index
    %47 = vector.load %arg4[%c5, %c0_50, %c0_51] : memref<9x8x8xf32, #tpu.memory_space<vmem>>, vector<1x8x8xf32>
    %48 = vector.shape_cast %47 : vector<1x8x8xf32> to vector<8x8xf32>
    %cst_52 = arith.constant dense<0.000000e+00> : vector<256x8xf32>
    %49 = tpu.matmul %46, %48, %cst_52 {dimension_numbers = #tpu.dot_dimension_numbers<[1], [0], [0], [1], [0, 0, 1, 1], [], []>} : vector<256x8xf32>, vector<8x8xf32>, vector<256x8xf32> -> vector<256x8xf32>
    %50 = arith.addf %44, %49 : vector<256x8xf32>
    %c2_53 = arith.constant 2 : index
    %c0_54 = arith.constant 0 : index
    %c0_55 = arith.constant 0 : index
    %51 = vector.load %arg7[%c2_53, %c0_54, %c0_55] : memref<18x18x8xf32, #tpu.memory_space<vmem>>, vector<16x16x8xf32>
    %52 = vector.shape_cast %51 : vector<16x16x8xf32> to vector<256x8xf32>
    %c6 = arith.constant 6 : index
    %c0_56 = arith.constant 0 : index
    %c0_57 = arith.constant 0 : index
    %53 = vector.load %arg4[%c6, %c0_56, %c0_57] : memref<9x8x8xf32, #tpu.memory_space<vmem>>, vector<1x8x8xf32>
    %54 = vector.shape_cast %53 : vector<1x8x8xf32> to vector<8x8xf32>
    %cst_58 = arith.constant dense<0.000000e+00> : vector<256x8xf32>
    %55 = tpu.matmul %52, %54, %cst_58 {dimension_numbers = #tpu.dot_dimension_numbers<[1], [0], [0], [1], [0, 0, 1, 1], [], []>} : vector<256x8xf32>, vector<8x8xf32>, vector<256x8xf32> -> vector<256x8xf32>
    %56 = arith.addf %50, %55 : vector<256x8xf32>
    %c2_59 = arith.constant 2 : index
    %c1_60 = arith.constant 1 : index
    %c0_61 = arith.constant 0 : index
    %57 = vector.load %arg7[%c2_59, %c1_60, %c0_61] : memref<18x18x8xf32, #tpu.memory_space<vmem>>, vector<16x16x8xf32>
    %58 = vector.shape_cast %57 : vector<16x16x8xf32> to vector<256x8xf32>
    %c7 = arith.constant 7 : index
    %c0_62 = arith.constant 0 : index
    %c0_63 = arith.constant 0 : index
    %59 = vector.load %arg4[%c7, %c0_62, %c0_63] : memref<9x8x8xf32, #tpu.memory_space<vmem>>, vector<1x8x8xf32>
    %60 = vector.shape_cast %59 : vector<1x8x8xf32> to vector<8x8xf32>
    %cst_64 = arith.constant dense<0.000000e+00> : vector<256x8xf32>
    %61 = tpu.matmul %58, %60, %cst_64 {dimension_numbers = #tpu.dot_dimension_numbers<[1], [0], [0], [1], [0, 0, 1, 1], [], []>} : vector<256x8xf32>, vector<8x8xf32>, vector<256x8xf32> -> vector<256x8xf32>
    %62 = arith.addf %56, %61 : vector<256x8xf32>
    %c2_65 = arith.constant 2 : index
    %c2_66 = arith.constant 2 : index
    %c0_67 = arith.constant 0 : index
    %63 = vector.load %arg7[%c2_65, %c2_66, %c0_67] : memref<18x18x8xf32, #tpu.memory_space<vmem>>, vector<16x16x8xf32>
    %64 = vector.shape_cast %63 : vector<16x16x8xf32> to vector<256x8xf32>
    %c8 = arith.constant 8 : index
    %c0_68 = arith.constant 0 : index
    %c0_69 = arith.constant 0 : index
    %65 = vector.load %arg4[%c8, %c0_68, %c0_69] : memref<9x8x8xf32, #tpu.memory_space<vmem>>, vector<1x8x8xf32>
    %66 = vector.shape_cast %65 : vector<1x8x8xf32> to vector<8x8xf32>
    %cst_70 = arith.constant dense<0.000000e+00> : vector<256x8xf32>
    %67 = tpu.matmul %64, %66, %cst_70 {dimension_numbers = #tpu.dot_dimension_numbers<[1], [0], [0], [1], [0, 0, 1, 1], [], []>} : vector<256x8xf32>, vector<8x8xf32>, vector<256x8xf32> -> vector<256x8xf32>
    %68 = arith.addf %62, %67 : vector<256x8xf32>
    %c0_71 = arith.constant 0 : index
    %c0_72 = arith.constant 0 : index
    %69 = vector.load %arg5[%c0_71, %c0_72] : memref<1x8xf32, #tpu.memory_space<vmem>>, vector<1x8xf32>
    %70 = vector.broadcast %69 : vector<1x8xf32> to vector<256x8xf32>
    %71 = arith.addf %68, %70 : vector<256x8xf32>
    %cst_73 = arith.constant 0.000000e+00 : f32
    %72 = vector.broadcast %cst_73 : f32 to vector<256x8xf32>
    %73 = arith.maximumf %71, %72 : vector<256x8xf32>
    %c0_74 = arith.constant 0 : index
    %c0_75 = arith.constant 0 : index
    %c0_76 = arith.constant 0 : index
    %74 = vector.load %arg6[%c0_74, %c0_75, %c0_76] : memref<1x256x8xf32, #tpu.memory_space<vmem>>, vector<1x256x8xf32>
    %75 = vector.shape_cast %74 : vector<1x256x8xf32> to vector<256x8xf32>
    %76 = vector.shape_cast %73 : vector<256x8xf32> to vector<1x256x8xf32>
    tpu.vector_store %arg6[%c0_74, %c0_75, %c0_76], %76 {strides = array<i32>} : memref<1x256x8xf32, #tpu.memory_space<vmem>>, vector<1x256x8xf32>,
    return
  }
  func.func @transform_0(%arg0: i32) -> (i32, i32, i32, i32) {
    %c0_i32 = arith.constant 0 : i32
    %c0_i32_0 = arith.constant 0 : i32
    %c0_i32_1 = arith.constant 0 : i32
    %c0_i32_2 = arith.constant 0 : i32
    return %arg0, %c0_i32, %c0_i32_0, %c0_i32_1 : i32, i32, i32, i32
  }
  func.func @transform_1(%arg0: i32) -> (i32, i32) {
    %c0_i32 = arith.constant 0 : i32
    %c0_i32_0 = arith.constant 0 : i32
    %c0_i32_1 = arith.constant 0 : i32
    return %c0_i32, %c0_i32_0 : i32, i32
  }
  func.func @transform_2(%arg0: i32) -> (i32, i32) {
    %c0_i32 = arith.constant 0 : i32
    %c0_i32_0 = arith.constant 0 : i32
    %c0_i32_1 = arith.constant 0 : i32
    return %c0_i32, %c0_i32_0 : i32, i32
  }
  func.func @transform_3(%arg0: i32) -> (i32, i32, i32) {
    %c0_i32 = arith.constant 0 : i32
    %c0_i32_0 = arith.constant 0 : i32
    %c0_i32_1 = arith.constant 0 : i32
    %c0_i32_2 = arith.constant 0 : i32
    return %c0_i32, %c0_i32_0, %c0_i32_1 : i32, i32, i32
  }
  func.func @transform_4(%arg0: i32) -> (i32, i32) {
    %c0_i32 = arith.constant 0 : i32
    %c0_i32_0 = arith.constant 0 : i32
    %c0_i32_1 = arith.constant 0 : i32
    return %c0_i32, %c0_i32_0 : i32, i32
  }
  func.func @transform_5(%arg0: i32) -> (i32, i32, i32) {
    %c0_i32 = arith.constant 0 : i32
    %c0_i32_0 = arith.constant 0 : i32
    %c0_i32_1 = arith.constant 0 : i32
    return %arg0, %c0_i32, %c0_i32_0 : i32, i32, i32
  }
}

module attributes {stable_mosaic.version = 11 : i64} {
  func.func @_conv1x1_add_relu_kernel(%arg0: i32, %arg1: memref<512x8xf32, #tpu.memory_space<vmem>>, %arg2: memref<8x32xf32, #tpu.memory_space<vmem>>, %arg3: memref<1x32xf32, #tpu.memory_space<vmem>>, %arg4: memref<512x32xf32, #tpu.memory_space<vmem>>, %arg5: memref<512x32xf32, #tpu.memory_space<vmem>>) attributes {dimension_semantics = [#tpu.dimension_semantics<parallel>], iteration_bounds = array<i64: 1>, scalar_prefetch = 0 : i64, scratch_operands = 0 : i64, tpu.core_type = #tpu.core_type<tc>, window_params = [{transform_indices = @transform_0, window_bounds = array<i64: 512, 8>}, {pipeline_mode = #tpu.pipeline_mode<synchronous>, transform_indices = @transform_1, window_bounds = array<i64: 8, 32>}, {pipeline_mode = #tpu.pipeline_mode<synchronous>, transform_indices = @transform_2, window_bounds = array<i64: 1, 32>}, {transform_indices = @transform_3, window_bounds = array<i64: 512, 32>}, {transform_indices = @transform_4, window_bounds = array<i64: 512, 32>}]} {
    %c0 = arith.constant 0 : index
    %c0_0 = arith.constant 0 : index
    %0 = vector.load %arg1[%c0, %c0_0] : memref<512x8xf32, #tpu.memory_space<vmem>>, vector<512x8xf32>
    %c0_1 = arith.constant 0 : index
    %c0_2 = arith.constant 0 : index
    %1 = vector.load %arg2[%c0_1, %c0_2] : memref<8x32xf32, #tpu.memory_space<vmem>>, vector<8x32xf32>
    %cst = arith.constant dense<0.000000e+00> : vector<512x32xf32>
    %2 = tpu.matmul %0, %1, %cst {dimension_numbers = #tpu.dot_dimension_numbers<[1], [0], [0], [1], [0, 0, 1, 1], [], []>} : vector<512x8xf32>, vector<8x32xf32>, vector<512x32xf32> -> vector<512x32xf32>
    %c0_3 = arith.constant 0 : index
    %c0_4 = arith.constant 0 : index
    %3 = vector.load %arg3[%c0_3, %c0_4] : memref<1x32xf32, #tpu.memory_space<vmem>>, vector<1x32xf32>
    %4 = vector.broadcast %3 : vector<1x32xf32> to vector<512x32xf32>
    %5 = arith.addf %2, %4 : vector<512x32xf32>
    %c0_5 = arith.constant 0 : index
    %c0_6 = arith.constant 0 : index
    %6 = vector.load %arg4[%c0_5, %c0_6] : memref<512x32xf32, #tpu.memory_space<vmem>>, vector<512x32xf32>
    %7 = arith.addf %5, %6 : vector<512x32xf32>
    %cst_7 = arith.constant 0.000000e+00 : f32
    %8 = vector.broadcast %cst_7 : f32 to vector<512x32xf32>
    %9 = arith.maximumf %7, %8 : vector<512x32xf32>
    %c0_8 = arith.constant 0 : index
    %c0_9 = arith.constant 0 : index
    %10 = vector.load %arg5[%c0_8, %c0_9] : memref<512x32xf32, #tpu.memory_space<vmem>>, vector<512x32xf32>
    tpu.vector_store %arg5[%c0_8, %c0_9], %9 {strides = array<i32>} : memref<512x32xf32, #tpu.memory_space<vmem>>, vector<512x32xf32>,
    return
  }
  func.func @transform_0(%arg0: i32) -> (i32, i32) {
    %c0_i32 = arith.constant 0 : i32
    %c0_i32_0 = arith.constant 0 : i32
    return %arg0, %c0_i32 : i32, i32
  }
  func.func @transform_1(%arg0: i32) -> (i32, i32) {
    %c0_i32 = arith.constant 0 : i32
    %c0_i32_0 = arith.constant 0 : i32
    %c0_i32_1 = arith.constant 0 : i32
    return %c0_i32, %c0_i32_0 : i32, i32
  }
  func.func @transform_2(%arg0: i32) -> (i32, i32) {
    %c0_i32 = arith.constant 0 : i32
    %c0_i32_0 = arith.constant 0 : i32
    %c0_i32_1 = arith.constant 0 : i32
    return %c0_i32, %c0_i32_0 : i32, i32
  }
  func.func @transform_3(%arg0: i32) -> (i32, i32) {
    %c0_i32 = arith.constant 0 : i32
    %c0_i32_0 = arith.constant 0 : i32
    return %arg0, %c0_i32 : i32, i32
  }
  func.func @transform_4(%arg0: i32) -> (i32, i32) {
    %c0_i32 = arith.constant 0 : i32
    %c0_i32_0 = arith.constant 0 : i32
    return %arg0, %c0_i32 : i32, i32
  }
}

</mosaic_0001>

<llo_original>
// kernel: _lambda_.3
$region0: #{_lambda_.3}
  #allocation0 [shape = 'u32[]', space=smem, size = 0x4, offset = 0x4, fixed_abs, tag = 'smem constant byte address 0x4 - core index']
  #allocation1 [shape = 'u32[144,128]{1,0:T(1,128)}', space=vmem, size = 0x12000, scoped, tag = 'internal scratch']
  %s0 = inlined_call_operand.vmem [shape: f32[512,8], index: 0, kind: input, shape index: {}]
  %s1 = inlined_call_operand.vmem [shape: f32[8,32], index: 1, kind: input, shape index: {}]
  %s2 = inlined_call_operand.vmem [shape: f32[1,32], index: 2, kind: input, shape index: {}]
  %s3 = inlined_call_operand.vmem [shape: f32[512,32], index: 3, kind: input, shape index: {}]
  %s4 = inlined_call_operand.hbm [shape: f32[512,32], index: 4, kind: output, shape index: {}]
  %s5 = sld [smem:[#allocation0]]
  $region26: #{_lambda_.3} parent=0
    _
  %s7 = ssub.s32 1, %s5
  %s8 = scalar_select 0, %s7, %s5
  $region1: #{_lambda_.3} parent=0
    #allocation2 [shape = 'u8[262144]{0}', space=vmem, size = 0x40000, scoped, tag = 'output window, operand 0, single buffered']
    #allocation3 [shape = 's32[1]{0}', space=sflag, size = 0x4, scoped, tag = 'scoped memory for _lambda_.3']
    %9 = vsyncpa [#allocation3], 0
    // Predicated region
    $region2: #{_lambda_.3} parent=1 // pred_check
      _
    $region3: #{_lambda_.3} parent=1 // pred_check_branch
      %11 = sbr.rel (0) target = $region5
    $region4: #{_lambda_.3} parent=1 // pred_region
      _
    $region5: #{_lambda_.3} parent=1 // pred_fallthru
      _
    // Predicated region
    $region6: #{_lambda_.3} parent=1 // pred_check
      _
    $region7: #{_lambda_.3} parent=1 // pred_check_branch
      %13 = sbr.rel (0) target = $region9
    $region8: #{_lambda_.3} parent=1 // pred_region
      _
    $region9: #{_lambda_.3} parent=1 // pred_fallthru
      _
    // Predicated region
    $region10: #{_lambda_.3} parent=1 // pred_check
      _
    $region11: #{_lambda_.3} parent=1 // pred_check_branch
      %15 = sbr.rel (0) target = $region13
    $region12: #{_lambda_.3} parent=1 // pred_region
      _
    $region13: #{_lambda_.3} parent=1 // pred_fallthru
      _
    // Predicated region
    $region14: #{_lambda_.3} parent=1 // pred_check
      _
    $region15: #{_lambda_.3} parent=1 // pred_check_branch
      %17 = sbr.rel (0) target = $region17
    $region16: #{_lambda_.3} parent=1 // pred_region
      _
    $region17: #{_lambda_.3} parent=1 // pred_fallthru
      _
    %v18 = vld [vmem:[%s0] sm:$0xff]
    %v19 = vld [vmem:[%s0 + $0x8] sm:$0xff]
    %v20 = vld [vmem:[%s0 + $0x10] sm:$0xff]
    %v21 = vld [vmem:[%s0 + $0x18] sm:$0xff]
    %v22 = vld [vmem:[%s0 + $0x20] sm:$0xff]
    %v23 = vld [vmem:[%s0 + $0x28] sm:$0xff]
    %v24 = vld [vmem:[%s0 + $0x30] sm:$0xff]
    %v25 = vld [vmem:[%s0 + $0x38] sm:$0xff]
    %v26 = vld [vmem:[%s0 + $0x40] sm:$0xff]
    %v27 = vld [vmem:[%s0 + $0x48] sm:$0xff]
    %v28 = vld [vmem:[%s0 + $0x50] sm:$0xff]
    %v29 = vld [vmem:[%s0 + $0x58] sm:$0xff]
    %v30 = vld [vmem:[%s0 + $0x60] sm:$0xff]
    %v31 = vld [vmem:[%s0 + $0x68] sm:$0xff]
    %v32 = vld [vmem:[%s0 + $0x70] sm:$0xff]
    %v33 = vld [vmem:[%s0 + $0x78] sm:$0xff]
    %v34 = vld [vmem:[%s0 + $0x80] sm:$0xff]
    %v35 = vld [vmem:[%s0 + $0x88] sm:$0xff]
    %v36 = vld [vmem:[%s0 + $0x90] sm:$0xff]
    %v37 = vld [vmem:[%s0 + $0x98] sm:$0xff]
    %v38 = vld [vmem:[%s0 + $0xa0] sm:$0xff]
    %v39 = vld [vmem:[%s0 + $0xa8] sm:$0xff]
    %v40 = vld [vmem:[%s0 + $0xb0] sm:$0xff]
    %v41 = vld [vmem:[%s0 + $0xb8] sm:$0xff]
    %v42 = vld [vmem:[%s0 + $0xc0] sm:$0xff]
    %v43 = vld [vmem:[%s0 + $0xc8] sm:$0xff]
    %v44 = vld [vmem:[%s0 + $0xd0] sm:$0xff]
    %v45 = vld [vmem:[%s0 + $0xd8] sm:$0xff]
    %v46 = vld [vmem:[%s0 + $0xe0] sm:$0xff]
    %v47 = vld [vmem:[%s0 + $0xe8] sm:$0xff]
    %v48 = vld [vmem:[%s0 + $0xf0] sm:$0xff]
    %v49 = vld [vmem:[%s0 + $0xf8] sm:$0xff]
    %v50 = vld [vmem:[%s0 + $0x100] sm:$0xff]
    %v51 = vld [vmem:[%s0 + $0x108] sm:$0xff]
    %v52 = vld [vmem:[%s0 + $0x110] sm:$0xff]
    %v53 = vld [vmem:[%s0 + $0x118] sm:$0xff]
    %v54 = vld [vmem:[%s0 + $0x120] sm:$0xff]
    %v55 = vld [vmem:[%s0 + $0x128] sm:$0xff]
    %v56 = vld [vmem:[%s0 + $0x130] sm:$0xff]
    %v57 = vld [vmem:[%s0 + $0x138] sm:$0xff]
    %v58 = vld [vmem:[%s0 + $0x140] sm:$0xff]
    %v59 = vld [vmem:[%s0 + $0x148] sm:$0xff]
    %v60 = vld [vmem:[%s0 + $0x150] sm:$0xff]
    %v61 = vld [vmem:[%s0 + $0x158] sm:$0xff]
    %v62 = vld [vmem:[%s0 + $0x160] sm:$0xff]
    %v63 = vld [vmem:[%s0 + $0x168] sm:$0xff]
    %v64 = vld [vmem:[%s0 + $0x170] sm:$0xff]
    %v65 = vld [vmem:[%s0 + $0x178] sm:$0xff]
    %v66 = vld [vmem:[%s0 + $0x180] sm:$0xff]
    %v67 = vld [vmem:[%s0 + $0x188] sm:$0xff]
    %v68 = vld [vmem:[%s0 + $0x190] sm:$0xff]
    %v69 = vld [vmem:[%s0 + $0x198] sm:$0xff]
    %v70 = vld [vmem:[%s0 + $0x1a0] sm:$0xff]
    %v71 = vld [vmem:[%s0 + $0x1a8] sm:$0xff]
    %v72 = vld [vmem:[%s0 + $0x1b0] sm:$0xff]
    %v73 = vld [vmem:[%s0 + $0x1b8] sm:$0xff]
    %v74 = vld [vmem:[%s0 + $0x1c0] sm:$0xff]
    %v75 = vld [vmem:[%s0 + $0x1c8] sm:$0xff]
    %v76 = vld [vmem:[%s0 + $0x1d0] sm:$0xff]
    %v77 = vld [vmem:[%s0 + $0x1d8] sm:$0xff]
    %v78 = vld [vmem:[%s0 + $0x1e0] sm:$0xff]
    %v79 = vld [vmem:[%s0 + $0x1e8] sm:$0xff]
    %v80 = vld [vmem:[%s0 + $0x1f0] sm:$0xff]
    %v81 = vld [vmem:[%s0 + $0x1f8] sm:$0xff]
    %v82 = vld [vmem:[%s1] sm:$0xff]
    %v83 = vld [vmem:[%s2] sm:$0x1]
    %v85 = vlaneseq
    %v86 = vshrl.u32 %v85, 7
    %v87 = vsub.s32 0, %v86
    %v88 = vrot.slane %v83, %v87
    %vm90 = vcmask 64512
    %v92 = vsel %vm90, %v18, 0
    %v95 = vsel %vm90, %v19, 0
    %v98 = vsel %vm90, %v20, 0
    %v101 = vsel %vm90, %v21, 0
    %v104 = vsel %vm90, %v22, 0
    %v107 = vsel %vm90, %v23, 0
    %v110 = vsel %vm90, %v24, 0
    %v113 = vsel %vm90, %v25, 0
    %v116 = vsel %vm90, %v26, 0
    %v119 = vsel %vm90, %v27, 0
    %v122 = vsel %vm90, %v28, 0
    %v125 = vsel %vm90, %v29, 0
    %v128 = vsel %vm90, %v30, 0
    %v131 = vsel %vm90, %v31, 0
    %v134 = vsel %vm90, %v32, 0
    %v137 = vsel %vm90, %v33, 0
    %v140 = vsel %vm90, %v34, 0
    %v143 = vsel %vm90, %v35, 0
    %v146 = vsel %vm90, %v36, 0
    %v149 = vsel %vm90, %v37, 0
    %v152 = vsel %vm90, %v38, 0
    %v155 = vsel %vm90, %v39, 0
    %v158 = vsel %vm90, %v40, 0
    %v161 = vsel %vm90, %v41, 0
    %v164 = vsel %vm90, %v42, 0
    %v167 = vsel %vm90, %v43, 0
    %v170 = vsel %vm90, %v44, 0
    %v173 = vsel %vm90, %v45, 0
    %v176 = vsel %vm90, %v46, 0
    %v179 = vsel %vm90, %v47, 0
    %v182 = vsel %vm90, %v48, 0
    %v185 = vsel %vm90, %v49, 0
    %v188 = vsel %vm90, %v50, 0
    %v191 = vsel %vm90, %v51, 0
    %v194 = vsel %vm90, %v52, 0
    %v197 = vsel %vm90, %v53, 0
    %v200 = vsel %vm90, %v54, 0
    %v203 = vsel %vm90, %v55, 0
    %v206 = vsel %vm90, %v56, 0
    %v209 = vsel %vm90, %v57, 0
    %v212 = vsel %vm90, %v58, 0
    %v215 = vsel %vm90, %v59, 0
    %v218 = vsel %vm90, %v60, 0
    %v221 = vsel %vm90, %v61, 0
    %v224 = vsel %vm90, %v62, 0
    %v227 = vsel %vm90, %v63, 0
    %v230 = vsel %vm90, %v64, 0
    %v233 = vsel %vm90, %v65, 0
    %v236 = vsel %vm90, %v66, 0
    %v239 = vsel %vm90, %v67, 0
    %v242 = vsel %vm90, %v68, 0
    %v245 = vsel %vm90, %v69, 0
    %v248 = vsel %vm90, %v70, 0
    %v251 = vsel %vm90, %v71, 0
    %v254 = vsel %vm90, %v72, 0
    %v257 = vsel %vm90, %v73, 0
    %v260 = vsel %vm90, %v74, 0
    %v263 = vsel %vm90, %v75, 0
    %v266 = vsel %vm90, %v76, 0
    %v269 = vsel %vm90, %v77, 0
    %v272 = vsel %vm90, %v78, 0
    %v275 = vsel %vm90, %v79, 0
    %v278 = vsel %vm90, %v80, 0
    %v281 = vsel %vm90, %v81, 0
    %283 = vmatprep.subr.mxu0 0.0
    %284 = vmatpush1.msra.mxu0 %v82
    %285 = vmatprep.subr.mxu0 0.0
    %286 = vmatpush1.msra.mxu0 0.0
    %287 = vmatprep.subr.mxu0 0.0
    %288 = vmatpush1.msra.mxu0 0.0
    %289 = vmatprep.subr.mxu0 0.0
    %290 = vmatpush1.msra.mxu0 0.0
    %291 = vmatprep.subr.mxu0 0.0
    %292 = vmatpush1.msra.mxu0 0.0
    %293 = vmatprep.subr.mxu0 0.0
    %294 = vmatpush1.msra.mxu0 0.0
    %295 = vmatprep.subr.mxu0 0.0
    %296 = vmatpush1.msra.mxu0 0.0
    %297 = vmatprep.subr.mxu0 0.0
    %298 = vmatpush1.msra.mxu0 0.0
    %299 = vmatprep.subr.mxu0 0.0
    %300 = vmatpush1.msra.mxu0 0.0
    %301 = vmatprep.subr.mxu0 0.0
    %302 = vmatpush1.msra.mxu0 0.0
    %303 = vmatprep.subr.mxu0 0.0
    %304 = vmatpush1.msra.mxu0 0.0
    %305 = vmatprep.subr.mxu0 0.0
    %306 = vmatpush1.msra.mxu0 0.0
    %307 = vmatprep.subr.mxu0 0.0
    %308 = vmatpush1.msra.mxu0 0.0
    %309 = vmatprep.subr.mxu0 0.0
    %310 = vmatpush1.msra.mxu0 0.0
    %311 = vmatprep.subr.mxu0 0.0
    %312 = vmatpush1.msra.mxu0 0.0
    %313 = vmatprep.subr.mxu0 0.0
    %314 = vmatpush1.msra.mxu0 0.0
    %315 = vmatprep.subr.mxu0 0.0
    %316 = vmatpush1.msra.mxu0 0.0
    %317 = vmatprep.subr.mxu0 0.0
    %318 = vmatpush1.msra.mxu0 0.0
    %319 = vmatprep.subr.mxu0 0.0
    %320 = vmatpush1.msra.mxu0 0.0
    %321 = vmatprep.subr.mxu0 0.0
    %322 = vmatpush1.msra.mxu0 0.0
    %323 = vmatprep.subr.mxu0 0.0
    %324 = vmatpush1.msra.mxu0 0.0
    %325 = vmatprep.subr.mxu0 0.0
    %326 = vmatpush1.msra.mxu0 0.0
    %327 = vmatprep.subr.mxu0 0.0
    %328 = vmatpush1.msra.mxu0 0.0
    %329 = vmatprep.subr.mxu0 0.0
    %330 = vmatpush1.msra.mxu0 0.0
    %331 = vmatprep.subr.mxu0 0.0
    %332 = vmatpush1.msra.mxu0 0.0
    %333 = vmatprep.subr.mxu0 0.0
    %334 = vmatpush1.msra.mxu0 0.0
    %335 = vmatprep.subr.mxu0 0.0
    %336 = vmatpush1.msra.mxu0 0.0
    %337 = vmatprep.subr.mxu0 0.0
    %338 = vmatpush1.msra.mxu0 0.0
    %339 = vmatprep.subr.mxu0 0.0
    %340 = vmatpush1.msra.mxu0 0.0
    %341 = vmatprep.subr.mxu0 0.0
    %342 = vmatpush1.msra.mxu0 0.0
    %343 = vmatprep.subr.mxu0 0.0
    %344 = vmatpush1.msra.mxu0 0.0
    %345 = vmatprep.subr.mxu0 0.0
    %346 = vmatpush1.msra.mxu0 0.0
    %347 = vmatprep.mubr.f32.mxu0 0.0
    %348 = vmatmul.mubr.f32.gmra.mrb[0].mxu0 %v92
    %v349 = vpop.f32.mrb[0].mxu0
    %v350 = vadd.f32 %v88, %v349
    %v351 = vpop.f32.mrb[0].mxu0
    %352 = vmatprep.mubr.f32.mxu0 0.0
    %353 = vmatmul.mubr.f32.gmra.mrb[0].mxu0 %v95
    %v354 = vpop.f32.mrb[0].mxu0
    %v355 = vadd.f32 %v88, %v354
    %v356 = vpop.f32.mrb[0].mxu0
    %357 = vmatprep.mubr.f32.mxu0 0.0
    %358 = vmatmul.mubr.f32.gmra.mrb[0].mxu0 %v98
    %v359 = vpop.f32.mrb[0].mxu0
    %v360 = vadd.f32 %v88, %v359
    %v361 = vpop.f32.mrb[0].mxu0
    %362 = vmatprep.mubr.f32.mxu0 0.0
    %363 = vmatmul.mubr.f32.gmra.mrb[0].mxu0 %v101
    %v364 = vpop.f32.mrb[0].mxu0
    %v365 = vadd.f32 %v88, %v364
    %v366 = vpop.f32.mrb[0].mxu0
    %367 = vmatprep.mubr.f32.mxu0 0.0
    %368 = vmatmul.mubr.f32.gmra.mrb[0].mxu0 %v104
    %v369 = vpop.f32.mrb[0].mxu0
    %v370 = vadd.f32 %v88, %v369
    %v371 = vpop.f32.mrb[0].mxu0
    %372 = vmatprep.mubr.f32.mxu0 0.0
    %373 = vmatmul.mubr.f32.gmra.mrb[0].mxu0 %v107
    %v374 = vpop.f32.mrb[0].mxu0
    %v375 = vadd.f32 %v88, %v374
    %v376 = vpop.f32.mrb[0].mxu0
    %377 = vmatprep.mubr.f32.mxu0 0.0
    %378 = vmatmul.mubr.f32.gmra.mrb[0].mxu0 %v110
    %v379 = vpop.f32.mrb[0].mxu0
    %v380 = vadd.f32 %v88, %v379
    %v381 = vpop.f32.mrb[0].mxu0
    %382 = vmatprep.mubr.f32.mxu0 0.0
    %383 = vmatmul.mubr.f32.gmra.mrb[0].mxu0 %v113
    %v384 = vpop.f32.mrb[0].mxu0
    %v385 = vadd.f32 %v88, %v384
    %v386 = vpop.f32.mrb[0].mxu0
    %387 = vmatprep.mubr.f32.mxu0 0.0
    %388 = vmatmul.mubr.f32.gmra.mrb[0].mxu0 %v116
    %v389 = vpop.f32.mrb[0].mxu0
    %v390 = vadd.f32 %v88, %v389
    %v391 = vpop.f32.mrb[0].mxu0
    %392 = vmatprep.mubr.f32.mxu0 0.0
    %393 = vmatmul.mubr.f32.gmra.mrb[0].mxu0 %v119
    %v394 = vpop.f32.mrb[0].mxu0
    %v395 = vadd.f32 %v88, %v394
    %v396 = vpop.f32.mrb[0].mxu0
    %397 = vmatprep.mubr.f32.mxu0 0.0
    %398 = vmatmul.mubr.f32.gmra.mrb[0].mxu0 %v122
    %v399 = vpop.f32.mrb[0].mxu0
    %v400 = vadd.f32 %v88, %v399
    %v401 = vpop.f32.mrb[0].mxu0
    %402 = vmatprep.mubr.f32.mxu0 0.0
    %403 = vmatmul.mubr.f32.gmra.mrb[0].mxu0 %v125
    %v404 = vpop.f32.mrb[0].mxu0
    %v405 = vadd.f32 %v88, %v404
    %v406 = vpop.f32.mrb[0].mxu0
    %407 = vmatprep.mubr.f32.mxu0 0.0
    %408 = vmatmul.mubr.f32.gmra.mrb[0].mxu0 %v128
    %v409 = vpop.f32.mrb[0].mxu0
    %v410 = vadd.f32 %v88, %v409
    %v411 = vpop.f32.mrb[0].mxu0
    %412 = vmatprep.mubr.f32.mxu0 0.0
    %413 = vmatmul.mubr.f32.gmra.mrb[0].mxu0 %v131
    %v414 = vpop.f32.mrb[0].mxu0
    %v415 = vadd.f32 %v88, %v414
    %v416 = vpop.f32.mrb[0].mxu0
    %417 = vmatprep.mubr.f32.mxu0 0.0
    %418 = vmatmul.mubr.f32.gmra.mrb[0].mxu0 %v134
    %v419 = vpop.f32.mrb[0].mxu0
    %v420 = vadd.f32 %v88, %v419
    %v421 = vpop.f32.mrb[0].mxu0
    %422 = vmatprep.mubr.f32.mxu0 0.0
    %423 = vmatmul.mubr.f32.gmra.mrb[0].mxu0 %v137
    %v424 = vpop.f32.mrb[0].mxu0
    %v425 = vadd.f32 %v88, %v424
    %v426 = vpop.f32.mrb[0].mxu0
    %427 = vmatprep.mubr.f32.mxu0 0.0
    %428 = vmatmul.mubr.f32.gmra.mrb[0].mxu0 %v140
    %v429 = vpop.f32.mrb[0].mxu0
    %v430 = vadd.f32 %v88, %v429
    %v431 = vpop.f32.mrb[0].mxu0
    %432 = vmatprep.mubr.f32.mxu0 0.0
    %433 = vmatmul.mubr.f32.gmra.mrb[0].mxu0 %v143
    %v434 = vpop.f32.mrb[0].mxu0
    %v435 = vadd.f32 %v88, %v434
    %v436 = vpop.f32.mrb[0].mxu0
    %437 = vmatprep.mubr.f32.mxu0 0.0
    %438 = vmatmul.mubr.f32.gmra.mrb[0].mxu0 %v146
    %v439 = vpop.f32.mrb[0].mxu0
    %v440 = vadd.f32 %v88, %v439
    %v441 = vpop.f32.mrb[0].mxu0
    %442 = vmatprep.mubr.f32.mxu0 0.0
    %443 = vmatmul.mubr.f32.gmra.mrb[0].mxu0 %v149
    %v444 = vpop.f32.mrb[0].mxu0
    %v445 = vadd.f32 %v88, %v444
    %v446 = vpop.f32.mrb[0].mxu0
    %447 = vmatprep.mubr.f32.mxu0 0.0
    %448 = vmatmul.mubr.f32.gmra.mrb[0].mxu0 %v152
    %v449 = vpop.f32.mrb[0].mxu0
    %v450 = vadd.f32 %v88, %v449
    %v451 = vpop.f32.mrb[0].mxu0
    %452 = vmatprep.mubr.f32.mxu0 0.0
    %453 = vmatmul.mubr.f32.gmra.mrb[0].mxu0 %v155
    %v454 = vpop.f32.mrb[0].mxu0
    %v455 = vadd.f32 %v88, %v454
    %v456 = vpop.f32.mrb[0].mxu0
    %457 = vmatprep.mubr.f32.mxu0 0.0
    %458 = vmatmul.mubr.f32.gmra.mrb[0].mxu0 %v158
    %v459 = vpop.f32.mrb[0].mxu0
    %v460 = vadd.f32 %v88, %v459
    %v461 = vpop.f32.mrb[0].mxu0
    %462 = vmatprep.mubr.f32.mxu0 0.0
    %463 = vmatmul.mubr.f32.gmra.mrb[0].mxu0 %v161
    %v464 = vpop.f32.mrb[0].mxu0
    %v465 = vadd.f32 %v88, %v464
    %v466 = vpop.f32.mrb[0].mxu0
    %467 = vmatprep.mubr.f32.mxu0 0.0
    %468 = vmatmul.mubr.f32.gmra.mrb[0].mxu0 %v164
    %v469 = vpop.f32.mrb[0].mxu0
    %v470 = vadd.f32 %v88, %v469
    %v471 = vpop.f32.mrb[0].mxu0
    %472 = vmatprep.mubr.f32.mxu0 0.0
    %473 = vmatmul.mubr.f32.gmra.mrb[0].mxu0 %v167
    %v474 = vpop.f32.mrb[0].mxu0
    %v475 = vadd.f32 %v88, %v474
    %v476 = vpop.f32.mrb[0].mxu0
    %477 = vmatprep.mubr.f32.mxu0 0.0
    %478 = vmatmul.mubr.f32.gmra.mrb[0].mxu0 %v170
    %v479 = vpop.f32.mrb[0].mxu0
    %v480 = vadd.f32 %v88, %v479
    %v481 = vpop.f32.mrb[0].mxu0
    %482 = vmatprep.mubr.f32.mxu0 0.0
    %483 = vmatmul.mubr.f32.gmra.mrb[0].mxu0 %v173
    %v484 = vpop.f32.mrb[0].mxu0
    %v485 = vadd.f32 %v88, %v484
    %v486 = vpop.f32.mrb[0].mxu0
    %487 = vmatprep.mubr.f32.mxu0 0.0
    %488 = vmatmul.mubr.f32.gmra.mrb[0].mxu0 %v176
    %v489 = vpop.f32.mrb[0].mxu0
    %v490 = vadd.f32 %v88, %v489
    %v491 = vpop.f32.mrb[0].mxu0
    %492 = vmatprep.mubr.f32.mxu0 0.0
    %493 = vmatmul.mubr.f32.gmra.mrb[0].mxu0 %v179
    %v494 = vpop.f32.mrb[0].mxu0
    %v495 = vadd.f32 %v88, %v494
    %v496 = vpop.f32.mrb[0].mxu0
    %497 = vmatprep.mubr.f32.mxu0 0.0
    %498 = vmatmul.mubr.f32.gmra.mrb[0].mxu0 %v182
    %v499 = vpop.f32.mrb[0].mxu0
    %v500 = vadd.f32 %v88, %v499
    %v501 = vpop.f32.mrb[0].mxu0
    %502 = vmatprep.mubr.f32.mxu0 0.0
    %503 = vmatmul.mubr.f32.gmra.mrb[0].mxu0 %v185
    %v504 = vpop.f32.mrb[0].mxu0
    %v505 = vadd.f32 %v88, %v504
    %v506 = vpop.f32.mrb[0].mxu0
    %507 = vmatprep.mubr.f32.mxu0 0.0
    %508 = vmatmul.mubr.f32.gmra.mrb[0].mxu0 %v188
    %v509 = vpop.f32.mrb[0].mxu0
    %v510 = vadd.f32 %v88, %v509
    %v511 = vpop.f32.mrb[0].mxu0
    %512 = vmatprep.mubr.f32.mxu0 0.0
    %513 = vmatmul.mubr.f32.gmra.mrb[0].mxu0 %v191
    %v514 = vpop.f32.mrb[0].mxu0
    %v515 = vadd.f32 %v88, %v514
    %v516 = vpop.f32.mrb[0].mxu0
    %517 = vmatprep.mubr.f32.mxu0 0.0
    %518 = vmatmul.mubr.f32.gmra.mrb[0].mxu0 %v194
    %v519 = vpop.f32.mrb[0].mxu0
    %v520 = vadd.f32 %v88, %v519
    %v521 = vpop.f32.mrb[0].mxu0
    %522 = vmatprep.mubr.f32.mxu0 0.0
    %523 = vmatmul.mubr.f32.gmra.mrb[0].mxu0 %v197
    %v524 = vpop.f32.mrb[0].mxu0
    %v525 = vadd.f32 %v88, %v524
    %v526 = vpop.f32.mrb[0].mxu0
    %527 = vmatprep.mubr.f32.mxu0 0.0
    %528 = vmatmul.mubr.f32.gmra.mrb[0].mxu0 %v200
    %v529 = vpop.f32.mrb[0].mxu0
    %v530 = vadd.f32 %v88, %v529
    %v531 = vpop.f32.mrb[0].mxu0
    %532 = vmatprep.mubr.f32.mxu0 0.0
    %533 = vmatmul.mubr.f32.gmra.mrb[0].mxu0 %v203
    %v534 = vpop.f32.mrb[0].mxu0
    %v535 = vadd.f32 %v88, %v534
    %v536 = vpop.f32.mrb[0].mxu0
    %537 = vmatprep.mubr.f32.mxu0 0.0
    %538 = vmatmul.mubr.f32.gmra.mrb[0].mxu0 %v206
    %v539 = vpop.f32.mrb[0].mxu0
    %v540 = vadd.f32 %v88, %v539
    %v541 = vpop.f32.mrb[0].mxu0
    %542 = vmatprep.mubr.f32.mxu0 0.0
    %543 = vmatmul.mubr.f32.gmra.mrb[0].mxu0 %v209
    %v544 = vpop.f32.mrb[0].mxu0
    %v545 = vadd.f32 %v88, %v544
    %v546 = vpop.f32.mrb[0].mxu0
    %547 = vmatprep.mubr.f32.mxu0 0.0
    %548 = vmatmul.mubr.f32.gmra.mrb[0].mxu0 %v212
    %v549 = vpop.f32.mrb[0].mxu0
    %v550 = vadd.f32 %v88, %v549
    %v551 = vpop.f32.mrb[0].mxu0
    %552 = vmatprep.mubr.f32.mxu0 0.0
    %553 = vmatmul.mubr.f32.gmra.mrb[0].mxu0 %v215
    %v554 = vpop.f32.mrb[0].mxu0
    %v555 = vadd.f32 %v88, %v554
    %v556 = vpop.f32.mrb[0].mxu0
    %557 = vmatprep.mubr.f32.mxu0 0.0
    %558 = vmatmul.mubr.f32.gmra.mrb[0].mxu0 %v218
    %v559 = vpop.f32.mrb[0].mxu0
    %v560 = vadd.f32 %v88, %v559
    %v561 = vpop.f32.mrb[0].mxu0
    %562 = vmatprep.mubr.f32.mxu0 0.0
    %563 = vmatmul.mubr.f32.gmra.mrb[0].mxu0 %v221
    %v564 = vpop.f32.mrb[0].mxu0
    %v565 = vadd.f32 %v88, %v564
    %v566 = vpop.f32.mrb[0].mxu0
    %567 = vmatprep.mubr.f32.mxu0 0.0
    %568 = vmatmul.mubr.f32.gmra.mrb[0].mxu0 %v224
    %v569 = vpop.f32.mrb[0].mxu0
    %v570 = vadd.f32 %v88, %v569
    %v571 = vpop.f32.mrb[0].mxu0
    %572 = vmatprep.mubr.f32.mxu0 0.0
    %573 = vmatmul.mubr.f32.gmra.mrb[0].mxu0 %v227
    %v574 = vpop.f32.mrb[0].mxu0
    %v575 = vadd.f32 %v88, %v574
    %v576 = vpop.f32.mrb[0].mxu0
    %577 = vmatprep.mubr.f32.mxu0 0.0
    %578 = vmatmul.mubr.f32.gmra.mrb[0].mxu0 %v230
    %v579 = vpop.f32.mrb[0].mxu0
    %v580 = vadd.f32 %v88, %v579
    %v581 = vpop.f32.mrb[0].mxu0
    %582 = vmatprep.mubr.f32.mxu0 0.0
    %583 = vmatmul.mubr.f32.gmra.mrb[0].mxu0 %v233
    %v584 = vpop.f32.mrb[0].mxu0
    %v585 = vadd.f32 %v88, %v584
    %v586 = vpop.f32.mrb[0].mxu0
    %587 = vmatprep.mubr.f32.mxu0 0.0
    %588 = vmatmul.mubr.f32.gmra.mrb[0].mxu0 %v236
    %v589 = vpop.f32.mrb[0].mxu0
    %v590 = vadd.f32 %v88, %v589
    %v591 = vpop.f32.mrb[0].mxu0
    %592 = vmatprep.mubr.f32.mxu0 0.0
    %593 = vmatmul.mubr.f32.gmra.mrb[0].mxu0 %v239
    %v594 = vpop.f32.mrb[0].mxu0
    %v595 = vadd.f32 %v88, %v594
    %v596 = vpop.f32.mrb[0].mxu0
    %597 = vmatprep.mubr.f32.mxu0 0.0
    %598 = vmatmul.mubr.f32.gmra.mrb[0].mxu0 %v242
    %v599 = vpop.f32.mrb[0].mxu0
    %v600 = vadd.f32 %v88, %v599
    %v601 = vpop.f32.mrb[0].mxu0
    %602 = vmatprep.mubr.f32.mxu0 0.0
    %603 = vmatmul.mubr.f32.gmra.mrb[0].mxu0 %v245
    %v604 = vpop.f32.mrb[0].mxu0
    %v605 = vadd.f32 %v88, %v604
    %v606 = vpop.f32.mrb[0].mxu0
    %607 = vmatprep.mubr.f32.mxu0 0.0
    %608 = vmatmul.mubr.f32.gmra.mrb[0].mxu0 %v248
    %v609 = vpop.f32.mrb[0].mxu0
    %v610 = vadd.f32 %v88, %v609
    %v611 = vpop.f32.mrb[0].mxu0
    %612 = vmatprep.mubr.f32.mxu0 0.0
    %613 = vmatmul.mubr.f32.gmra.mrb[0].mxu0 %v251
    %v614 = vpop.f32.mrb[0].mxu0
    %v615 = vadd.f32 %v88, %v614
    %v616 = vpop.f32.mrb[0].mxu0
    %617 = vmatprep.mubr.f32.mxu0 0.0
    %618 = vmatmul.mubr.f32.gmra.mrb[0].mxu0 %v254
    %v619 = vpop.f32.mrb[0].mxu0
    %v620 = vadd.f32 %v88, %v619
    %v621 = vpop.f32.mrb[0].mxu0
    %622 = vmatprep.mubr.f32.mxu0 0.0
    %623 = vmatmul.mubr.f32.gmra.mrb[0].mxu0 %v257
    %v624 = vpop.f32.mrb[0].mxu0
    %v625 = vadd.f32 %v88, %v624
    %v626 = vpop.f32.mrb[0].mxu0
    %627 = vmatprep.mubr.f32.mxu0 0.0
    %628 = vmatmul.mubr.f32.gmra.mrb[0].mxu0 %v260
    %v629 = vpop.f32.mrb[0].mxu0
    %v630 = vadd.f32 %v88, %v629
    %v631 = vpop.f32.mrb[0].mxu0
    %632 = vmatprep.mubr.f32.mxu0 0.0
    %633 = vmatmul.mubr.f32.gmra.mrb[0].mxu0 %v263
    %v634 = vpop.f32.mrb[0].mxu0
    %v635 = vadd.f32 %v88, %v634
    %v636 = vpop.f32.mrb[0].mxu0
    %637 = vmatprep.mubr.f32.mxu0 0.0
    %638 = vmatmul.mubr.f32.gmra.mrb[0].mxu0 %v266
    %v639 = vpop.f32.mrb[0].mxu0
    %v640 = vadd.f32 %v88, %v639
    %v641 = vpop.f32.mrb[0].mxu0
    %642 = vmatprep.mubr.f32.mxu0 0.0
    %643 = vmatmul.mubr.f32.gmra.mrb[0].mxu0 %v269
    %v644 = vpop.f32.mrb[0].mxu0
    %v645 = vadd.f32 %v88, %v644
    %v646 = vpop.f32.mrb[0].mxu0
    %647 = vmatprep.mubr.f32.mxu0 0.0
    %648 = vmatmul.mubr.f32.gmra.mrb[0].mxu0 %v272
    %v649 = vpop.f32.mrb[0].mxu0
    %v650 = vadd.f32 %v88, %v649
    %v651 = vpop.f32.mrb[0].mxu0
    %652 = vmatprep.mubr.f32.mxu0 0.0
    %653 = vmatmul.mubr.f32.gmra.mrb[0].mxu0 %v275
    %v654 = vpop.f32.mrb[0].mxu0
    %v655 = vadd.f32 %v88, %v654
    %v656 = vpop.f32.mrb[0].mxu0
    %657 = vmatprep.mubr.f32.mxu0 0.0
    %658 = vmatmul.mubr.f32.gmra.mrb[0].mxu0 %v278
    %v659 = vpop.f32.mrb[0].mxu0
    %v660 = vadd.f32 %v88, %v659
    %v661 = vpop.f32.mrb[0].mxu0
    %662 = vmatprep.mubr.f32.mxu0 0.0
    %663 = vmatmul.mubr.f32.gmra.mrb[0].mxu0 %v281
    %v664 = vpop.f32.mrb[0].mxu0
    %v665 = vadd.f32 %v88, %v664
    %v666 = vpop.f32.mrb[0].mxu0
    %667 = vdwg.mxu0
    %v668 = vld [vmem:[%s3] sm:$0xff]
    %v669 = vld [vmem:[%s3 + $0x8] sm:$0xff]
    %v670 = vld [vmem:[%s3 + $0x10] sm:$0xff]
    %v671 = vld [vmem:[%s3 + $0x18] sm:$0xff]
    %v672 = vld [vmem:[%s3 + $0x20] sm:$0xff]
    %v673 = vld [vmem:[%s3 + $0x28] sm:$0xff]
    %v674 = vld [vmem:[%s3 + $0x30] sm:$0xff]
    %v675 = vld [vmem:[%s3 + $0x38] sm:$0xff]
    %v676 = vld [vmem:[%s3 + $0x40] sm:$0xff]
    %v677 = vld [vmem:[%s3 + $0x48] sm:$0xff]
    %v678 = vld [vmem:[%s3 + $0x50] sm:$0xff]
    %v679 = vld [vmem:[%s3 + $0x58] sm:$0xff]
    %v680 = vld [vmem:[%s3 + $0x60] sm:$0xff]
    %v681 = vld [vmem:[%s3 + $0x68] sm:$0xff]
    %v682 = vld [vmem:[%s3 + $0x70] sm:$0xff]
    %v683 = vld [vmem:[%s3 + $0x78] sm:$0xff]
    %v684 = vld [vmem:[%s3 + $0x80] sm:$0xff]
    %v685 = vld [vmem:[%s3 + $0x88] sm:$0xff]
    %v686 = vld [vmem:[%s3 + $0x90] sm:$0xff]
    %v687 = vld [vmem:[%s3 + $0x98] sm:$0xff]
    %v688 = vld [vmem:[%s3 + $0xa0] sm:$0xff]
    %v689 = vld [vmem:[%s3 + $0xa8] sm:$0xff]
    %v690 = vld [vmem:[%s3 + $0xb0] sm:$0xff]
    %v691 = vld [vmem:[%s3 + $0xb8] sm:$0xff]
    %v692 = vld [vmem:[%s3 + $0xc0] sm:$0xff]
    %v693 = vld [vmem:[%s3 + $0xc8] sm:$0xff]
    %v694 = vld [vmem:[%s3 + $0xd0] sm:$0xff]
    %v695 = vld [vmem:[%s3 + $0xd8] sm:$0xff]
    %v696 = vld [vmem:[%s3 + $0xe0] sm:$0xff]
    %v697 = vld [vmem:[%s3 + $0xe8] sm:$0xff]
    %v698 = vld [vmem:[%s3 + $0xf0] sm:$0xff]
    %v699 = vld [vmem:[%s3 + $0xf8] sm:$0xff]
    %v700 = vld [vmem:[%s3 + $0x100] sm:$0xff]
    %v701 = vld [vmem:[%s3 + $0x108] sm:$0xff]
    %v702 = vld [vmem:[%s3 + $0x110] sm:$0xff]
    %v703 = vld [vmem:[%s3 + $0x118] sm:$0xff]
    %v704 = vld [vmem:[%s3 + $0x120] sm:$0xff]
    %v705 = vld [vmem:[%s3 + $0x128] sm:$0xff]
    %v706 = vld [vmem:[%s3 + $0x130] sm:$0xff]
    %v707 = vld [vmem:[%s3 + $0x138] sm:$0xff]
    %v708 = vld [vmem:[%s3 + $0x140] sm:$0xff]
    %v709 = vld [vmem:[%s3 + $0x148] sm:$0xff]
    %v710 = vld [vmem:[%s3 + $0x150] sm:$0xff]
    %v711 = vld [vmem:[%s3 + $0x158] sm:$0xff]
    %v712 = vld [vmem:[%s3 + $0x160] sm:$0xff]
    %v713 = vld [vmem:[%s3 + $0x168] sm:$0xff]
    %v714 = vld [vmem:[%s3 + $0x170] sm:$0xff]
    %v715 = vld [vmem:[%s3 + $0x178] sm:$0xff]
    %v716 = vld [vmem:[%s3 + $0x180] sm:$0xff]
    %v717 = vld [vmem:[%s3 + $0x188] sm:$0xff]
    %v718 = vld [vmem:[%s3 + $0x190] sm:$0xff]
    %v719 = vld [vmem:[%s3 + $0x198] sm:$0xff]
    %v720 = vld [vmem:[%s3 + $0x1a0] sm:$0xff]
    %v721 = vld [vmem:[%s3 + $0x1a8] sm:$0xff]
    %v722 = vld [vmem:[%s3 + $0x1b0] sm:$0xff]
    %v723 = vld [vmem:[%s3 + $0x1b8] sm:$0xff]
    %v724 = vld [vmem:[%s3 + $0x1c0] sm:$0xff]
    %v725 = vld [vmem:[%s3 + $0x1c8] sm:$0xff]
    %v726 = vld [vmem:[%s3 + $0x1d0] sm:$0xff]
    %v727 = vld [vmem:[%s3 + $0x1d8] sm:$0xff]
    %v728 = vld [vmem:[%s3 + $0x1e0] sm:$0xff]
    %v729 = vld [vmem:[%s3 + $0x1e8] sm:$0xff]
    %v730 = vld [vmem:[%s3 + $0x1f0] sm:$0xff]
    %v731 = vld [vmem:[%s3 + $0x1f8] sm:$0xff]
    %v732 = vadd.f32 %v350, %v668
    %v733 = vadd.f32 %v355, %v669
    %v734 = vadd.f32 %v360, %v670
    %v735 = vadd.f32 %v365, %v671
    %v736 = vadd.f32 %v370, %v672
    %v737 = vadd.f32 %v375, %v673
    %v738 = vadd.f32 %v380, %v674
    %v739 = vadd.f32 %v385, %v675
    %v740 = vadd.f32 %v390, %v676
    %v741 = vadd.f32 %v395, %v677
    %v742 = vadd.f32 %v400, %v678
    %v743 = vadd.f32 %v405, %v679
    %v744 = vadd.f32 %v410, %v680
    %v745 = vadd.f32 %v415, %v681
    %v746 = vadd.f32 %v420, %v682
    %v747 = vadd.f32 %v425, %v683
    %v748 = vadd.f32 %v430, %v684
    %v749 = vadd.f32 %v435, %v685
    %v750 = vadd.f32 %v440, %v686
    %v751 = vadd.f32 %v445, %v687
    %v752 = vadd.f32 %v450, %v688
    %v753 = vadd.f32 %v455, %v689
    %v754 = vadd.f32 %v460, %v690
    %v755 = vadd.f32 %v465, %v691
    %v756 = vadd.f32 %v470, %v692
    %v757 = vadd.f32 %v475, %v693
    %v758 = vadd.f32 %v480, %v694
    %v759 = vadd.f32 %v485, %v695
    %v760 = vadd.f32 %v490, %v696
    %v761 = vadd.f32 %v495, %v697
    %v762 = vadd.f32 %v500, %v698
    %v763 = vadd.f32 %v505, %v699
    %v764 = vadd.f32 %v510, %v700
    %v765 = vadd.f32 %v515, %v701
    %v766 = vadd.f32 %v520, %v702
    %v767 = vadd.f32 %v525, %v703
    %v768 = vadd.f32 %v530, %v704
    %v769 = vadd.f32 %v535, %v705
    %v770 = vadd.f32 %v540, %v706
    %v771 = vadd.f32 %v545, %v707
    %v772 = vadd.f32 %v550, %v708
    %v773 = vadd.f32 %v555, %v709
    %v774 = vadd.f32 %v560, %v710
    %v775 = vadd.f32 %v565, %v711
    %v776 = vadd.f32 %v570, %v712
    %v777 = vadd.f32 %v575, %v713
    %v778 = vadd.f32 %v580, %v714
    %v779 = vadd.f32 %v585, %v715
    %v780 = vadd.f32 %v590, %v716
    %v781 = vadd.f32 %v595, %v717
    %v782 = vadd.f32 %v600, %v718
    %v783 = vadd.f32 %v605, %v719
    %v784 = vadd.f32 %v610, %v720
    %v785 = vadd.f32 %v615, %v721
    %v786 = vadd.f32 %v620, %v722
    %v787 = vadd.f32 %v625, %v723
    %v788 = vadd.f32 %v630, %v724
    %v789 = vadd.f32 %v635, %v725
    %v790 = vadd.f32 %v640, %v726
    %v791 = vadd.f32 %v645, %v727
    %v792 = vadd.f32 %v650, %v728
    %v793 = vadd.f32 %v655, %v729
    %v794 = vadd.f32 %v660, %v730
    %v795 = vadd.f32 %v665, %v731
    %v796 = vmax.f32 %v732, 0.0
    %v797 = vmax.f32 %v733, 0.0
    %v798 = vmax.f32 %v734, 0.0
    %v799 = vmax.f32 %v735, 0.0
    %v800 = vmax.f32 %v736, 0.0
    %v801 = vmax.f32 %v737, 0.0
    %v802 = vmax.f32 %v738, 0.0
    %v803 = vmax.f32 %v739, 0.0
    %v804 = vmax.f32 %v740, 0.0
    %v805 = vmax.f32 %v741, 0.0
    %v806 = vmax.f32 %v742, 0.0
    %v807 = vmax.f32 %v743, 0.0
    %v808 = vmax.f32 %v744, 0.0
    %v809 = vmax.f32 %v745, 0.0
    %v810 = vmax.f32 %v746, 0.0
    %v811 = vmax.f32 %v747, 0.0
    %v812 = vmax.f32 %v748, 0.0
    %v813 = vmax.f32 %v749, 0.0
    %v814 = vmax.f32 %v750, 0.0
    %v815 = vmax.f32 %v751, 0.0
    %v816 = vmax.f32 %v752, 0.0
    %v817 = vmax.f32 %v753, 0.0
    %v818 = vmax.f32 %v754, 0.0
    %v819 = vmax.f32 %v755, 0.0
    %v820 = vmax.f32 %v756, 0.0
    %v821 = vmax.f32 %v757, 0.0
    %v822 = vmax.f32 %v758, 0.0
    %v823 = vmax.f32 %v759, 0.0
    %v824 = vmax.f32 %v760, 0.0
    %v825 = vmax.f32 %v761, 0.0
    %v826 = vmax.f32 %v762, 0.0
    %v827 = vmax.f32 %v763, 0.0
    %v828 = vmax.f32 %v764, 0.0
    %v829 = vmax.f32 %v765, 0.0
    %v830 = vmax.f32 %v766, 0.0
    %v831 = vmax.f32 %v767, 0.0
    %v832 = vmax.f32 %v768, 0.0
    %v833 = vmax.f32 %v769, 0.0
    %v834 = vmax.f32 %v770, 0.0
    %v835 = vmax.f32 %v771, 0.0
    %v836 = vmax.f32 %v772, 0.0
    %v837 = vmax.f32 %v773, 0.0
    %v838 = vmax.f32 %v774, 0.0
    %v839 = vmax.f32 %v775, 0.0
    %v840 = vmax.f32 %v776, 0.0
    %v841 = vmax.f32 %v777, 0.0
    %v842 = vmax.f32 %v778, 0.0
    %v843 = vmax.f32 %v779, 0.0
    %v844 = vmax.f32 %v780, 0.0
    %v845 = vmax.f32 %v781, 0.0
    %v846 = vmax.f32 %v782, 0.0
    %v847 = vmax.f32 %v783, 0.0
    %v848 = vmax.f32 %v784, 0.0
    %v849 = vmax.f32 %v785, 0.0
    %v850 = vmax.f32 %v786, 0.0
    %v851 = vmax.f32 %v787, 0.0
    %v852 = vmax.f32 %v788, 0.0
    %v853 = vmax.f32 %v789, 0.0
    %v854 = vmax.f32 %v790, 0.0
    %v855 = vmax.f32 %v791, 0.0
    %v856 = vmax.f32 %v792, 0.0
    %v857 = vmax.f32 %v793, 0.0
    %v858 = vmax.f32 %v794, 0.0
    %v859 = vmax.f32 %v795, 0.0
    %vm860 = vcmask 261120
    %861 = vst.msk [vmem:[#allocation2] sm:$0xff] %vm860, %v796
    %862 = vst.msk [vmem:[#allocation2 + $0x8] sm:$0xff] %vm860, %v797
    %863 = vst.msk [vmem:[#allocation2 + $0x10] sm:$0xff] %vm860, %v798
    %864 = vst.msk [vmem:[#allocation2 + $0x18] sm:$0xff] %vm860, %v799
    %865 = vst.msk [vmem:[#allocation2 + $0x20] sm:$0xff] %vm860, %v800
    %866 = vst.msk [vmem:[#allocation2 + $0x28] sm:$0xff] %vm860, %v801
    %867 = vst.msk [vmem:[#allocation2 + $0x30] sm:$0xff] %vm860, %v802
    %868 = vst.msk [vmem:[#allocation2 + $0x38] sm:$0xff] %vm860, %v803
    %869 = vst.msk [vmem:[#allocation2 + $0x40] sm:$0xff] %vm860, %v804
    %870 = vst.msk [vmem:[#allocation2 + $0x48] sm:$0xff] %vm860, %v805
    %871 = vst.msk [vmem:[#allocation2 + $0x50] sm:$0xff] %vm860, %v806
    %872 = vst.msk [vmem:[#allocation2 + $0x58] sm:$0xff] %vm860, %v807
    %873 = vst.msk [vmem:[#allocation2 + $0x60] sm:$0xff] %vm860, %v808
    %874 = vst.msk [vmem:[#allocation2 + $0x68] sm:$0xff] %vm860, %v809
    %875 = vst.msk [vmem:[#allocation2 + $0x70] sm:$0xff] %vm860, %v810
    %876 = vst.msk [vmem:[#allocation2 + $0x78] sm:$0xff] %vm860, %v811
    %877 = vst.msk [vmem:[#allocation2 + $0x80] sm:$0xff] %vm860, %v812
    %878 = vst.msk [vmem:[#allocation2 + $0x88] sm:$0xff] %vm860, %v813
    %879 = vst.msk [vmem:[#allocation2 + $0x90] sm:$0xff] %vm860, %v814
    %880 = vst.msk [vmem:[#allocation2 + $0x98] sm:$0xff] %vm860, %v815
    %881 = vst.msk [vmem:[#allocation2 + $0xa0] sm:$0xff] %vm860, %v816
    %882 = vst.msk [vmem:[#allocation2 + $0xa8] sm:$0xff] %vm860, %v817
    %883 = vst.msk [vmem:[#allocation2 + $0xb0] sm:$0xff] %vm860, %v818
    %884 = vst.msk [vmem:[#allocation2 + $0xb8] sm:$0xff] %vm860, %v819
    %885 = vst.msk [vmem:[#allocation2 + $0xc0] sm:$0xff] %vm860, %v820
    %886 = vst.msk [vmem:[#allocation2 + $0xc8] sm:$0xff] %vm860, %v821
    %887 = vst.msk [vmem:[#allocation2 + $0xd0] sm:$0xff] %vm860, %v822
    %888 = vst.msk [vmem:[#allocation2 + $0xd8] sm:$0xff] %vm860, %v823
    %889 = vst.msk [vmem:[#allocation2 + $0xe0] sm:$0xff] %vm860, %v824
    %890 = vst.msk [vmem:[#allocation2 + $0xe8] sm:$0xff] %vm860, %v825
    %891 = vst.msk [vmem:[#allocation2 + $0xf0] sm:$0xff] %vm860, %v826
    %892 = vst.msk [vmem:[#allocation2 + $0xf8] sm:$0xff] %vm860, %v827
    %893 = vst.msk [vmem:[#allocation2 + $0x100] sm:$0xff] %vm860, %v828
    %894 = vst.msk [vmem:[#allocation2 + $0x108] sm:$0xff] %vm860, %v829
    %895 = vst.msk [vmem:[#allocation2 + $0x110] sm:$0xff] %vm860, %v830
    %896 = vst.msk [vmem:[#allocation2 + $0x118] sm:$0xff] %vm860, %v831
    %897 = vst.msk [vmem:[#allocation2 + $0x120] sm:$0xff] %vm860, %v832
    %898 = vst.msk [vmem:[#allocation2 + $0x128] sm:$0xff] %vm860, %v833
    %899 = vst.msk [vmem:[#allocation2 + $0x130] sm:$0xff] %vm860, %v834
    %900 = vst.msk [vmem:[#allocation2 + $0x138] sm:$0xff] %vm860, %v835
    %901 = vst.msk [vmem:[#allocation2 + $0x140] sm:$0xff] %vm860, %v836
    %902 = vst.msk [vmem:[#allocation2 + $0x148] sm:$0xff] %vm860, %v837
    %903 = vst.msk [vmem:[#allocation2 + $0x150] sm:$0xff] %vm860, %v838
    %904 = vst.msk [vmem:[#allocation2 + $0x158] sm:$0xff] %vm860, %v839
    %905 = vst.msk [vmem:[#allocation2 + $0x160] sm:$0xff] %vm860, %v840
    %906 = vst.msk [vmem:[#allocation2 + $0x168] sm:$0xff] %vm860, %v841
    %907 = vst.msk [vmem:[#allocation2 + $0x170] sm:$0xff] %vm860, %v842
    %908 = vst.msk [vmem:[#allocation2 + $0x178] sm:$0xff] %vm860, %v843
    %909 = vst.msk [vmem:[#allocation2 + $0x180] sm:$0xff] %vm860, %v844
    %910 = vst.msk [vmem:[#allocation2 + $0x188] sm:$0xff] %vm860, %v845
    %911 = vst.msk [vmem:[#allocation2 + $0x190] sm:$0xff] %vm860, %v846
    %912 = vst.msk [vmem:[#allocation2 + $0x198] sm:$0xff] %vm860, %v847
    %913 = vst.msk [vmem:[#allocation2 + $0x1a0] sm:$0xff] %vm860, %v848
    %914 = vst.msk [vmem:[#allocation2 + $0x1a8] sm:$0xff] %vm860, %v849
    %915 = vst.msk [vmem:[#allocation2 + $0x1b0] sm:$0xff] %vm860, %v850
    %916 = vst.msk [vmem:[#allocation2 + $0x1b8] sm:$0xff] %vm860, %v851
    %917 = vst.msk [vmem:[#allocation2 + $0x1c0] sm:$0xff] %vm860, %v852
    %918 = vst.msk [vmem:[#allocation2 + $0x1c8] sm:$0xff] %vm860, %v853
    %919 = vst.msk [vmem:[#allocation2 + $0x1d0] sm:$0xff] %vm860, %v854
    %920 = vst.msk [vmem:[#allocation2 + $0x1d8] sm:$0xff] %vm860, %v855
    %921 = vst.msk [vmem:[#allocation2 + $0x1e0] sm:$0xff] %vm860, %v856
    %922 = vst.msk [vmem:[#allocation2 + $0x1e8] sm:$0xff] %vm860, %v857
    %923 = vst.msk [vmem:[#allocation2 + $0x1f0] sm:$0xff] %vm860, %v858
    %924 = vst.msk [vmem:[#allocation2 + $0x1f8] sm:$0xff] %vm860, %v859
    // Predicated region
    $region18: #{_lambda_.3} parent=1 // pred_check
      _
    $region19: #{_lambda_.3} parent=1 // pred_check_branch
      %926 = sbr.rel (0) target = $region21
    $region20: #{_lambda_.3} parent=1 // pred_region
      %s928 = ssub.s32 8192, 8192
      %929 = vsyncadd [#allocation3], %s928
      %s930 = sshll.u32 [#allocation2], 4
      %s931 = int_to_ptr.vmem [resolvable:$true] %s930
      %936 = dma.vmem_to_hbm [thread:$0]  %s931, 8192, %s4, [#allocation3], 128, 128, 8
    $region21: #{_lambda_.3} parent=1 // pred_fallthru
      _
    // Predicated region
    $region22: #{_lambda_.3} parent=1 // pred_check
      _
    $region23: #{_lambda_.3} parent=1 // pred_check_branch
      %938 = sbr.rel (0) target = $region25
    $region24: #{_lambda_.3} parent=1 // pred_region
      %939 = dma.done [#allocation3], 8192
    $region25: #{_lambda_.3} parent=1 // pred_fallthru
      _
    %940 = vsyncpa [#allocation3], 1

// kernel: _lambda_.2
$region0: #{_lambda_.2}
  #allocation0 [shape = 'u32[]', space=smem, size = 0x4, offset = 0x4, fixed_abs, tag = 'smem constant byte address 0x4 - core index']
  #allocation1 [shape = 'u32[144,128]{1,0:T(1,128)}', space=vmem, size = 0x12000, scoped, tag = 'internal scratch']
  #allocation2 [shape = 'f32[18,18,8]{2,1,0:T(8,128)}', space=vmem, size = 0x36000, scoped, tag = 'scratch operand']
  %s0 = inlined_call_operand.hbm [shape: f32[2,16,16,32], index: 0, kind: input, shape index: {}]
  %s1 = inlined_call_operand.hbm [shape: f32[32,8], index: 1, kind: input, shape index: {}]
  %s2 = inlined_call_operand.vmem [shape: f32[1,8], index: 2, kind: input, shape index: {}]
  %s3 = inlined_call_operand.hbm [shape: f32[9,8,8], index: 3, kind: input, shape index: {}]
  %s4 = inlined_call_operand.vmem [shape: f32[1,8], index: 4, kind: input, shape index: {}]
  %s5 = inlined_call_operand.vmem [shape: f32[2,256,8], index: 5, kind: output, shape index: {}]
  %s6 = sld [smem:[#allocation0]]
  $region65: #{_lambda_.2} parent=0
    _
  %s8 = ssub.s32 1, %s6
  %s9 = scalar_select 0, %s8, %s6
  $region1: #{_lambda_.2} parent=0
    #allocation3 [shape = 'u8[262144]{0}', space=vmem, size = 0x40000, scoped, tag = 'input window, operand 0']
    #allocation4 [shape = 's32[2]{0}', space=sflag, size = 0x8, scoped, tag = 'scoped memory for _lambda_.2']
    #allocation5 [shape = 'u8[16384]{0}', space=vmem, size = 0x4000, scoped, tag = 'input window, operand 1, single buffered']
    #allocation6 [shape = 's32[1]{0}', space=sflag, size = 0x4, scoped, tag = 'scoped memory for _lambda_.2']
    #allocation7 [shape = 'u8[36864]{0}', space=vmem, size = 0x9000, scoped, tag = 'input window, operand 3, single buffered']
    %10 = vsyncpa [#allocation4], 0
    %s11 = scalar_lea.sflag [#allocation4], 1
    %12 = vsyncpa %s11, 0
    %13 = vsyncpa [#allocation6], 0
    loop: start=0, step=1, limit=4
    $region2: #{_lambda_.2} parent=1 // loop_pre_header
      _
    $region3: #{_lambda_.2} parent=1 // loop_header
      %s15 = sphi 0, %s19
      %p16 = scmp.ge.s32.totalorder %s15, 4
      %s25 = sphi 0, %s27
      %s28 = sphi 0, %s25
      %s29 = sphi 0, %s28
      %s45 = sphi 0, %s29
      %s49 = sphi 0, %s49
      %s51 = sphi 0, %s49
      %s52 = sphi 0, %s51
      %s66 = sphi 0, %s52
      %s70 = sphi 0, %s70
      %s72 = sphi 0, %s70
      %s73 = sphi 0, %s72
      %s87 = sphi 0, %s73
      %s91 = sphi 0, %s91
      %s93 = sphi 0, %s91
      %s94 = sphi 0, %s93
      %s108 = sphi 0, %s94
      %s112 = sphi 0, %s112
      %s114 = sphi 0, %s112
      %s115 = sphi 0, %s114
      %s129 = sphi 0, %s115
      %s135 = sphi 0, %s137
      %s138 = sphi 0, %s135
      %s139 = sphi 0, %s138
      %s155 = sphi 0, %s139
    $region4: #{_lambda_.2} parent=1 // loop_header_branch
      %18 = sbr.rel (%p16) target = $region8
    $region5: #{_lambda_.2} parent=1 // loop_body
      %s20 = ssub.s32 %s15, 1
      %s21 = ssub.s32 %s15, 2
      %s22 = sadd.s32 %s15, 1
      %s23 = ssub.s32 %s15, %s22
      %p24 = scmp.eq.s32.totalorder %s23, 0
      %s26 = sadd.s32 %s25, 1
      %s27 = scalar_select %p24, %s25, %s26
      %p30 = pneg %p24
      %p31 = scmp.eq.s32.totalorder %s15, 1
      %p32 = por %p30, %p31
      %p33 = scmp.ne.s32.totalorder %s25, %s28
      %p34 = scmp.eq.s32.totalorder %s15, 0
      %p35 = por %p33, %p34
      %p36 = scmp.ne.s32.totalorder %s25, %s28
      %p37 = scmp.eq.s32.totalorder %s20, 1
      %p38 = por %p36, %p37
      %p39 = scmp.ne.s32.totalorder %s28, %s29
      %p40 = scmp.eq.s32.totalorder %s20, 0
      %p41 = por %p39, %p40
      %p42 = scmp.ne.s32.totalorder %s28, %s29
      %p43 = scmp.eq.s32.totalorder %s21, 1
      %p44 = por %p42, %p43
      %p46 = scmp.ne.s32.totalorder %s29, %s45
      %p47 = scmp.eq.s32.totalorder %s21, 0
      %p48 = por %p46, %p47
      %s50 = sadd.s32 %s49, 1
      %p53 = scmp.eq.s32.totalorder %s15, 1
      %p54 = scmp.ne.s32.totalorder %s49, %s51
      %p55 = scmp.eq.s32.totalorder %s15, 0
      %p56 = por %p54, %p55
      %p57 = scmp.ne.s32.totalorder %s49, %s51
      %p58 = scmp.eq.s32.totalorder %s20, 1
      %p59 = por %p57, %p58
      %p60 = scmp.ne.s32.totalorder %s51, %s52
      %p61 = scmp.eq.s32.totalorder %s20, 0
      %p62 = por %p60, %p61
      %p63 = scmp.ne.s32.totalorder %s51, %s52
      %p64 = scmp.eq.s32.totalorder %s21, 1
      %p65 = por %p63, %p64
      %p67 = scmp.ne.s32.totalorder %s52, %s66
      %p68 = scmp.eq.s32.totalorder %s21, 0
      %p69 = por %p67, %p68
      %s71 = sadd.s32 %s70, 1
      %p74 = scmp.eq.s32.totalorder %s15, 1
      %p75 = scmp.ne.s32.totalorder %s70, %s72
      %p76 = scmp.eq.s32.totalorder %s15, 0
      %p77 = por %p75, %p76
      %p78 = scmp.ne.s32.totalorder %s70, %s72
      %p79 = scmp.eq.s32.totalorder %s20, 1
      %p80 = por %p78, %p79
      %p81 = scmp.ne.s32.totalorder %s72, %s73
      %p82 = scmp.eq.s32.totalorder %s20, 0
      %p83 = por %p81, %p82
      %p84 = scmp.ne.s32.totalorder %s72, %s73
      %p85 = scmp.eq.s32.totalorder %s21, 1
      %p86 = por %p84, %p85
      %p88 = scmp.ne.s32.totalorder %s73, %s87
      %p89 = scmp.eq.s32.totalorder %s21, 0
      %p90 = por %p88, %p89
      %s92 = sadd.s32 %s91, 1
      %p95 = scmp.eq.s32.totalorder %s15, 1
      %p96 = scmp.ne.s32.totalorder %s91, %s93
      %p97 = scmp.eq.s32.totalorder %s15, 0
      %p98 = por %p96, %p97
      %p99 = scmp.ne.s32.totalorder %s91, %s93
      %p100 = scmp.eq.s32.totalorder %s20, 1
      %p101 = por %p99, %p100
      %p102 = scmp.ne.s32.totalorder %s93, %s94
      %p103 = scmp.eq.s32.totalorder %s20, 0
      %p104 = por %p102, %p103
      %p105 = scmp.ne.s32.totalorder %s93, %s94
      %p106 = scmp.eq.s32.totalorder %s21, 1
      %p107 = por %p105, %p106
      %p109 = scmp.ne.s32.totalorder %s94, %s108
      %p110 = scmp.eq.s32.totalorder %s21, 0
      %p111 = por %p109, %p110
      %s113 = sadd.s32 %s112, 1
      %p116 = scmp.eq.s32.totalorder %s15, 1
      %p117 = scmp.ne.s32.totalorder %s112, %s114
      %p118 = scmp.eq.s32.totalorder %s15, 0
      %p119 = por %p117, %p118
      %p120 = scmp.ne.s32.totalorder %s112, %s114
      %p121 = scmp.eq.s32.totalorder %s20, 1
      %p122 = por %p120, %p121
      %p123 = scmp.ne.s32.totalorder %s114, %s115
      %p124 = scmp.eq.s32.totalorder %s20, 0
      %p125 = por %p123, %p124
      %p126 = scmp.ne.s32.totalorder %s114, %s115
      %p127 = scmp.eq.s32.totalorder %s21, 1
      %p128 = por %p126, %p127
      %p130 = scmp.ne.s32.totalorder %s115, %s129
      %p131 = scmp.eq.s32.totalorder %s21, 0
      %p132 = por %p130, %p131
      %s133 = ssub.s32 %s15, %s22
      %p134 = scmp.eq.s32.totalorder %s133, 0
      %s136 = sadd.s32 %s135, 1
      %s137 = scalar_select %p134, %s135, %s136
      %p140 = pneg %p134
      %p141 = scmp.eq.s32.totalorder %s15, 1
      %p142 = por %p140, %p141
      %p143 = scmp.ne.s32.totalorder %s135, %s138
      %p144 = scmp.eq.s32.totalorder %s15, 0
      %p145 = por %p143, %p144
      %p146 = scmp.ne.s32.totalorder %s135, %s138
      %p147 = scmp.eq.s32.totalorder %s20, 1
      %p148 = por %p146, %p147
      %p149 = scmp.ne.s32.totalorder %s138, %s139
      %p150 = scmp.eq.s32.totalorder %s20, 0
      %p151 = por %p149, %p150
      %p152 = scmp.ne.s32.totalorder %s138, %s139
      %p153 = scmp.eq.s32.totalorder %s21, 1
      %p154 = por %p152, %p153
      %p156 = scmp.ne.s32.totalorder %s139, %s155
      %p157 = scmp.eq.s32.totalorder %s21, 0
      %p158 = por %p156, %p157
      %p159 = scmp.le.s32.totalorder 1, %s15
      %p160 = scmp.lt.s32.totalorder %s15, 3
      %p161 = pnand %p159, %p160
      %p162 = pneg %p161
      // Predicated region
      $region9: #{_lambda_.2} parent=5 // pred_check
        _
      $region10: #{_lambda_.2} parent=5 // pred_check_branch
        %164 = sbr.rel (%p161) target = $region12
      $region11: #{_lambda_.2} parent=5 // pred_region
        %s165 = ssub.s32 %s15, 1
        // Predicated region
        $region13: #{_lambda_.2} parent=11 // pred_check
          %p166 = pneg %p62
        $region14: #{_lambda_.2} parent=11 // pred_check_branch
          %168 = sbr.rel (%p166) target = $region16
        $region15: #{_lambda_.2} parent=11 // pred_region
          %s170 = ssub.s32 512, 512
          %171 = vsyncadd [#allocation6], %s170
          %s172 = sshll.u32 [#allocation5], 4
          %s173 = int_to_ptr.vmem [resolvable:$true] %s172
          %178 = dma.hbm_to_vmem [thread:$0]  %s1, 512, %s173, [#allocation6], 128, 128, 8
        $region16: #{_lambda_.2} parent=11 // pred_fallthru
          _
        // Predicated region
        $region17: #{_lambda_.2} parent=11 // pred_check
          %p179 = pneg %p83
        $region18: #{_lambda_.2} parent=11 // pred_check_branch
          %181 = sbr.rel (%p179) target = $region20
        $region19: #{_lambda_.2} parent=11 // pred_region
          _
        $region20: #{_lambda_.2} parent=11 // pred_fallthru
          _
        // Predicated region
        $region21: #{_lambda_.2} parent=11 // pred_check
          %p182 = pneg %p104
        $region22: #{_lambda_.2} parent=11 // pred_check_branch
          %184 = sbr.rel (%p182) target = $region24
        $region23: #{_lambda_.2} parent=11 // pred_region
          %s186 = ssub.s32 1152, 1152
          %187 = vsyncadd [#allocation6], %s186
          %s188 = sshll.u32 [#allocation7], 4
          %s189 = int_to_ptr.vmem [resolvable:$true] %s188
          %194 = dma.hbm_to_vmem [thread:$0]  %s3, 1152, %s189, [#allocation6], 128, 128, 8
        $region24: #{_lambda_.2} parent=11 // pred_fallthru
          _
        // Predicated region
        $region25: #{_lambda_.2} parent=11 // pred_check
          %p195 = pneg %p125
        $region26: #{_lambda_.2} parent=11 // pred_check_branch
          %197 = sbr.rel (%p195) target = $region28
        $region27: #{_lambda_.2} parent=11 // pred_region
          _
        $region28: #{_lambda_.2} parent=11 // pred_fallthru
          _
      $region12: #{_lambda_.2} parent=5 // pred_fallthru
        _
      %p198 = scmp.lt.s32.totalorder %s15, 2
      // Predicated region
      $region29: #{_lambda_.2} parent=5 // pred_check
        %p199 = pneg %p198
      $region30: #{_lambda_.2} parent=5 // pred_check_branch
        %201 = sbr.rel (%p199) target = $region32
      $region31: #{_lambda_.2} parent=5 // pred_region
        // Predicated region
        $region33: #{_lambda_.2} parent=31 // pred_check
          %p202 = pneg %p35
        $region34: #{_lambda_.2} parent=31 // pred_check_branch
          %204 = sbr.rel (%p202) target = $region36
        $region35: #{_lambda_.2} parent=31 // pred_region
          %s205 = sand.u32 %s25, 1
          %s206 = scalar_lea.sflag [#allocation4], %s205
          %s207 = sand.u32 %s25, 1
          %s208 = smul.addr %s207, 256
          %s209 = scalar_lea.vmem [#allocation3], %s208
          %s211 = ssub.s32 4096, 4096
          %212 = vsyncadd %s206, %s211
          %s213 = smul.addr %s15, 32
          %s214 = smul.addr %s213, 128
          %s215 = scalar_lea.hbm %s0, %s214
          %s216 = sshll.u32 %s209, 4
          %s217 = int_to_ptr.vmem [resolvable:$true] %s216
          %222 = dma.hbm_to_vmem [thread:$0]  %s215, 4096, %s217, %s206, 128, 128, 8
        $region36: #{_lambda_.2} parent=31 // pred_fallthru
          _
      $region32: #{_lambda_.2} parent=5 // pred_fallthru
        _
      %p223 = scmp.le.s32.totalorder 1, %s15
      %p224 = scmp.lt.s32.totalorder %s15, 3
      %p225 = pnand %p223, %p224
      %p226 = pneg %p225
      // Predicated region
      $region37: #{_lambda_.2} parent=5 // pred_check
        _
      $region38: #{_lambda_.2} parent=5 // pred_check_branch
        %228 = sbr.rel (%p225) target = $region40
      $region39: #{_lambda_.2} parent=5 // pred_region
        %s229 = ssub.s32 %s15, 1
        %s230 = sand.u32 %s28, 1
        %s231 = scalar_lea.sflag [#allocation4], %s230
        %s232 = sand.u32 %s28, 1
        %s233 = smul.addr %s232, 256
        %s234 = scalar_lea.vmem [#allocation3], %s233
        // Predicated region
        $region41: #{_lambda_.2} parent=39 // pred_check
          %p235 = pneg %p41
        $region42: #{_lambda_.2} parent=39 // pred_check_branch
          %237 = sbr.rel (%p235) target = $region44
        $region43: #{_lambda_.2} parent=39 // pred_region
          %238 = dma.done %s231, 4096
        $region44: #{_lambda_.2} parent=39 // pred_fallthru
          _
        // Predicated region
        $region45: #{_lambda_.2} parent=39 // pred_check
          %p239 = pneg %p62
        $region46: #{_lambda_.2} parent=39 // pred_check_branch
          %241 = sbr.rel (%p239) target = $region48
        $region47: #{_lambda_.2} parent=39 // pred_region
          %242 = dma.done [#allocation6], 512
        $region48: #{_lambda_.2} parent=39 // pred_fallthru
          _
        // Predicated region
        $region49: #{_lambda_.2} parent=39 // pred_check
          %p243 = pneg %p104
        $region50: #{_lambda_.2} parent=39 // pred_check_branch
          %245 = sbr.rel (%p243) target = $region52
        $region51: #{_lambda_.2} parent=39 // pred_region
          %246 = dma.done [#allocation6], 1152
        $region52: #{_lambda_.2} parent=39 // pred_fallthru
          _
        %s247 = sand.u32 %s28, 1
        %s248 = scalar_lea.sflag [#allocation4], %s247
        %s249 = sand.u32 %s28, 1
        %s250 = smul.addr %s249, 256
        %s251 = scalar_lea.vmem [#allocation3], %s250
        %p252 = pneg %p41
        %p253 = pneg %p38
        %p254 = pneg %p62
        %p255 = pneg %p59
        %p256 = pneg %p83
        %p257 = pneg %p80
        %p258 = pneg %p104
        %p259 = pneg %p101
        %p260 = pneg %p125
        %p261 = pneg %p122
        %p262 = pneg %p151
        %p263 = pneg %p148
        %p264 = scmp.lt.s32.totalorder %s20, 1
        %s265 = scalar_select %p264, %s20, 1
        %s266 = smul.addr %s265, 32
        %s267 = smul.addr %s266, 8
        %s268 = scalar_lea.vmem %s5, %s267
        %p269 = scmp.lt.s32.totalorder %s20, 1
        %s270 = scalar_select %p269, %s20, 1
        %s271 = smul.addr %s270, 32
        %s272 = smul.addr %s271, 8
        %s273 = scalar_lea.vmem %s5, %s272
        %vm274 = vcmask 64512
        %275 = vst.msk [vmem:[#allocation2] sm:$0xff] %vm274, 0.0
        %276 = vst.msk [vmem:[#allocation2 + $0x8] sm:$0xff] %vm274, 0.0
        %vm277 = vcmask 58368
        %278 = vst.msk [vmem:[#allocation2 + $0x10] sm:$0x3] %vm277, 0.0
        %279 = vst.msk [vmem:[#allocation2 + $0x18] sm:$0xff] %vm274, 0.0
        %280 = vst.msk [vmem:[#allocation2 + $0x20] sm:$0xff] %vm274, 0.0
        %281 = vst.msk [vmem:[#allocation2 + $0x28] sm:$0x3] %vm277, 0.0
        %282 = vst.msk [vmem:[#allocation2 + $0x30] sm:$0xff] %vm274, 0.0
        %283 = vst.msk [vmem:[#allocation2 + $0x38] sm:$0xff] %vm274, 0.0
        %284 = vst.msk [vmem:[#allocation2 + $0x40] sm:$0x3] %vm277, 0.0
        %285 = vst.msk [vmem:[#allocation2 + $0x48] sm:$0xff] %vm274, 0.0
        %286 = vst.msk [vmem:[#allocation2 + $0x50] sm:$0xff] %vm274, 0.0
        %287 = vst.msk [vmem:[#allocation2 + $0x58] sm:$0x3] %vm277, 0.0
        %288 = vst.msk [vmem:[#allocation2 + $0x60] sm:$0xff] %vm274, 0.0
        %289 = vst.msk [vmem:[#allocation2 + $0x68] sm:$0xff] %vm274, 0.0
        %290 = vst.msk [vmem:[#allocation2 + $0x70] sm:$0x3] %vm277, 0.0
        %291 = vst.msk [vmem:[#allocation2 + $0x78] sm:$0xff] %vm274, 0.0
        %292 = vst.msk [vmem:[#allocation2 + $0x80] sm:$0xff] %vm274, 0.0
        %293 = vst.msk [vmem:[#allocation2 + $0x88] sm:$0x3] %vm277, 0.0
        %294 = vst.msk [vmem:[#allocation2 + $0x90] sm:$0xff] %vm274, 0.0
        %295 = vst.msk [vmem:[#allocation2 + $0x98] sm:$0xff] %vm274, 0.0
        %296 = vst.msk [vmem:[#allocation2 + $0xa0] sm:$0x3] %vm277, 0.0
        %297 = vst.msk [vmem:[#allocation2 + $0xa8] sm:$0xff] %vm274, 0.0
        %298 = vst.msk [vmem:[#allocation2 + $0xb0] sm:$0xff] %vm274, 0.0
        %299 = vst.msk [vmem:[#allocation2 + $0xb8] sm:$0x3] %vm277, 0.0
        %300 = vst.msk [vmem:[#allocation2 + $0xc0] sm:$0xff] %vm274, 0.0
        %301 = vst.msk [vmem:[#allocation2 + $0xc8] sm:$0xff] %vm274, 0.0
        %302 = vst.msk [vmem:[#allocation2 + $0xd0] sm:$0x3] %vm277, 0.0
        %303 = vst.msk [vmem:[#allocation2 + $0xd8] sm:$0xff] %vm274, 0.0
        %304 = vst.msk [vmem:[#allocation2 + $0xe0] sm:$0xff] %vm274, 0.0
        %305 = vst.msk [vmem:[#allocation2 + $0xe8] sm:$0x3] %vm277, 0.0
        %306 = vst.msk [vmem:[#allocation2 + $0xf0] sm:$0xff] %vm274, 0.0
        %307 = vst.msk [vmem:[#allocation2 + $0xf8] sm:$0xff] %vm274, 0.0
        %308 = vst.msk [vmem:[#allocation2 + $0x100] sm:$0x3] %vm277, 0.0
        %309 = vst.msk [vmem:[#allocation2 + $0x108] sm:$0xff] %vm274, 0.0
        %310 = vst.msk [vmem:[#allocation2 + $0x110] sm:$0xff] %vm274, 0.0
        %311 = vst.msk [vmem:[#allocation2 + $0x118] sm:$0x3] %vm277, 0.0
        %312 = vst.msk [vmem:[#allocation2 + $0x120] sm:$0xff] %vm274, 0.0
        %313 = vst.msk [vmem:[#allocation2 + $0x128] sm:$0xff] %vm274, 0.0
        %314 = vst.msk [vmem:[#allocation2 + $0x130] sm:$0x3] %vm277, 0.0
        %315 = vst.msk [vmem:[#allocation2 + $0x138] sm:$0xff] %vm274, 0.0
        %316 = vst.msk [vmem:[#allocation2 + $0x140] sm:$0xff] %vm274, 0.0
        %317 = vst.msk [vmem:[#allocation2 + $0x148] sm:$0x3] %vm277, 0.0
        %318 = vst.msk [vmem:[#allocation2 + $0x150] sm:$0xff] %vm274, 0.0
        %319 = vst.msk [vmem:[#allocation2 + $0x158] sm:$0xff] %vm274, 0.0
        %320 = vst.msk [vmem:[#allocation2 + $0x160] sm:$0x3] %vm277, 0.0
        %321 = vst.msk [vmem:[#allocation2 + $0x168] sm:$0xff] %vm274, 0.0
        %322 = vst.msk [vmem:[#allocation2 + $0x170] sm:$0xff] %vm274, 0.0
        %323 = vst.msk [vmem:[#allocation2 + $0x178] sm:$0x3] %vm277, 0.0
        %324 = vst.msk [vmem:[#allocation2 + $0x180] sm:$0xff] %vm274, 0.0
        %325 = vst.msk [vmem:[#allocation2 + $0x188] sm:$0xff] %vm274, 0.0
        %326 = vst.msk [vmem:[#allocation2 + $0x190] sm:$0x3] %vm277, 0.0
        %327 = vst.msk [vmem:[#allocation2 + $0x198] sm:$0xff] %vm274, 0.0
        %328 = vst.msk [vmem:[#allocation2 + $0x1a0] sm:$0xff] %vm274, 0.0
        %329 = vst.msk [vmem:[#allocation2 + $0x1a8] sm:$0x3] %vm277, 0.0
        %v330 = vld [vmem:[%s234] sm:$0xff]
        %v331 = vld [vmem:[%s234 + $0x8] sm:$0xff]
        %v332 = vld [vmem:[%s234 + $0x10] sm:$0xff]
        %v333 = vld [vmem:[%s234 + $0x18] sm:$0xff]
        %v334 = vld [vmem:[%s234 + $0x20] sm:$0xff]
        %v335 = vld [vmem:[%s234 + $0x28] sm:$0xff]
        %v336 = vld [vmem:[%s234 + $0x30] sm:$0xff]
        %v337 = vld [vmem:[%s234 + $0x38] sm:$0xff]
        %v338 = vld [vmem:[%s234 + $0x40] sm:$0xff]
        %v339 = vld [vmem:[%s234 + $0x48] sm:$0xff]
        %v340 = vld [vmem:[%s234 + $0x50] sm:$0xff]
        %v341 = vld [vmem:[%s234 + $0x58] sm:$0xff]
        %v342 = vld [vmem:[%s234 + $0x60] sm:$0xff]
        %v343 = vld [vmem:[%s234 + $0x68] sm:$0xff]
        %v344 = vld [vmem:[%s234 + $0x70] sm:$0xff]
        %v345 = vld [vmem:[%s234 + $0x78] sm:$0xff]
        %v346 = vld [vmem:[%s234 + $0x80] sm:$0xff]
        %v347 = vld [vmem:[%s234 + $0x88] sm:$0xff]
        %v348 = vld [vmem:[%s234 + $0x90] sm:$0xff]
        %v349 = vld [vmem:[%s234 + $0x98] sm:$0xff]
        %v350 = vld [vmem:[%s234 + $0xa0] sm:$0xff]
        %v351 = vld [vmem:[%s234 + $0xa8] sm:$0xff]
        %v352 = vld [vmem:[%s234 + $0xb0] sm:$0xff]
        %v353 = vld [vmem:[%s234 + $0xb8] sm:$0xff]
        %v354 = vld [vmem:[%s234 + $0xc0] sm:$0xff]
        %v355 = vld [vmem:[%s234 + $0xc8] sm:$0xff]
        %v356 = vld [vmem:[%s234 + $0xd0] sm:$0xff]
        %v357 = vld [vmem:[%s234 + $0xd8] sm:$0xff]
        %v358 = vld [vmem:[%s234 + $0xe0] sm:$0xff]
        %v359 = vld [vmem:[%s234 + $0xe8] sm:$0xff]
        %v360 = vld [vmem:[%s234 + $0xf0] sm:$0xff]
        %v361 = vld [vmem:[%s234 + $0xf8] sm:$0xff]
        %v362 = vld [vmem:[#allocation5] sm:$0xff]
        %v363 = vld [vmem:[#allocation5 + $0x8] sm:$0xff]
        %v364 = vld [vmem:[#allocation5 + $0x10] sm:$0xff]
        %v365 = vld [vmem:[#allocation5 + $0x18] sm:$0xff]
        %v366 = vld [vmem:[%s2] sm:$0x1]
        %v368 = vlaneseq
        %v369 = vshrl.u32 %v368, 7
        %v370 = vsub.s32 0, %v369
        %v371 = vrot.slane %v366, %v370
        %vm373 = vcmask 261120
        %v375 = vsel %vm373, %v330, 0
        %v378 = vsel %vm373, %v331, 0
        %v381 = vsel %vm373, %v332, 0
        %v384 = vsel %vm373, %v333, 0
        %v387 = vsel %vm373, %v334, 0
        %v390 = vsel %vm373, %v335, 0
        %v393 = vsel %vm373, %v336, 0
        %v396 = vsel %vm373, %v337, 0
        %v399 = vsel %vm373, %v338, 0
        %v402 = vsel %vm373, %v339, 0
        %v405 = vsel %vm373, %v340, 0
        %v408 = vsel %vm373, %v341, 0
        %v411 = vsel %vm373, %v342, 0
        %v414 = vsel %vm373, %v343, 0
        %v417 = vsel %vm373, %v344, 0
        %v420 = vsel %vm373, %v345, 0
        %v423 = vsel %vm373, %v346, 0
        %v426 = vsel %vm373, %v347, 0
        %v429 = vsel %vm373, %v348, 0
        %v432 = vsel %vm373, %v349, 0
        %v435 = vsel %vm373, %v350, 0
        %v438 = vsel %vm373, %v351, 0
        %v441 = vsel %vm373, %v352, 0
        %v444 = vsel %vm373, %v353, 0
        %v447 = vsel %vm373, %v354, 0
        %v450 = vsel %vm373, %v355, 0
        %v453 = vsel %vm373, %v356, 0
        %v456 = vsel %vm373, %v357, 0
        %v459 = vsel %vm373, %v358, 0
        %v462 = vsel %vm373, %v359, 0
        %v465 = vsel %vm373, %v360, 0
        %v468 = vsel %vm373, %v361, 0
        %470 = vmatprep.subr.mxu0 0.0
        %471 = vmatpush1.msra.mxu0 %v362
        %472 = vmatprep.subr.mxu0 0.0
        %473 = vmatpush1.msra.mxu0 %v363
        %474 = vmatprep.subr.mxu0 0.0
        %475 = vmatpush1.msra.mxu0 %v364
        %476 = vmatprep.subr.mxu0 0.0
        %477 = vmatpush1.msra.mxu0 %v365
        %478 = vmatprep.subr.mxu0 0.0
        %479 = vmatpush1.msra.mxu0 0.0
        %480 = vmatprep.subr.mxu0 0.0
        %481 = vmatpush1.msra.mxu0 0.0
        %482 = vmatprep.subr.mxu0 0.0
        %483 = vmatpush1.msra.mxu0 0.0
        %484 = vmatprep.subr.mxu0 0.0
        %485 = vmatpush1.msra.mxu0 0.0
        %486 = vmatprep.subr.mxu0 0.0
        %487 = vmatpush1.msra.mxu0 0.0
        %488 = vmatprep.subr.mxu0 0.0
        %489 = vmatpush1.msra.mxu0 0.0
        %490 = vmatprep.subr.mxu0 0.0
        %491 = vmatpush1.msra.mxu0 0.0
        %492 = vmatprep.subr.mxu0 0.0
        %493 = vmatpush1.msra.mxu0 0.0
        %494 = vmatprep.subr.mxu0 0.0
        %495 = vmatpush1.msra.mxu0 0.0
        %496 = vmatprep.subr.mxu0 0.0
        %497 = vmatpush1.msra.mxu0 0.0
        %498 = vmatprep.subr.mxu0 0.0
        %499 = vmatpush1.msra.mxu0 0.0
        %500 = vmatprep.subr.mxu0 0.0
        %501 = vmatpush1.msra.mxu0 0.0
        %502 = vmatprep.subr.mxu0 0.0
        %503 = vmatpush1.msra.mxu0 0.0
        %504 = vmatprep.subr.mxu0 0.0
        %505 = vmatpush1.msra.mxu0 0.0
        %506 = vmatprep.subr.mxu0 0.0
        %507 = vmatpush1.msra.mxu0 0.0
        %508 = vmatprep.subr.mxu0 0.0
        %509 = vmatpush1.msra.mxu0 0.0
        %510 = vmatprep.subr.mxu0 0.0
        %511 = vmatpush1.msra.mxu0 0.0
        %512 = vmatprep.subr.mxu0 0.0
        %513 = vmatpush1.msra.mxu0 0.0
        %514 = vmatprep.subr.mxu0 0.0
        %515 = vmatpush1.msra.mxu0 0.0
        %516 = vmatprep.subr.mxu0 0.0
        %517 = vmatpush1.msra.mxu0 0.0
        %518 = vmatprep.subr.mxu0 0.0
        %519 = vmatpush1.msra.mxu0 0.0
        %520 = vmatprep.subr.mxu0 0.0
        %521 = vmatpush1.msra.mxu0 0.0
        %522 = vmatprep.subr.mxu0 0.0
        %523 = vmatpush1.msra.mxu0 0.0
        %524 = vmatprep.subr.mxu0 0.0
        %525 = vmatpush1.msra.mxu0 0.0
        %526 = vmatprep.subr.mxu0 0.0
        %527 = vmatpush1.msra.mxu0 0.0
        %528 = vmatprep.subr.mxu0 0.0
        %529 = vmatpush1.msra.mxu0 0.0
        %530 = vmatprep.subr.mxu0 0.0
        %531 = vmatpush1.msra.mxu0 0.0
        %532 = vmatprep.subr.mxu0 0.0
        %533 = vmatpush1.msra.mxu0 0.0
        %534 = vmatprep.mubr.f32.mxu0 0.0
        %535 = vmatmul.mubr.f32.gmra.mrb[0].mxu0 %v375
        %v536 = vpop.f32.mrb[0].mxu0
        %v537 = vadd.f32 %v371, %v536
        %v538 = vpop.f32.mrb[0].mxu0
        %539 = vmatprep.mubr.f32.mxu0 0.0
        %540 = vmatmul.mubr.f32.gmra.mrb[0].mxu0 %v378
        %v541 = vpop.f32.mrb[0].mxu0
        %v542 = vadd.f32 %v371, %v541
        %v543 = vpop.f32.mrb[0].mxu0
        %544 = vmatprep.mubr.f32.mxu0 0.0
        %545 = vmatmul.mubr.f32.gmra.mrb[0].mxu0 %v381
        %v546 = vpop.f32.mrb[0].mxu0
        %v547 = vadd.f32 %v371, %v546
        %v548 = vpop.f32.mrb[0].mxu0
        %549 = vmatprep.mubr.f32.mxu0 0.0
        %550 = vmatmul.mubr.f32.gmra.mrb[0].mxu0 %v384
        %v551 = vpop.f32.mrb[0].mxu0
        %v552 = vadd.f32 %v371, %v551
        %v553 = vpop.f32.mrb[0].mxu0
        %554 = vmatprep.mubr.f32.mxu0 0.0
        %555 = vmatmul.mubr.f32.gmra.mrb[0].mxu0 %v387
        %v556 = vpop.f32.mrb[0].mxu0
        %v557 = vadd.f32 %v371, %v556
        %v558 = vpop.f32.mrb[0].mxu0
        %559 = vmatprep.mubr.f32.mxu0 0.0
        %560 = vmatmul.mubr.f32.gmra.mrb[0].mxu0 %v390
        %v561 = vpop.f32.mrb[0].mxu0
        %v562 = vadd.f32 %v371, %v561
        %v563 = vpop.f32.mrb[0].mxu0
        %564 = vmatprep.mubr.f32.mxu0 0.0
        %565 = vmatmul.mubr.f32.gmra.mrb[0].mxu0 %v393
        %v566 = vpop.f32.mrb[0].mxu0
        %v567 = vadd.f32 %v371, %v566
        %v568 = vpop.f32.mrb[0].mxu0
        %569 = vmatprep.mubr.f32.mxu0 0.0
        %570 = vmatmul.mubr.f32.gmra.mrb[0].mxu0 %v396
        %v571 = vpop.f32.mrb[0].mxu0
        %v572 = vadd.f32 %v371, %v571
        %v573 = vpop.f32.mrb[0].mxu0
        %574 = vmatprep.mubr.f32.mxu0 0.0
        %575 = vmatmul.mubr.f32.gmra.mrb[0].mxu0 %v399
        %v576 = vpop.f32.mrb[0].mxu0
        %v577 = vadd.f32 %v371, %v576
        %v578 = vpop.f32.mrb[0].mxu0
        %579 = vmatprep.mubr.f32.mxu0 0.0
        %580 = vmatmul.mubr.f32.gmra.mrb[0].mxu0 %v402
        %v581 = vpop.f32.mrb[0].mxu0
        %v582 = vadd.f32 %v371, %v581
        %v583 = vpop.f32.mrb[0].mxu0
        %584 = vmatprep.mubr.f32.mxu0 0.0
        %585 = vmatmul.mubr.f32.gmra.mrb[0].mxu0 %v405
        %v586 = vpop.f32.mrb[0].mxu0
        %v587 = vadd.f32 %v371, %v586
        %v588 = vpop.f32.mrb[0].mxu0
        %589 = vmatprep.mubr.f32.mxu0 0.0
        %590 = vmatmul.mubr.f32.gmra.mrb[0].mxu0 %v408
        %v591 = vpop.f32.mrb[0].mxu0
        %v592 = vadd.f32 %v371, %v591
        %v593 = vpop.f32.mrb[0].mxu0
        %594 = vmatprep.mubr.f32.mxu0 0.0
        %595 = vmatmul.mubr.f32.gmra.mrb[0].mxu0 %v411
        %v596 = vpop.f32.mrb[0].mxu0
        %v597 = vadd.f32 %v371, %v596
        %v598 = vpop.f32.mrb[0].mxu0
        %599 = vmatprep.mubr.f32.mxu0 0.0
        %600 = vmatmul.mubr.f32.gmra.mrb[0].mxu0 %v414
        %v601 = vpop.f32.mrb[0].mxu0
        %v602 = vadd.f32 %v371, %v601
        %v603 = vpop.f32.mrb[0].mxu0
        %604 = vmatprep.mubr.f32.mxu0 0.0
        %605 = vmatmul.mubr.f32.gmra.mrb[0].mxu0 %v417
        %v606 = vpop.f32.mrb[0].mxu0
        %v607 = vadd.f32 %v371, %v606
        %v608 = vpop.f32.mrb[0].mxu0
        %609 = vmatprep.mubr.f32.mxu0 0.0
        %610 = vmatmul.mubr.f32.gmra.mrb[0].mxu0 %v420
        %v611 = vpop.f32.mrb[0].mxu0
        %v612 = vadd.f32 %v371, %v611
        %v613 = vpop.f32.mrb[0].mxu0
        %614 = vmatprep.mubr.f32.mxu0 0.0
        %615 = vmatmul.mubr.f32.gmra.mrb[0].mxu0 %v423
        %v616 = vpop.f32.mrb[0].mxu0
        %v617 = vadd.f32 %v371, %v616
        %v618 = vpop.f32.mrb[0].mxu0
        %619 = vmatprep.mubr.f32.mxu0 0.0
        %620 = vmatmul.mubr.f32.gmra.mrb[0].mxu0 %v426
        %v621 = vpop.f32.mrb[0].mxu0
        %v622 = vadd.f32 %v371, %v621
        %v623 = vpop.f32.mrb[0].mxu0
        %624 = vmatprep.mubr.f32.mxu0 0.0
        %625 = vmatmul.mubr.f32.gmra.mrb[0].mxu0 %v429
        %v626 = vpop.f32.mrb[0].mxu0
        %v627 = vadd.f32 %v371, %v626
        %v628 = vpop.f32.mrb[0].mxu0
        %629 = vmatprep.mubr.f32.mxu0 0.0
        %630 = vmatmul.mubr.f32.gmra.mrb[0].mxu0 %v432
        %v631 = vpop.f32.mrb[0].mxu0
        %v632 = vadd.f32 %v371, %v631
        %v633 = vpop.f32.mrb[0].mxu0
        %634 = vmatprep.mubr.f32.mxu0 0.0
        %635 = vmatmul.mubr.f32.gmra.mrb[0].mxu0 %v435
        %v636 = vpop.f32.mrb[0].mxu0
        %v637 = vadd.f32 %v371, %v636
        %v638 = vpop.f32.mrb[0].mxu0
        %639 = vmatprep.mubr.f32.mxu0 0.0
        %640 = vmatmul.mubr.f32.gmra.mrb[0].mxu0 %v438
        %v641 = vpop.f32.mrb[0].mxu0
        %v642 = vadd.f32 %v371, %v641
        %v643 = vpop.f32.mrb[0].mxu0
        %644 = vmatprep.mubr.f32.mxu0 0.0
        %645 = vmatmul.mubr.f32.gmra.mrb[0].mxu0 %v441
        %v646 = vpop.f32.mrb[0].mxu0
        %v647 = vadd.f32 %v371, %v646
        %v648 = vpop.f32.mrb[0].mxu0
        %649 = vmatprep.mubr.f32.mxu0 0.0
        %650 = vmatmul.mubr.f32.gmra.mrb[0].mxu0 %v444
        %v651 = vpop.f32.mrb[0].mxu0
        %v652 = vadd.f32 %v371, %v651
        %v653 = vpop.f32.mrb[0].mxu0
        %654 = vmatprep.mubr.f32.mxu0 0.0
        %655 = vmatmul.mubr.f32.gmra.mrb[0].mxu0 %v447
        %v656 = vpop.f32.mrb[0].mxu0
        %v657 = vadd.f32 %v371, %v656
        %v658 = vpop.f32.mrb[0].mxu0
        %659 = vmatprep.mubr.f32.mxu0 0.0
        %660 = vmatmul.mubr.f32.gmra.mrb[0].mxu0 %v450
        %v661 = vpop.f32.mrb[0].mxu0
        %v662 = vadd.f32 %v371, %v661
        %v663 = vpop.f32.mrb[0].mxu0
        %664 = vmatprep.mubr.f32.mxu0 0.0
        %665 = vmatmul.mubr.f32.gmra.mrb[0].mxu0 %v453
        %v666 = vpop.f32.mrb[0].mxu0
        %v667 = vadd.f32 %v371, %v666
        %v668 = vpop.f32.mrb[0].mxu0
        %669 = vmatprep.mubr.f32.mxu0 0.0
        %670 = vmatmul.mubr.f32.gmra.mrb[0].mxu0 %v456
        %v671 = vpop.f32.mrb[0].mxu0
        %v672 = vadd.f32 %v371, %v671
        %v673 = vpop.f32.mrb[0].mxu0
        %674 = vmatprep.mubr.f32.mxu0 0.0
        %675 = vmatmul.mubr.f32.gmra.mrb[0].mxu0 %v459
        %v676 = vpop.f32.mrb[0].mxu0
        %v677 = vadd.f32 %v371, %v676
        %v678 = vpop.f32.mrb[0].mxu0
        %679 = vmatprep.mubr.f32.mxu0 0.0
        %680 = vmatmul.mubr.f32.gmra.mrb[0].mxu0 %v462
        %v681 = vpop.f32.mrb[0].mxu0
        %v682 = vadd.f32 %v371, %v681
        %v683 = vpop.f32.mrb[0].mxu0
        %684 = vmatprep.mubr.f32.mxu0 0.0
        %685 = vmatmul.mubr.f32.gmra.mrb[0].mxu0 %v465
        %v686 = vpop.f32.mrb[0].mxu0
        %v687 = vadd.f32 %v371, %v686
        %v688 = vpop.f32.mrb[0].mxu0
        %689 = vmatprep.mubr.f32.mxu0 0.0
        %690 = vmatmul.mubr.f32.gmra.mrb[0].mxu0 %v468
        %v691 = vpop.f32.mrb[0].mxu0
        %v692 = vadd.f32 %v371, %v691
        %v693 = vpop.f32.mrb[0].mxu0
        %694 = vdwg.mxu0
        %v695 = vmax.f32 %v537, 0.0
        %v696 = vmax.f32 %v542, 0.0
        %v697 = vmax.f32 %v547, 0.0
        %v698 = vmax.f32 %v552, 0.0
        %v699 = vmax.f32 %v557, 0.0
        %v700 = vmax.f32 %v562, 0.0
        %v701 = vmax.f32 %v567, 0.0
        %v702 = vmax.f32 %v572, 0.0
        %v703 = vmax.f32 %v577, 0.0
        %v704 = vmax.f32 %v582, 0.0
        %v705 = vmax.f32 %v587, 0.0
        %v706 = vmax.f32 %v592, 0.0
        %v707 = vmax.f32 %v597, 0.0
        %v708 = vmax.f32 %v602, 0.0
        %v709 = vmax.f32 %v607, 0.0
        %v710 = vmax.f32 %v612, 0.0
        %v711 = vmax.f32 %v617, 0.0
        %v712 = vmax.f32 %v622, 0.0
        %v713 = vmax.f32 %v627, 0.0
        %v714 = vmax.f32 %v632, 0.0
        %v715 = vmax.f32 %v637, 0.0
        %v716 = vmax.f32 %v642, 0.0
        %v717 = vmax.f32 %v647, 0.0
        %v718 = vmax.f32 %v652, 0.0
        %v719 = vmax.f32 %v657, 0.0
        %v720 = vmax.f32 %v662, 0.0
        %v721 = vmax.f32 %v667, 0.0
        %v722 = vmax.f32 %v672, 0.0
        %v723 = vmax.f32 %v677, 0.0
        %v724 = vmax.f32 %v682, 0.0
        %v725 = vmax.f32 %v687, 0.0
        %v726 = vmax.f32 %v692, 0.0
        %s727 = scalar_lea.vmem [#allocation2], 24
        %728 = vst.msk [vmem:[%s727 + $0x1] sm:$0xff] %vm274, %v695
        %729 = vst.msk [vmem:[%s727 + $0x9] sm:$0xff] %vm274, %v696
        %730 = vst.msk [vmem:[%s727 + $0x19] sm:$0xff] %vm274, %v697
        %731 = vst.msk [vmem:[%s727 + $0x21] sm:$0xff] %vm274, %v698
        %732 = vst.msk [vmem:[%s727 + $0x31] sm:$0xff] %vm274, %v699
        %733 = vst.msk [vmem:[%s727 + $0x39] sm:$0xff] %vm274, %v700
        %734 = vst.msk [vmem:[%s727 + $0x49] sm:$0xff] %vm274, %v701
        %735 = vst.msk [vmem:[%s727 + $0x51] sm:$0xff] %vm274, %v702
        %736 = vst.msk [vmem:[%s727 + $0x61] sm:$0xff] %vm274, %v703
        %737 = vst.msk [vmem:[%s727 + $0x69] sm:$0xff] %vm274, %v704
        %738 = vst.msk [vmem:[%s727 + $0x79] sm:$0xff] %vm274, %v705
        %739 = vst.msk [vmem:[%s727 + $0x81] sm:$0xff] %vm274, %v706
        %740 = vst.msk [vmem:[%s727 + $0x91] sm:$0xff] %vm274, %v707
        %741 = vst.msk [vmem:[%s727 + $0x99] sm:$0xff] %vm274, %v708
        %742 = vst.msk [vmem:[%s727 + $0xa9] sm:$0xff] %vm274, %v709
        %743 = vst.msk [vmem:[%s727 + $0xb1] sm:$0xff] %vm274, %v710
        %744 = vst.msk [vmem:[%s727 + $0xc1] sm:$0xff] %vm274, %v711
        %745 = vst.msk [vmem:[%s727 + $0xc9] sm:$0xff] %vm274, %v712
        %746 = vst.msk [vmem:[%s727 + $0xd9] sm:$0xff] %vm274, %v713
        %747 = vst.msk [vmem:[%s727 + $0xe1] sm:$0xff] %vm274, %v714
        %748 = vst.msk [vmem:[%s727 + $0xf1] sm:$0xff] %vm274, %v715
        %749 = vst.msk [vmem:[%s727 + $0xf9] sm:$0xff] %vm274, %v716
        %750 = vst.msk [vmem:[%s727 + $0x109] sm:$0xff] %vm274, %v717
        %751 = vst.msk [vmem:[%s727 + $0x111] sm:$0xff] %vm274, %v718
        %752 = vst.msk [vmem:[%s727 + $0x121] sm:$0xff] %vm274, %v719
        %753 = vst.msk [vmem:[%s727 + $0x129] sm:$0xff] %vm274, %v720
        %754 = vst.msk [vmem:[%s727 + $0x139] sm:$0xff] %vm274, %v721
        %755 = vst.msk [vmem:[%s727 + $0x141] sm:$0xff] %vm274, %v722
        %756 = vst.msk [vmem:[%s727 + $0x151] sm:$0xff] %vm274, %v723
        %757 = vst.msk [vmem:[%s727 + $0x159] sm:$0xff] %vm274, %v724
        %758 = vst.msk [vmem:[%s727 + $0x169] sm:$0xff] %vm274, %v725
        %759 = vst.msk [vmem:[%s727 + $0x171] sm:$0xff] %vm274, %v726
        %v760 = vld [vmem:[#allocation2] sm:$0xff]
        %v761 = vld [vmem:[#allocation2 + $0x8] sm:$0xff]
        %v762 = vld [vmem:[#allocation2 + $0x18] sm:$0xff]
        %v763 = vld [vmem:[#allocation2 + $0x20] sm:$0xff]
        %v764 = vld [vmem:[#allocation2 + $0x30] sm:$0xff]
        %v765 = vld [vmem:[#allocation2 + $0x38] sm:$0xff]
        %v766 = vld [vmem:[#allocation2 + $0x48] sm:$0xff]
        %v767 = vld [vmem:[#allocation2 + $0x50] sm:$0xff]
        %v768 = vld [vmem:[#allocation2 + $0x60] sm:$0xff]
        %v769 = vld [vmem:[#allocation2 + $0x68] sm:$0xff]
        %v770 = vld [vmem:[#allocation2 + $0x78] sm:$0xff]
        %v771 = vld [vmem:[#allocation2 + $0x80] sm:$0xff]
        %v772 = vld [vmem:[#allocation2 + $0x90] sm:$0xff]
        %v773 = vld [vmem:[#allocation2 + $0x98] sm:$0xff]
        %v774 = vld [vmem:[#allocation2 + $0xa8] sm:$0xff]
        %v775 = vld [vmem:[#allocation2 + $0xb0] sm:$0xff]
        %v776 = vld [vmem:[#allocation2 + $0xc0] sm:$0xff]
        %v777 = vld [vmem:[#allocation2 + $0xc8] sm:$0xff]
        %v778 = vld [vmem:[#allocation2 + $0xd8] sm:$0xff]
        %v779 = vld [vmem:[#allocation2 + $0xe0] sm:$0xff]
        %v780 = vld [vmem:[#allocation2 + $0xf0] sm:$0xff]
        %v781 = vld [vmem:[#allocation2 + $0xf8] sm:$0xff]
        %v782 = vld [vmem:[#allocation2 + $0x108] sm:$0xff]
        %v783 = vld [vmem:[#allocation2 + $0x110] sm:$0xff]
        %v784 = vld [vmem:[#allocation2 + $0x120] sm:$0xff]
        %v785 = vld [vmem:[#allocation2 + $0x128] sm:$0xff]
        %v786 = vld [vmem:[#allocation2 + $0x138] sm:$0xff]
        %v787 = vld [vmem:[#allocation2 + $0x140] sm:$0xff]
        %v788 = vld [vmem:[#allocation2 + $0x150] sm:$0xff]
        %v789 = vld [vmem:[#allocation2 + $0x158] sm:$0xff]
        %v790 = vld [vmem:[#allocation2 + $0x168] sm:$0xff]
        %v791 = vld [vmem:[#allocation2 + $0x170] sm:$0xff]
        %v792 = vld [vmem:[#allocation7] sm:$0xff]
        %v793 = vld [vmem:[#allocation2 + $0x1] sm:$0xff]
        %v794 = vld [vmem:[#allocation2 + $0x9] sm:$0xff]
        %v795 = vld [vmem:[#allocation2 + $0x19] sm:$0xff]
        %v796 = vld [vmem:[#allocation2 + $0x21] sm:$0xff]
        %v797 = vld [vmem:[#allocation2 + $0x31] sm:$0xff]
        %v798 = vld [vmem:[#allocation2 + $0x39] sm:$0xff]
        %v799 = vld [vmem:[#allocation2 + $0x49] sm:$0xff]
        %v800 = vld [vmem:[#allocation2 + $0x51] sm:$0xff]
        %v801 = vld [vmem:[#allocation2 + $0x61] sm:$0xff]
        %v802 = vld [vmem:[#allocation2 + $0x69] sm:$0xff]
        %v803 = vld [vmem:[#allocation2 + $0x79] sm:$0xff]
        %v804 = vld [vmem:[#allocation2 + $0x81] sm:$0xff]
        %v805 = vld [vmem:[#allocation2 + $0x91] sm:$0xff]
        %v806 = vld [vmem:[#allocation2 + $0x99] sm:$0xff]
        %v807 = vld [vmem:[#allocation2 + $0xa9] sm:$0xff]
        %v808 = vld [vmem:[#allocation2 + $0xb1] sm:$0xff]
        %v809 = vld [vmem:[#allocation2 + $0xc1] sm:$0xff]
        %v810 = vld [vmem:[#allocation2 + $0xc9] sm:$0xff]
        %v811 = vld [vmem:[#allocation2 + $0xd9] sm:$0xff]
        %v812 = vld [vmem:[#allocation2 + $0xe1] sm:$0xff]
        %v813 = vld [vmem:[#allocation2 + $0xf1] sm:$0xff]
        %v814 = vld [vmem:[#allocation2 + $0xf9] sm:$0xff]
        %v815 = vld [vmem:[#allocation2 + $0x109] sm:$0xff]
        %v816 = vld [vmem:[#allocation2 + $0x111] sm:$0xff]
        %v817 = vld [vmem:[#allocation2 + $0x121] sm:$0xff]
        %v818 = vld [vmem:[#allocation2 + $0x129] sm:$0xff]
        %v819 = vld [vmem:[#allocation2 + $0x139] sm:$0xff]
        %v820 = vld [vmem:[#allocation2 + $0x141] sm:$0xff]
        %v821 = vld [vmem:[#allocation2 + $0x151] sm:$0xff]
        %v822 = vld [vmem:[#allocation2 + $0x159] sm:$0xff]
        %v823 = vld [vmem:[#allocation2 + $0x169] sm:$0xff]
        %v824 = vld [vmem:[#allocation2 + $0x171] sm:$0xff]
        %s825 = scalar_lea.vmem [#allocation7], 8
        %v826 = vld [vmem:[%s825] sm:$0xff]
        %v828 = vsel %vm274, %v793, 0
        %v831 = vsel %vm274, %v794, 0
        %v834 = vsel %vm274, %v795, 0
        %v837 = vsel %vm274, %v796, 0
        %v840 = vsel %vm274, %v797, 0
        %v843 = vsel %vm274, %v798, 0
        %v846 = vsel %vm274, %v799, 0
        %v849 = vsel %vm274, %v800, 0
        %v852 = vsel %vm274, %v801, 0
        %v855 = vsel %vm274, %v802, 0
        %v858 = vsel %vm274, %v803, 0
        %v861 = vsel %vm274, %v804, 0
        %v864 = vsel %vm274, %v805, 0
        %v867 = vsel %vm274, %v806, 0
        %v870 = vsel %vm274, %v807, 0
        %v873 = vsel %vm274, %v808, 0
        %v876 = vsel %vm274, %v809, 0
        %v879 = vsel %vm274, %v810, 0
        %v882 = vsel %vm274, %v811, 0
        %v885 = vsel %vm274, %v812, 0
        %v888 = vsel %vm274, %v813, 0
        %v891 = vsel %vm274, %v814, 0
        %v894 = vsel %vm274, %v815, 0
        %v897 = vsel %vm274, %v816, 0
        %v900 = vsel %vm274, %v817, 0
        %v903 = vsel %vm274, %v818, 0
        %v906 = vsel %vm274, %v819, 0
        %v909 = vsel %vm274, %v820, 0
        %v912 = vsel %vm274, %v821, 0
        %v915 = vsel %vm274, %v822, 0
        %v918 = vsel %vm274, %v823, 0
        %v921 = vsel %vm274, %v824, 0
        %923 = vmatprep.subr.mxu0 0.0
        %924 = vmatpush1.msra.mxu0 %v826
        %925 = vmatprep.subr.mxu0 0.0
        %926 = vmatpush1.msra.mxu0 0.0
        %927 = vmatprep.subr.mxu0 0.0
        %928 = vmatpush1.msra.mxu0 0.0
        %929 = vmatprep.subr.mxu0 0.0
        %930 = vmatpush1.msra.mxu0 0.0
        %931 = vmatprep.subr.mxu0 0.0
        %932 = vmatpush1.msra.mxu0 0.0
        %933 = vmatprep.subr.mxu0 0.0
        %934 = vmatpush1.msra.mxu0 0.0
        %935 = vmatprep.subr.mxu0 0.0
        %936 = vmatpush1.msra.mxu0 0.0
        %937 = vmatprep.subr.mxu0 0.0
        %938 = vmatpush1.msra.mxu0 0.0
        %939 = vmatprep.subr.mxu0 0.0
        %940 = vmatpush1.msra.mxu0 0.0
        %941 = vmatprep.subr.mxu0 0.0
        %942 = vmatpush1.msra.mxu0 0.0
        %943 = vmatprep.subr.mxu0 0.0
        %944 = vmatpush1.msra.mxu0 0.0
        %945 = vmatprep.subr.mxu0 0.0
        %946 = vmatpush1.msra.mxu0 0.0
        %947 = vmatprep.subr.mxu0 0.0
        %948 = vmatpush1.msra.mxu0 0.0
        %949 = vmatprep.subr.mxu0 0.0
        %950 = vmatpush1.msra.mxu0 0.0
        %951 = vmatprep.subr.mxu0 0.0
        %952 = vmatpush1.msra.mxu0 0.0
        %953 = vmatprep.subr.mxu0 0.0
        %954 = vmatpush1.msra.mxu0 0.0
        %955 = vmatprep.subr.mxu0 0.0
        %956 = vmatpush1.msra.mxu0 0.0
        %957 = vmatprep.subr.mxu0 0.0
        %958 = vmatpush1.msra.mxu0 0.0
        %959 = vmatprep.subr.mxu0 0.0
        %960 = vmatpush1.msra.mxu0 0.0
        %961 = vmatprep.subr.mxu0 0.0
        %962 = vmatpush1.msra.mxu0 0.0
        %963 = vmatprep.subr.mxu0 0.0
        %964 = vmatpush1.msra.mxu0 0.0
        %965 = vmatprep.subr.mxu0 0.0
        %966 = vmatpush1.msra.mxu0 0.0
        %967 = vmatprep.subr.mxu0 0.0
        %968 = vmatpush1.msra.mxu0 0.0
        %969 = vmatprep.subr.mxu0 0.0
        %970 = vmatpush1.msra.mxu0 0.0
        %971 = vmatprep.subr.mxu0 0.0
        %972 = vmatpush1.msra.mxu0 0.0
        %973 = vmatprep.subr.mxu0 0.0
        %974 = vmatpush1.msra.mxu0 0.0
        %975 = vmatprep.subr.mxu0 0.0
        %976 = vmatpush1.msra.mxu0 0.0
        %977 = vmatprep.subr.mxu0 0.0
        %978 = vmatpush1.msra.mxu0 0.0
        %979 = vmatprep.subr.mxu0 0.0
        %980 = vmatpush1.msra.mxu0 0.0
        %981 = vmatprep.subr.mxu0 0.0
        %982 = vmatpush1.msra.mxu0 0.0
        %983 = vmatprep.subr.mxu0 0.0
        %984 = vmatpush1.msra.mxu0 0.0
        %985 = vmatprep.subr.mxu0 0.0
        %986 = vmatpush1.msra.mxu0 0.0
        %987 = vmatprep.mubr.f32.mxu0 0.0
        %988 = vmatmul.mubr.f32.gmra.mrb[0].mxu0 %v828
        %v989 = vpop.f32.mrb[0].mxu0
        %v990 = vadd.f32 0.0, %v989
        %v991 = vpop.f32.mrb[0].mxu0
        %992 = vmatprep.mubr.f32.mxu0 0.0
        %993 = vmatmul.mubr.f32.gmra.mrb[0].mxu0 %v831
        %v994 = vpop.f32.mrb[0].mxu0
        %v995 = vadd.f32 0.0, %v994
        %v996 = vpop.f32.mrb[0].mxu0
        %997 = vmatprep.mubr.f32.mxu0 0.0
        %998 = vmatmul.mubr.f32.gmra.mrb[0].mxu0 %v834
        %v999 = vpop.f32.mrb[0].mxu0
        %v1000 = vadd.f32 0.0, %v999
        %v1001 = vpop.f32.mrb[0].mxu0
        %1002 = vmatprep.mubr.f32.mxu0 0.0
        %1003 = vmatmul.mubr.f32.gmra.mrb[0].mxu0 %v837
        %v1004 = vpop.f32.mrb[0].mxu0
        %v1005 = vadd.f32 0.0, %v1004
        %v1006 = vpop.f32.mrb[0].mxu0
        %1007 = vmatprep.mubr.f32.mxu0 0.0
        %1008 = vmatmul.mubr.f32.gmra.mrb[0].mxu0 %v840
        %v1009 = vpop.f32.mrb[0].mxu0
        %v1010 = vadd.f32 0.0, %v1009
        %v1011 = vpop.f32.mrb[0].mxu0
        %1012 = vmatprep.mubr.f32.mxu0 0.0
        %1013 = vmatmul.mubr.f32.gmra.mrb[0].mxu0 %v843
        %v1014 = vpop.f32.mrb[0].mxu0
        %v1015 = vadd.f32 0.0, %v1014
        %v1016 = vpop.f32.mrb[0].mxu0
        %1017 = vmatprep.mubr.f32.mxu0 0.0
        %1018 = vmatmul.mubr.f32.gmra.mrb[0].mxu0 %v846
        %v1019 = vpop.f32.mrb[0].mxu0
        %v1020 = vadd.f32 0.0, %v1019
        %v1021 = vpop.f32.mrb[0].mxu0
        %1022 = vmatprep.mubr.f32.mxu0 0.0
        %1023 = vmatmul.mubr.f32.gmra.mrb[0].mxu0 %v849
        %v1024 = vpop.f32.mrb[0].mxu0
        %v1025 = vadd.f32 0.0, %v1024
        %v1026 = vpop.f32.mrb[0].mxu0
        %1027 = vmatprep.mubr.f32.mxu0 0.0
        %1028 = vmatmul.mubr.f32.gmra.mrb[0].mxu0 %v852
        %v1029 = vpop.f32.mrb[0].mxu0
        %v1030 = vadd.f32 0.0, %v1029
        %v1031 = vpop.f32.mrb[0].mxu0
        %1032 = vmatprep.mubr.f32.mxu0 0.0
        %1033 = vmatmul.mubr.f32.gmra.mrb[0].mxu0 %v855
        %v1034 = vpop.f32.mrb[0].mxu0
        %v1035 = vadd.f32 0.0, %v1034
        %v1036 = vpop.f32.mrb[0].mxu0
        %1037 = vmatprep.mubr.f32.mxu0 0.0
        %1038 = vmatmul.mubr.f32.gmra.mrb[0].mxu0 %v858
        %v1039 = vpop.f32.mrb[0].mxu0
        %v1040 = vadd.f32 0.0, %v1039
        %v1041 = vpop.f32.mrb[0].mxu0
        %1042 = vmatprep.mubr.f32.mxu0 0.0
        %1043 = vmatmul.mubr.f32.gmra.mrb[0].mxu0 %v861
        %v1044 = vpop.f32.mrb[0].mxu0
        %v1045 = vadd.f32 0.0, %v1044
        %v1046 = vpop.f32.mrb[0].mxu0
        %1047 = vmatprep.mubr.f32.mxu0 0.0
        %1048 = vmatmul.mubr.f32.gmra.mrb[0].mxu0 %v864
        %v1049 = vpop.f32.mrb[0].mxu0
        %v1050 = vadd.f32 0.0, %v1049
        %v1051 = vpop.f32.mrb[0].mxu0
        %1052 = vmatprep.mubr.f32.mxu0 0.0
        %1053 = vmatmul.mubr.f32.gmra.mrb[0].mxu0 %v867
        %v1054 = vpop.f32.mrb[0].mxu0
        %v1055 = vadd.f32 0.0, %v1054
        %v1056 = vpop.f32.mrb[0].mxu0
        %1057 = vmatprep.mubr.f32.mxu0 0.0
        %1058 = vmatmul.mubr.f32.gmra.mrb[0].mxu0 %v870
        %v1059 = vpop.f32.mrb[0].mxu0
        %v1060 = vadd.f32 0.0, %v1059
        %v1061 = vpop.f32.mrb[0].mxu0
        %1062 = vmatprep.mubr.f32.mxu0 0.0
        %1063 = vmatmul.mubr.f32.gmra.mrb[0].mxu0 %v873
        %v1064 = vpop.f32.mrb[0].mxu0
        %v1065 = vadd.f32 0.0, %v1064
        %v1066 = vpop.f32.mrb[0].mxu0
        %1067 = vmatprep.mubr.f32.mxu0 0.0
        %1068 = vmatmul.mubr.f32.gmra.mrb[0].mxu0 %v876
        %v1069 = vpop.f32.mrb[0].mxu0
        %v1070 = vadd.f32 0.0, %v1069
        %v1071 = vpop.f32.mrb[0].mxu0
        %1072 = vmatprep.mubr.f32.mxu0 0.0
        %1073 = vmatmul.mubr.f32.gmra.mrb[0].mxu0 %v879
        %v1074 = vpop.f32.mrb[0].mxu0
        %v1075 = vadd.f32 0.0, %v1074
        %v1076 = vpop.f32.mrb[0].mxu0
        %1077 = vmatprep.mubr.f32.mxu0 0.0
        %1078 = vmatmul.mubr.f32.gmra.mrb[0].mxu0 %v882
        %v1079 = vpop.f32.mrb[0].mxu0
        %v1080 = vadd.f32 0.0, %v1079
        %v1081 = vpop.f32.mrb[0].mxu0
        %1082 = vmatprep.mubr.f32.mxu0 0.0
        %1083 = vmatmul.mubr.f32.gmra.mrb[0].mxu0 %v885
        %v1084 = vpop.f32.mrb[0].mxu0
        %v1085 = vadd.f32 0.0, %v1084
        %v1086 = vpop.f32.mrb[0].mxu0
        %1087 = vmatprep.mubr.f32.mxu0 0.0
        %1088 = vmatmul.mubr.f32.gmra.mrb[0].mxu0 %v888
        %v1089 = vpop.f32.mrb[0].mxu0
        %v1090 = vadd.f32 0.0, %v1089
        %v1091 = vpop.f32.mrb[0].mxu0
        %1092 = vmatprep.mubr.f32.mxu0 0.0
        %1093 = vmatmul.mubr.f32.gmra.mrb[0].mxu0 %v891
        %v1094 = vpop.f32.mrb[0].mxu0
        %v1095 = vadd.f32 0.0, %v1094
        %v1096 = vpop.f32.mrb[0].mxu0
        %1097 = vmatprep.mubr.f32.mxu0 0.0
        %1098 = vmatmul.mubr.f32.gmra.mrb[0].mxu0 %v894
        %v1099 = vpop.f32.mrb[0].mxu0
        %v1100 = vadd.f32 0.0, %v1099
        %v1101 = vpop.f32.mrb[0].mxu0
        %1102 = vmatprep.mubr.f32.mxu0 0.0
        %1103 = vmatmul.mubr.f32.gmra.mrb[0].mxu0 %v897
        %v1104 = vpop.f32.mrb[0].mxu0
        %v1105 = vadd.f32 0.0, %v1104
        %v1106 = vpop.f32.mrb[0].mxu0
        %1107 = vmatprep.mubr.f32.mxu0 0.0
        %1108 = vmatmul.mubr.f32.gmra.mrb[0].mxu0 %v900
        %v1109 = vpop.f32.mrb[0].mxu0
        %v1110 = vadd.f32 0.0, %v1109
        %v1111 = vpop.f32.mrb[0].mxu0
        %1112 = vmatprep.mubr.f32.mxu0 0.0
        %1113 = vmatmul.mubr.f32.gmra.mrb[0].mxu0 %v903
        %v1114 = vpop.f32.mrb[0].mxu0
        %v1115 = vadd.f32 0.0, %v1114
        %v1116 = vpop.f32.mrb[0].mxu0
        %1117 = vmatprep.mubr.f32.mxu0 0.0
        %1118 = vmatmul.mubr.f32.gmra.mrb[0].mxu0 %v906
        %v1119 = vpop.f32.mrb[0].mxu0
        %v1120 = vadd.f32 0.0, %v1119
        %v1121 = vpop.f32.mrb[0].mxu0
        %1122 = vmatprep.mubr.f32.mxu0 0.0
        %1123 = vmatmul.mubr.f32.gmra.mrb[0].mxu0 %v909
        %v1124 = vpop.f32.mrb[0].mxu0
        %v1125 = vadd.f32 0.0, %v1124
        %v1126 = vpop.f32.mrb[0].mxu0
        %1127 = vmatprep.mubr.f32.mxu0 0.0
        %1128 = vmatmul.mubr.f32.gmra.mrb[0].mxu0 %v912
        %v1129 = vpop.f32.mrb[0].mxu0
        %v1130 = vadd.f32 0.0, %v1129
        %v1131 = vpop.f32.mrb[0].mxu0
        %1132 = vmatprep.mubr.f32.mxu0 0.0
        %1133 = vmatmul.mubr.f32.gmra.mrb[0].mxu0 %v915
        %v1134 = vpop.f32.mrb[0].mxu0
        %v1135 = vadd.f32 0.0, %v1134
        %v1136 = vpop.f32.mrb[0].mxu0
        %1137 = vmatprep.mubr.f32.mxu0 0.0
        %1138 = vmatmul.mubr.f32.gmra.mrb[0].mxu0 %v918
        %v1139 = vpop.f32.mrb[0].mxu0
        %v1140 = vadd.f32 0.0, %v1139
        %v1141 = vpop.f32.mrb[0].mxu0
        %1142 = vmatprep.mubr.f32.mxu0 0.0
        %1143 = vmatmul.mubr.f32.gmra.mrb[0].mxu0 %v921
        %v1144 = vpop.f32.mrb[0].mxu0
        %v1145 = vadd.f32 0.0, %v1144
        %v1146 = vpop.f32.mrb[0].mxu0
        %1147 = vdwg.mxu0
        %v1149 = vsel %vm274, %v760, 0
        %v1152 = vsel %vm274, %v761, 0
        %v1155 = vsel %vm274, %v762, 0
        %v1158 = vsel %vm274, %v763, 0
        %v1161 = vsel %vm274, %v764, 0
        %v1164 = vsel %vm274, %v765, 0
        %v1167 = vsel %vm274, %v766, 0
        %v1170 = vsel %vm274, %v767, 0
        %v1173 = vsel %vm274, %v768, 0
        %v1176 = vsel %vm274, %v769, 0
        %v1179 = vsel %vm274, %v770, 0
        %v1182 = vsel %vm274, %v771, 0
        %v1185 = vsel %vm274, %v772, 0
        %v1188 = vsel %vm274, %v773, 0
        %v1191 = vsel %vm274, %v774, 0
        %v1194 = vsel %vm274, %v775, 0
        %v1197 = vsel %vm274, %v776, 0
        %v1200 = vsel %vm274, %v777, 0
        %v1203 = vsel %vm274, %v778, 0
        %v1206 = vsel %vm274, %v779, 0
        %v1209 = vsel %vm274, %v780, 0
        %v1212 = vsel %vm274, %v781, 0
        %v1215 = vsel %vm274, %v782, 0
        %v1218 = vsel %vm274, %v783, 0
        %v1221 = vsel %vm274, %v784, 0
        %v1224 = vsel %vm274, %v785, 0
        %v1227 = vsel %vm274, %v786, 0
        %v1230 = vsel %vm274, %v787, 0
        %v1233 = vsel %vm274, %v788, 0
        %v1236 = vsel %vm274, %v789, 0
        %v1239 = vsel %vm274, %v790, 0
        %v1242 = vsel %vm274, %v791, 0
        %1244 = vmatprep.subr.mxu0 0.0
        %1245 = vmatpush1.msra.mxu0 %v792
        %1246 = vmatprep.subr.mxu0 0.0
        %1247 = vmatpush1.msra.mxu0 0.0
        %1248 = vmatprep.subr.mxu0 0.0
        %1249 = vmatpush1.msra.mxu0 0.0
        %1250 = vmatprep.subr.mxu0 0.0
        %1251 = vmatpush1.msra.mxu0 0.0
        %1252 = vmatprep.subr.mxu0 0.0
        %1253 = vmatpush1.msra.mxu0 0.0
        %1254 = vmatprep.subr.mxu0 0.0
        %1255 = vmatpush1.msra.mxu0 0.0
        %1256 = vmatprep.subr.mxu0 0.0
        %1257 = vmatpush1.msra.mxu0 0.0
        %1258 = vmatprep.subr.mxu0 0.0
        %1259 = vmatpush1.msra.mxu0 0.0
        %1260 = vmatprep.subr.mxu0 0.0
        %1261 = vmatpush1.msra.mxu0 0.0
        %1262 = vmatprep.subr.mxu0 0.0
        %1263 = vmatpush1.msra.mxu0 0.0
        %1264 = vmatprep.subr.mxu0 0.0
        %1265 = vmatpush1.msra.mxu0 0.0
        %1266 = vmatprep.subr.mxu0 0.0
        %1267 = vmatpush1.msra.mxu0 0.0
        %1268 = vmatprep.subr.mxu0 0.0
        %1269 = vmatpush1.msra.mxu0 0.0
        %1270 = vmatprep.subr.mxu0 0.0
        %1271 = vmatpush1.msra.mxu0 0.0
        %1272 = vmatprep.subr.mxu0 0.0
        %1273 = vmatpush1.msra.mxu0 0.0
        %1274 = vmatprep.subr.mxu0 0.0
        %1275 = vmatpush1.msra.mxu0 0.0
        %1276 = vmatprep.subr.mxu0 0.0
        %1277 = vmatpush1.msra.mxu0 0.0
        %1278 = vmatprep.subr.mxu0 0.0
        %1279 = vmatpush1.msra.mxu0 0.0
        %1280 = vmatprep.subr.mxu0 0.0
        %1281 = vmatpush1.msra.mxu0 0.0
        %1282 = vmatprep.subr.mxu0 0.0
        %1283 = vmatpush1.msra.mxu0 0.0
        %1284 = vmatprep.subr.mxu0 0.0
        %1285 = vmatpush1.msra.mxu0 0.0
        %1286 = vmatprep.subr.mxu0 0.0
        %1287 = vmatpush1.msra.mxu0 0.0
        %1288 = vmatprep.subr.mxu0 0.0
        %1289 = vmatpush1.msra.mxu0 0.0
        %1290 = vmatprep.subr.mxu0 0.0
        %1291 = vmatpush1.msra.mxu0 0.0
        %1292 = vmatprep.subr.mxu0 0.0
        %1293 = vmatpush1.msra.mxu0 0.0
        %1294 = vmatprep.subr.mxu0 0.0
        %1295 = vmatpush1.msra.mxu0 0.0
        %1296 = vmatprep.subr.mxu0 0.0
        %1297 = vmatpush1.msra.mxu0 0.0
        %1298 = vmatprep.subr.mxu0 0.0
        %1299 = vmatpush1.msra.mxu0 0.0
        %1300 = vmatprep.subr.mxu0 0.0
        %1301 = vmatpush1.msra.mxu0 0.0
        %1302 = vmatprep.subr.mxu0 0.0
        %1303 = vmatpush1.msra.mxu0 0.0
        %1304 = vmatprep.subr.mxu0 0.0
        %1305 = vmatpush1.msra.mxu0 0.0
        %1306 = vmatprep.subr.mxu0 0.0
        %1307 = vmatpush1.msra.mxu0 0.0
        %1308 = vmatprep.mubr.f32.mxu0 0.0
        %1309 = vmatmul.mubr.f32.gmra.mrb[0].mxu0 %v1149
        %v1310 = vpop.f32.mrb[0].mxu0
        %v1311 = vadd.f32 %v990, %v1310
        %v1312 = vpop.f32.mrb[0].mxu0
        %1313 = vmatprep.mubr.f32.mxu0 0.0
        %1314 = vmatmul.mubr.f32.gmra.mrb[0].mxu0 %v1152
        %v1315 = vpop.f32.mrb[0].mxu0
        %v1316 = vadd.f32 %v995, %v1315
        %v1317 = vpop.f32.mrb[0].mxu0
        %1318 = vmatprep.mubr.f32.mxu0 0.0
        %1319 = vmatmul.mubr.f32.gmra.mrb[0].mxu0 %v1155
        %v1320 = vpop.f32.mrb[0].mxu0
        %v1321 = vadd.f32 %v1000, %v1320
        %v1322 = vpop.f32.mrb[0].mxu0
        %1323 = vmatprep.mubr.f32.mxu0 0.0
        %1324 = vmatmul.mubr.f32.gmra.mrb[0].mxu0 %v1158
        %v1325 = vpop.f32.mrb[0].mxu0
        %v1326 = vadd.f32 %v1005, %v1325
        %v1327 = vpop.f32.mrb[0].mxu0
        %1328 = vmatprep.mubr.f32.mxu0 0.0
        %1329 = vmatmul.mubr.f32.gmra.mrb[0].mxu0 %v1161
        %v1330 = vpop.f32.mrb[0].mxu0
        %v1331 = vadd.f32 %v1010, %v1330
        %v1332 = vpop.f32.mrb[0].mxu0
        %1333 = vmatprep.mubr.f32.mxu0 0.0
        %1334 = vmatmul.mubr.f32.gmra.mrb[0].mxu0 %v1164
        %v1335 = vpop.f32.mrb[0].mxu0
        %v1336 = vadd.f32 %v1015, %v1335
        %v1337 = vpop.f32.mrb[0].mxu0
        %1338 = vmatprep.mubr.f32.mxu0 0.0
        %1339 = vmatmul.mubr.f32.gmra.mrb[0].mxu0 %v1167
        %v1340 = vpop.f32.mrb[0].mxu0
        %v1341 = vadd.f32 %v1020, %v1340
        %v1342 = vpop.f32.mrb[0].mxu0
        %1343 = vmatprep.mubr.f32.mxu0 0.0
        %1344 = vmatmul.mubr.f32.gmra.mrb[0].mxu0 %v1170
        %v1345 = vpop.f32.mrb[0].mxu0
        %v1346 = vadd.f32 %v1025, %v1345
        %v1347 = vpop.f32.mrb[0].mxu0
        %1348 = vmatprep.mubr.f32.mxu0 0.0
        %1349 = vmatmul.mubr.f32.gmra.mrb[0].mxu0 %v1173
        %v1350 = vpop.f32.mrb[0].mxu0
        %v1351 = vadd.f32 %v1030, %v1350
        %v1352 = vpop.f32.mrb[0].mxu0
        %1353 = vmatprep.mubr.f32.mxu0 0.0
        %1354 = vmatmul.mubr.f32.gmra.mrb[0].mxu0 %v1176
        %v1355 = vpop.f32.mrb[0].mxu0
        %v1356 = vadd.f32 %v1035, %v1355
        %v1357 = vpop.f32.mrb[0].mxu0
        %1358 = vmatprep.mubr.f32.mxu0 0.0
        %1359 = vmatmul.mubr.f32.gmra.mrb[0].mxu0 %v1179
        %v1360 = vpop.f32.mrb[0].mxu0
        %v1361 = vadd.f32 %v1040, %v1360
        %v1362 = vpop.f32.mrb[0].mxu0
        %1363 = vmatprep.mubr.f32.mxu0 0.0
        %1364 = vmatmul.mubr.f32.gmra.mrb[0].mxu0 %v1182
        %v1365 = vpop.f32.mrb[0].mxu0
        %v1366 = vadd.f32 %v1045, %v1365
        %v1367 = vpop.f32.mrb[0].mxu0
        %1368 = vmatprep.mubr.f32.mxu0 0.0
        %1369 = vmatmul.mubr.f32.gmra.mrb[0].mxu0 %v1185
        %v1370 = vpop.f32.mrb[0].mxu0
        %v1371 = vadd.f32 %v1050, %v1370
        %v1372 = vpop.f32.mrb[0].mxu0
        %1373 = vmatprep.mubr.f32.mxu0 0.0
        %1374 = vmatmul.mubr.f32.gmra.mrb[0].mxu0 %v1188
        %v1375 = vpop.f32.mrb[0].mxu0
        %v1376 = vadd.f32 %v1055, %v1375
        %v1377 = vpop.f32.mrb[0].mxu0
        %1378 = vmatprep.mubr.f32.mxu0 0.0
        %1379 = vmatmul.mubr.f32.gmra.mrb[0].mxu0 %v1191
        %v1380 = vpop.f32.mrb[0].mxu0
        %v1381 = vadd.f32 %v1060, %v1380
        %v1382 = vpop.f32.mrb[0].mxu0
        %1383 = vmatprep.mubr.f32.mxu0 0.0
        %1384 = vmatmul.mubr.f32.gmra.mrb[0].mxu0 %v1194
        %v1385 = vpop.f32.mrb[0].mxu0
        %v1386 = vadd.f32 %v1065, %v1385
        %v1387 = vpop.f32.mrb[0].mxu0
        %1388 = vmatprep.mubr.f32.mxu0 0.0
        %1389 = vmatmul.mubr.f32.gmra.mrb[0].mxu0 %v1197
        %v1390 = vpop.f32.mrb[0].mxu0
        %v1391 = vadd.f32 %v1070, %v1390
        %v1392 = vpop.f32.mrb[0].mxu0
        %1393 = vmatprep.mubr.f32.mxu0 0.0
        %1394 = vmatmul.mubr.f32.gmra.mrb[0].mxu0 %v1200
        %v1395 = vpop.f32.mrb[0].mxu0
        %v1396 = vadd.f32 %v1075, %v1395
        %v1397 = vpop.f32.mrb[0].mxu0
        %1398 = vmatprep.mubr.f32.mxu0 0.0
        %1399 = vmatmul.mubr.f32.gmra.mrb[0].mxu0 %v1203
        %v1400 = vpop.f32.mrb[0].mxu0
        %v1401 = vadd.f32 %v1080, %v1400
        %v1402 = vpop.f32.mrb[0].mxu0
        %1403 = vmatprep.mubr.f32.mxu0 0.0
        %1404 = vmatmul.mubr.f32.gmra.mrb[0].mxu0 %v1206
        %v1405 = vpop.f32.mrb[0].mxu0
        %v1406 = vadd.f32 %v1085, %v1405
        %v1407 = vpop.f32.mrb[0].mxu0
        %1408 = vmatprep.mubr.f32.mxu0 0.0
        %1409 = vmatmul.mubr.f32.gmra.mrb[0].mxu0 %v1209
        %v1410 = vpop.f32.mrb[0].mxu0
        %v1411 = vadd.f32 %v1090, %v1410
        %v1412 = vpop.f32.mrb[0].mxu0
        %1413 = vmatprep.mubr.f32.mxu0 0.0
        %1414 = vmatmul.mubr.f32.gmra.mrb[0].mxu0 %v1212
        %v1415 = vpop.f32.mrb[0].mxu0
        %v1416 = vadd.f32 %v1095, %v1415
        %v1417 = vpop.f32.mrb[0].mxu0
        %1418 = vmatprep.mubr.f32.mxu0 0.0
        %1419 = vmatmul.mubr.f32.gmra.mrb[0].mxu0 %v1215
        %v1420 = vpop.f32.mrb[0].mxu0
        %v1421 = vadd.f32 %v1100, %v1420
        %v1422 = vpop.f32.mrb[0].mxu0
        %1423 = vmatprep.mubr.f32.mxu0 0.0
        %1424 = vmatmul.mubr.f32.gmra.mrb[0].mxu0 %v1218
        %v1425 = vpop.f32.mrb[0].mxu0
        %v1426 = vadd.f32 %v1105, %v1425
        %v1427 = vpop.f32.mrb[0].mxu0
        %1428 = vmatprep.mubr.f32.mxu0 0.0
        %1429 = vmatmul.mubr.f32.gmra.mrb[0].mxu0 %v1221
        %v1430 = vpop.f32.mrb[0].mxu0
        %v1431 = vadd.f32 %v1110, %v1430
        %v1432 = vpop.f32.mrb[0].mxu0
        %1433 = vmatprep.mubr.f32.mxu0 0.0
        %1434 = vmatmul.mubr.f32.gmra.mrb[0].mxu0 %v1224
        %v1435 = vpop.f32.mrb[0].mxu0
        %v1436 = vadd.f32 %v1115, %v1435
        %v1437 = vpop.f32.mrb[0].mxu0
        %1438 = vmatprep.mubr.f32.mxu0 0.0
        %1439 = vmatmul.mubr.f32.gmra.mrb[0].mxu0 %v1227
        %v1440 = vpop.f32.mrb[0].mxu0
        %v1441 = vadd.f32 %v1120, %v1440
        %v1442 = vpop.f32.mrb[0].mxu0
        %1443 = vmatprep.mubr.f32.mxu0 0.0
        %1444 = vmatmul.mubr.f32.gmra.mrb[0].mxu0 %v1230
        %v1445 = vpop.f32.mrb[0].mxu0
        %v1446 = vadd.f32 %v1125, %v1445
        %v1447 = vpop.f32.mrb[0].mxu0
        %1448 = vmatprep.mubr.f32.mxu0 0.0
        %1449 = vmatmul.mubr.f32.gmra.mrb[0].mxu0 %v1233
        %v1450 = vpop.f32.mrb[0].mxu0
        %v1451 = vadd.f32 %v1130, %v1450
        %v1452 = vpop.f32.mrb[0].mxu0
        %1453 = vmatprep.mubr.f32.mxu0 0.0
        %1454 = vmatmul.mubr.f32.gmra.mrb[0].mxu0 %v1236
        %v1455 = vpop.f32.mrb[0].mxu0
        %v1456 = vadd.f32 %v1135, %v1455
        %v1457 = vpop.f32.mrb[0].mxu0
        %1458 = vmatprep.mubr.f32.mxu0 0.0
        %1459 = vmatmul.mubr.f32.gmra.mrb[0].mxu0 %v1239
        %v1460 = vpop.f32.mrb[0].mxu0
        %v1461 = vadd.f32 %v1140, %v1460
        %v1462 = vpop.f32.mrb[0].mxu0
        %1463 = vmatprep.mubr.f32.mxu0 0.0
        %1464 = vmatmul.mubr.f32.gmra.mrb[0].mxu0 %v1242
        %v1465 = vpop.f32.mrb[0].mxu0
        %v1466 = vadd.f32 %v1145, %v1465
        %v1467 = vpop.f32.mrb[0].mxu0
        %1468 = vdwg.mxu0
        %v1469 = vld [vmem:[#allocation2 + $0x2] sm:$0xff]
        %v1470 = vld [vmem:[#allocation2 + $0xa] sm:$0xff]
        %v1471 = vld [vmem:[#allocation2 + $0x1a] sm:$0xff]
        %v1472 = vld [vmem:[#allocation2 + $0x22] sm:$0xff]
        %v1473 = vld [vmem:[#allocation2 + $0x32] sm:$0xff]
        %v1474 = vld [vmem:[#allocation2 + $0x3a] sm:$0xff]
        %v1475 = vld [vmem:[#allocation2 + $0x4a] sm:$0xff]
        %v1476 = vld [vmem:[#allocation2 + $0x52] sm:$0xff]
        %v1477 = vld [vmem:[#allocation2 + $0x62] sm:$0xff]
        %v1478 = vld [vmem:[#allocation2 + $0x6a] sm:$0xff]
        %v1479 = vld [vmem:[#allocation2 + $0x7a] sm:$0xff]
        %v1480 = vld [vmem:[#allocation2 + $0x82] sm:$0xff]
        %v1481 = vld [vmem:[#allocation2 + $0x92] sm:$0xff]
        %v1482 = vld [vmem:[#allocation2 + $0x9a] sm:$0xff]
        %v1483 = vld [vmem:[#allocation2 + $0xaa] sm:$0xff]
        %v1484 = vld [vmem:[#allocation2 + $0xb2] sm:$0xff]
        %v1485 = vld [vmem:[#allocation2 + $0xc2] sm:$0xff]
        %v1486 = vld [vmem:[#allocation2 + $0xca] sm:$0xff]
        %v1487 = vld [vmem:[#allocation2 + $0xda] sm:$0xff]
        %v1488 = vld [vmem:[#allocation2 + $0xe2] sm:$0xff]
        %v1489 = vld [vmem:[#allocation2 + $0xf2] sm:$0xff]
        %v1490 = vld [vmem:[#allocation2 + $0xfa] sm:$0xff]
        %v1491 = vld [vmem:[#allocation2 + $0x10a] sm:$0xff]
        %v1492 = vld [vmem:[#allocation2 + $0x112] sm:$0xff]
        %v1493 = vld [vmem:[#allocation2 + $0x122] sm:$0xff]
        %v1494 = vld [vmem:[#allocation2 + $0x12a] sm:$0xff]
        %v1495 = vld [vmem:[#allocation2 + $0x13a] sm:$0xff]
        %v1496 = vld [vmem:[#allocation2 + $0x142] sm:$0xff]
        %v1497 = vld [vmem:[#allocation2 + $0x152] sm:$0xff]
        %v1498 = vld [vmem:[#allocation2 + $0x15a] sm:$0xff]
        %v1499 = vld [vmem:[#allocation2 + $0x16a] sm:$0xff]
        %v1500 = vld [vmem:[#allocation2 + $0x172] sm:$0xff]
        %s1501 = scalar_lea.vmem [#allocation7], 16
        %v1502 = vld [vmem:[%s1501] sm:$0xff]
        %v1504 = vsel %vm274, %v1469, 0
        %v1507 = vsel %vm274, %v1470, 0
        %v1510 = vsel %vm274, %v1471, 0
        %v1513 = vsel %vm274, %v1472, 0
        %v1516 = vsel %vm274, %v1473, 0
        %v1519 = vsel %vm274, %v1474, 0
        %v1522 = vsel %vm274, %v1475, 0
        %v1525 = vsel %vm274, %v1476, 0
        %v1528 = vsel %vm274, %v1477, 0
        %v1531 = vsel %vm274, %v1478, 0
        %v1534 = vsel %vm274, %v1479, 0
        %v1537 = vsel %vm274, %v1480, 0
        %v1540 = vsel %vm274, %v1481, 0
        %v1543 = vsel %vm274, %v1482, 0
        %v1546 = vsel %vm274, %v1483, 0
        %v1549 = vsel %vm274, %v1484, 0
        %v1552 = vsel %vm274, %v1485, 0
        %v1555 = vsel %vm274, %v1486, 0
        %v1558 = vsel %vm274, %v1487, 0
        %v1561 = vsel %vm274, %v1488, 0
        %v1564 = vsel %vm274, %v1489, 0
        %v1567 = vsel %vm274, %v1490, 0
        %v1570 = vsel %vm274, %v1491, 0
        %v1573 = vsel %vm274, %v1492, 0
        %v1576 = vsel %vm274, %v1493, 0
        %v1579 = vsel %vm274, %v1494, 0
        %v1582 = vsel %vm274, %v1495, 0
        %v1585 = vsel %vm274, %v1496, 0
        %v1588 = vsel %vm274, %v1497, 0
        %v1591 = vsel %vm274, %v1498, 0
        %v1594 = vsel %vm274, %v1499, 0
        %v1597 = vsel %vm274, %v1500, 0
        %1599 = vmatprep.subr.mxu0 0.0
        %1600 = vmatpush1.msra.mxu0 %v1502
        %1601 = vmatprep.subr.mxu0 0.0
        %1602 = vmatpush1.msra.mxu0 0.0
        %1603 = vmatprep.subr.mxu0 0.0
        %1604 = vmatpush1.msra.mxu0 0.0
        %1605 = vmatprep.subr.mxu0 0.0
        %1606 = vmatpush1.msra.mxu0 0.0
        %1607 = vmatprep.subr.mxu0 0.0
        %1608 = vmatpush1.msra.mxu0 0.0
        %1609 = vmatprep.subr.mxu0 0.0
        %1610 = vmatpush1.msra.mxu0 0.0
        %1611 = vmatprep.subr.mxu0 0.0
        %1612 = vmatpush1.msra.mxu0 0.0
        %1613 = vmatprep.subr.mxu0 0.0
        %1614 = vmatpush1.msra.mxu0 0.0
        %1615 = vmatprep.subr.mxu0 0.0
        %1616 = vmatpush1.msra.mxu0 0.0
        %1617 = vmatprep.subr.mxu0 0.0
        %1618 = vmatpush1.msra.mxu0 0.0
        %1619 = vmatprep.subr.mxu0 0.0
        %1620 = vmatpush1.msra.mxu0 0.0
        %1621 = vmatprep.subr.mxu0 0.0
        %1622 = vmatpush1.msra.mxu0 0.0
        %1623 = vmatprep.subr.mxu0 0.0
        %1624 = vmatpush1.msra.mxu0 0.0
        %1625 = vmatprep.subr.mxu0 0.0
        %1626 = vmatpush1.msra.mxu0 0.0
        %1627 = vmatprep.subr.mxu0 0.0
        %1628 = vmatpush1.msra.mxu0 0.0
        %1629 = vmatprep.subr.mxu0 0.0
        %1630 = vmatpush1.msra.mxu0 0.0
        %1631 = vmatprep.subr.mxu0 0.0
        %1632 = vmatpush1.msra.mxu0 0.0
        %1633 = vmatprep.subr.mxu0 0.0
        %1634 = vmatpush1.msra.mxu0 0.0
        %1635 = vmatprep.subr.mxu0 0.0
        %1636 = vmatpush1.msra.mxu0 0.0
        %1637 = vmatprep.subr.mxu0 0.0
        %1638 = vmatpush1.msra.mxu0 0.0
        %1639 = vmatprep.subr.mxu0 0.0
        %1640 = vmatpush1.msra.mxu0 0.0
        %1641 = vmatprep.subr.mxu0 0.0
        %1642 = vmatpush1.msra.mxu0 0.0
        %1643 = vmatprep.subr.mxu0 0.0
        %1644 = vmatpush1.msra.mxu0 0.0
        %1645 = vmatprep.subr.mxu0 0.0
        %1646 = vmatpush1.msra.mxu0 0.0
        %1647 = vmatprep.subr.mxu0 0.0
        %1648 = vmatpush1.msra.mxu0 0.0
        %1649 = vmatprep.subr.mxu0 0.0
        %1650 = vmatpush1.msra.mxu0 0.0
        %1651 = vmatprep.subr.mxu0 0.0
        %1652 = vmatpush1.msra.mxu0 0.0
        %1653 = vmatprep.subr.mxu0 0.0
        %1654 = vmatpush1.msra.mxu0 0.0
        %1655 = vmatprep.subr.mxu0 0.0
        %1656 = vmatpush1.msra.mxu0 0.0
        %1657 = vmatprep.subr.mxu0 0.0
        %1658 = vmatpush1.msra.mxu0 0.0
        %1659 = vmatprep.subr.mxu0 0.0
        %1660 = vmatpush1.msra.mxu0 0.0
        %1661 = vmatprep.subr.mxu0 0.0
        %1662 = vmatpush1.msra.mxu0 0.0
        %1663 = vmatprep.mubr.f32.mxu0 0.0
        %1664 = vmatmul.mubr.f32.gmra.mrb[0].mxu0 %v1504
        %v1665 = vpop.f32.mrb[0].mxu0
        %v1666 = vadd.f32 0.0, %v1665
        %v1667 = vpop.f32.mrb[0].mxu0
        %1668 = vmatprep.mubr.f32.mxu0 0.0
        %1669 = vmatmul.mubr.f32.gmra.mrb[0].mxu0 %v1507
        %v1670 = vpop.f32.mrb[0].mxu0
        %v1671 = vadd.f32 0.0, %v1670
        %v1672 = vpop.f32.mrb[0].mxu0
        %1673 = vmatprep.mubr.f32.mxu0 0.0
        %1674 = vmatmul.mubr.f32.gmra.mrb[0].mxu0 %v1510
        %v1675 = vpop.f32.mrb[0].mxu0
        %v1676 = vadd.f32 0.0, %v1675
        %v1677 = vpop.f32.mrb[0].mxu0
        %1678 = vmatprep.mubr.f32.mxu0 0.0
        %1679 = vmatmul.mubr.f32.gmra.mrb[0].mxu0 %v1513
        %v1680 = vpop.f32.mrb[0].mxu0
        %v1681 = vadd.f32 0.0, %v1680
        %v1682 = vpop.f32.mrb[0].mxu0
        %1683 = vmatprep.mubr.f32.mxu0 0.0
        %1684 = vmatmul.mubr.f32.gmra.mrb[0].mxu0 %v1516
        %v1685 = vpop.f32.mrb[0].mxu0
        %v1686 = vadd.f32 0.0, %v1685
        %v1687 = vpop.f32.mrb[0].mxu0
        %1688 = vmatprep.mubr.f32.mxu0 0.0
        %1689 = vmatmul.mubr.f32.gmra.mrb[0].mxu0 %v1519
        %v1690 = vpop.f32.mrb[0].mxu0
        %v1691 = vadd.f32 0.0, %v1690
        %v1692 = vpop.f32.mrb[0].mxu0
        %1693 = vmatprep.mubr.f32.mxu0 0.0
        %1694 = vmatmul.mubr.f32.gmra.mrb[0].mxu0 %v1522
        %v1695 = vpop.f32.mrb[0].mxu0
        %v1696 = vadd.f32 0.0, %v1695
        %v1697 = vpop.f32.mrb[0].mxu0
        %1698 = vmatprep.mubr.f32.mxu0 0.0
        %1699 = vmatmul.mubr.f32.gmra.mrb[0].mxu0 %v1525
        %v1700 = vpop.f32.mrb[0].mxu0
        %v1701 = vadd.f32 0.0, %v1700
        %v1702 = vpop.f32.mrb[0].mxu0
        %1703 = vmatprep.mubr.f32.mxu0 0.0
        %1704 = vmatmul.mubr.f32.gmra.mrb[0].mxu0 %v1528
        %v1705 = vpop.f32.mrb[0].mxu0
        %v1706 = vadd.f32 0.0, %v1705
        %v1707 = vpop.f32.mrb[0].mxu0
        %1708 = vmatprep.mubr.f32.mxu0 0.0
        %1709 = vmatmul.mubr.f32.gmra.mrb[0].mxu0 %v1531
        %v1710 = vpop.f32.mrb[0].mxu0
        %v1711 = vadd.f32 0.0, %v1710
        %v1712 = vpop.f32.mrb[0].mxu0
        %1713 = vmatprep.mubr.f32.mxu0 0.0
        %1714 = vmatmul.mubr.f32.gmra.mrb[0].mxu0 %v1534
        %v1715 = vpop.f32.mrb[0].mxu0
        %v1716 = vadd.f32 0.0, %v1715
        %v1717 = vpop.f32.mrb[0].mxu0
        %1718 = vmatprep.mubr.f32.mxu0 0.0
        %1719 = vmatmul.mubr.f32.gmra.mrb[0].mxu0 %v1537
        %v1720 = vpop.f32.mrb[0].mxu0
        %v1721 = vadd.f32 0.0, %v1720
        %v1722 = vpop.f32.mrb[0].mxu0
        %1723 = vmatprep.mubr.f32.mxu0 0.0
        %1724 = vmatmul.mubr.f32.gmra.mrb[0].mxu0 %v1540
        %v1725 = vpop.f32.mrb[0].mxu0
        %v1726 = vadd.f32 0.0, %v1725
        %v1727 = vpop.f32.mrb[0].mxu0
        %1728 = vmatprep.mubr.f32.mxu0 0.0
        %1729 = vmatmul.mubr.f32.gmra.mrb[0].mxu0 %v1543
        %v1730 = vpop.f32.mrb[0].mxu0
        %v1731 = vadd.f32 0.0, %v1730
        %v1732 = vpop.f32.mrb[0].mxu0
        %1733 = vmatprep.mubr.f32.mxu0 0.0
        %1734 = vmatmul.mubr.f32.gmra.mrb[0].mxu0 %v1546
        %v1735 = vpop.f32.mrb[0].mxu0
        %v1736 = vadd.f32 0.0, %v1735
        %v1737 = vpop.f32.mrb[0].mxu0
        %1738 = vmatprep.mubr.f32.mxu0 0.0
        %1739 = vmatmul.mubr.f32.gmra.mrb[0].mxu0 %v1549
        %v1740 = vpop.f32.mrb[0].mxu0
        %v1741 = vadd.f32 0.0, %v1740
        %v1742 = vpop.f32.mrb[0].mxu0
        %1743 = vmatprep.mubr.f32.mxu0 0.0
        %1744 = vmatmul.mubr.f32.gmra.mrb[0].mxu0 %v1552
        %v1745 = vpop.f32.mrb[0].mxu0
        %v1746 = vadd.f32 0.0, %v1745
        %v1747 = vpop.f32.mrb[0].mxu0
        %1748 = vmatprep.mubr.f32.mxu0 0.0
        %1749 = vmatmul.mubr.f32.gmra.mrb[0].mxu0 %v1555
        %v1750 = vpop.f32.mrb[0].mxu0
        %v1751 = vadd.f32 0.0, %v1750
        %v1752 = vpop.f32.mrb[0].mxu0
        %1753 = vmatprep.mubr.f32.mxu0 0.0
        %1754 = vmatmul.mubr.f32.gmra.mrb[0].mxu0 %v1558
        %v1755 = vpop.f32.mrb[0].mxu0
        %v1756 = vadd.f32 0.0, %v1755
        %v1757 = vpop.f32.mrb[0].mxu0
        %1758 = vmatprep.mubr.f32.mxu0 0.0
        %1759 = vmatmul.mubr.f32.gmra.mrb[0].mxu0 %v1561
        %v1760 = vpop.f32.mrb[0].mxu0
        %v1761 = vadd.f32 0.0, %v1760
        %v1762 = vpop.f32.mrb[0].mxu0
        %1763 = vmatprep.mubr.f32.mxu0 0.0
        %1764 = vmatmul.mubr.f32.gmra.mrb[0].mxu0 %v1564
        %v1765 = vpop.f32.mrb[0].mxu0
        %v1766 = vadd.f32 0.0, %v1765
        %v1767 = vpop.f32.mrb[0].mxu0
        %1768 = vmatprep.mubr.f32.mxu0 0.0
        %1769 = vmatmul.mubr.f32.gmra.mrb[0].mxu0 %v1567
        %v1770 = vpop.f32.mrb[0].mxu0
        %v1771 = vadd.f32 0.0, %v1770
        %v1772 = vpop.f32.mrb[0].mxu0
        %1773 = vmatprep.mubr.f32.mxu0 0.0
        %1774 = vmatmul.mubr.f32.gmra.mrb[0].mxu0 %v1570
        %v1775 = vpop.f32.mrb[0].mxu0
        %v1776 = vadd.f32 0.0, %v1775
        %v1777 = vpop.f32.mrb[0].mxu0
        %1778 = vmatprep.mubr.f32.mxu0 0.0
        %1779 = vmatmul.mubr.f32.gmra.mrb[0].mxu0 %v1573
        %v1780 = vpop.f32.mrb[0].mxu0
        %v1781 = vadd.f32 0.0, %v1780
        %v1782 = vpop.f32.mrb[0].mxu0
        %1783 = vmatprep.mubr.f32.mxu0 0.0
        %1784 = vmatmul.mubr.f32.gmra.mrb[0].mxu0 %v1576
        %v1785 = vpop.f32.mrb[0].mxu0
        %v1786 = vadd.f32 0.0, %v1785
        %v1787 = vpop.f32.mrb[0].mxu0
        %1788 = vmatprep.mubr.f32.mxu0 0.0
        %1789 = vmatmul.mubr.f32.gmra.mrb[0].mxu0 %v1579
        %v1790 = vpop.f32.mrb[0].mxu0
        %v1791 = vadd.f32 0.0, %v1790
        %v1792 = vpop.f32.mrb[0].mxu0
        %1793 = vmatprep.mubr.f32.mxu0 0.0
        %1794 = vmatmul.mubr.f32.gmra.mrb[0].mxu0 %v1582
        %v1795 = vpop.f32.mrb[0].mxu0
        %v1796 = vadd.f32 0.0, %v1795
        %v1797 = vpop.f32.mrb[0].mxu0
        %1798 = vmatprep.mubr.f32.mxu0 0.0
        %1799 = vmatmul.mubr.f32.gmra.mrb[0].mxu0 %v1585
        %v1800 = vpop.f32.mrb[0].mxu0
        %v1801 = vadd.f32 0.0, %v1800
        %v1802 = vpop.f32.mrb[0].mxu0
        %1803 = vmatprep.mubr.f32.mxu0 0.0
        %1804 = vmatmul.mubr.f32.gmra.mrb[0].mxu0 %v1588
        %v1805 = vpop.f32.mrb[0].mxu0
        %v1806 = vadd.f32 0.0, %v1805
        %v1807 = vpop.f32.mrb[0].mxu0
        %1808 = vmatprep.mubr.f32.mxu0 0.0
        %1809 = vmatmul.mubr.f32.gmra.mrb[0].mxu0 %v1591
        %v1810 = vpop.f32.mrb[0].mxu0
        %v1811 = vadd.f32 0.0, %v1810
        %v1812 = vpop.f32.mrb[0].mxu0
        %1813 = vmatprep.mubr.f32.mxu0 0.0
        %1814 = vmatmul.mubr.f32.gmra.mrb[0].mxu0 %v1594
        %v1815 = vpop.f32.mrb[0].mxu0
        %v1816 = vadd.f32 0.0, %v1815
        %v1817 = vpop.f32.mrb[0].mxu0
        %1818 = vmatprep.mubr.f32.mxu0 0.0
        %1819 = vmatmul.mubr.f32.gmra.mrb[0].mxu0 %v1597
        %v1820 = vpop.f32.mrb[0].mxu0
        %v1821 = vadd.f32 0.0, %v1820
        %v1822 = vpop.f32.mrb[0].mxu0
        %1823 = vdwg.mxu0
        %v1824 = vadd.f32 %v1311, %v1666
        %v1825 = vadd.f32 %v1316, %v1671
        %v1826 = vadd.f32 %v1321, %v1676
        %v1827 = vadd.f32 %v1326, %v1681
        %v1828 = vadd.f32 %v1331, %v1686
        %v1829 = vadd.f32 %v1336, %v1691
        %v1830 = vadd.f32 %v1341, %v1696
        %v1831 = vadd.f32 %v1346, %v1701
        %v1832 = vadd.f32 %v1351, %v1706
        %v1833 = vadd.f32 %v1356, %v1711
        %v1834 = vadd.f32 %v1361, %v1716
        %v1835 = vadd.f32 %v1366, %v1721
        %v1836 = vadd.f32 %v1371, %v1726
        %v1837 = vadd.f32 %v1376, %v1731
        %v1838 = vadd.f32 %v1381, %v1736
        %v1839 = vadd.f32 %v1386, %v1741
        %v1840 = vadd.f32 %v1391, %v1746
        %v1841 = vadd.f32 %v1396, %v1751
        %v1842 = vadd.f32 %v1401, %v1756
        %v1843 = vadd.f32 %v1406, %v1761
        %v1844 = vadd.f32 %v1411, %v1766
        %v1845 = vadd.f32 %v1416, %v1771
        %v1846 = vadd.f32 %v1421, %v1776
        %v1847 = vadd.f32 %v1426, %v1781
        %v1848 = vadd.f32 %v1431, %v1786
        %v1849 = vadd.f32 %v1436, %v1791
        %v1850 = vadd.f32 %v1441, %v1796
        %v1851 = vadd.f32 %v1446, %v1801
        %v1852 = vadd.f32 %v1451, %v1806
        %v1853 = vadd.f32 %v1456, %v1811
        %v1854 = vadd.f32 %v1461, %v1816
        %v1855 = vadd.f32 %v1466, %v1821
        %v1856 = vld [vmem:[%s727] sm:$0xff]
        %v1857 = vld [vmem:[%s727 + $0x8] sm:$0xff]
        %v1858 = vld [vmem:[%s727 + $0x18] sm:$0xff]
        %v1859 = vld [vmem:[%s727 + $0x20] sm:$0xff]
        %v1860 = vld [vmem:[%s727 + $0x30] sm:$0xff]
        %v1861 = vld [vmem:[%s727 + $0x38] sm:$0xff]
        %v1862 = vld [vmem:[%s727 + $0x48] sm:$0xff]
        %v1863 = vld [vmem:[%s727 + $0x50] sm:$0xff]
        %v1864 = vld [vmem:[%s727 + $0x60] sm:$0xff]
        %v1865 = vld [vmem:[%s727 + $0x68] sm:$0xff]
        %v1866 = vld [vmem:[%s727 + $0x78] sm:$0xff]
        %v1867 = vld [vmem:[%s727 + $0x80] sm:$0xff]
        %v1868 = vld [vmem:[%s727 + $0x90] sm:$0xff]
        %v1869 = vld [vmem:[%s727 + $0x98] sm:$0xff]
        %v1870 = vld [vmem:[%s727 + $0xa8] sm:$0xff]
        %v1871 = vld [vmem:[%s727 + $0xb0] sm:$0xff]
        %v1872 = vld [vmem:[%s727 + $0xc0] sm:$0xff]
        %v1873 = vld [vmem:[%s727 + $0xc8] sm:$0xff]
        %v1874 = vld [vmem:[%s727 + $0xd8] sm:$0xff]
        %v1875 = vld [vmem:[%s727 + $0xe0] sm:$0xff]
        %v1876 = vld [vmem:[%s727 + $0xf0] sm:$0xff]
        %v1877 = vld [vmem:[%s727 + $0xf8] sm:$0xff]
        %v1878 = vld [vmem:[%s727 + $0x108] sm:$0xff]
        %v1879 = vld [vmem:[%s727 + $0x110] sm:$0xff]
        %v1880 = vld [vmem:[%s727 + $0x120] sm:$0xff]
        %v1881 = vld [vmem:[%s727 + $0x128] sm:$0xff]
        %v1882 = vld [vmem:[%s727 + $0x138] sm:$0xff]
        %v1883 = vld [vmem:[%s727 + $0x140] sm:$0xff]
        %v1884 = vld [vmem:[%s727 + $0x150] sm:$0xff]
        %v1885 = vld [vmem:[%s727 + $0x158] sm:$0xff]
        %v1886 = vld [vmem:[%s727 + $0x168] sm:$0xff]
        %v1887 = vld [vmem:[%s727 + $0x170] sm:$0xff]
        %s1888 = scalar_lea.vmem [#allocation7], 24
        %v1889 = vld [vmem:[%s1888] sm:$0xff]
        %v1891 = vsel %vm274, %v1856, 0
        %v1894 = vsel %vm274, %v1857, 0
        %v1897 = vsel %vm274, %v1858, 0
        %v1900 = vsel %vm274, %v1859, 0
        %v1903 = vsel %vm274, %v1860, 0
        %v1906 = vsel %vm274, %v1861, 0
        %v1909 = vsel %vm274, %v1862, 0
        %v1912 = vsel %vm274, %v1863, 0
        %v1915 = vsel %vm274, %v1864, 0
        %v1918 = vsel %vm274, %v1865, 0
        %v1921 = vsel %vm274, %v1866, 0
        %v1924 = vsel %vm274, %v1867, 0
        %v1927 = vsel %vm274, %v1868, 0
        %v1930 = vsel %vm274, %v1869, 0
        %v1933 = vsel %vm274, %v1870, 0
        %v1936 = vsel %vm274, %v1871, 0
        %v1939 = vsel %vm274, %v1872, 0
        %v1942 = vsel %vm274, %v1873, 0
        %v1945 = vsel %vm274, %v1874, 0
        %v1948 = vsel %vm274, %v1875, 0
        %v1951 = vsel %vm274, %v1876, 0
        %v1954 = vsel %vm274, %v1877, 0
        %v1957 = vsel %vm274, %v1878, 0
        %v1960 = vsel %vm274, %v1879, 0
        %v1963 = vsel %vm274, %v1880, 0
        %v1966 = vsel %vm274, %v1881, 0
        %v1969 = vsel %vm274, %v1882, 0
        %v1972 = vsel %vm274, %v1883, 0
        %v1975 = vsel %vm274, %v1884, 0
        %v1978 = vsel %vm274, %v1885, 0
        %v1981 = vsel %vm274, %v1886, 0
        %v1984 = vsel %vm274, %v1887, 0
        %1986 = vmatprep.subr.mxu0 0.0
        %1987 = vmatpush1.msra.mxu0 %v1889
        %1988 = vmatprep.subr.mxu0 0.0
        %1989 = vmatpush1.msra.mxu0 0.0
        %1990 = vmatprep.subr.mxu0 0.0
        %1991 = vmatpush1.msra.mxu0 0.0
        %1992 = vmatprep.subr.mxu0 0.0
        %1993 = vmatpush1.msra.mxu0 0.0
        %1994 = vmatprep.subr.mxu0 0.0
        %1995 = vmatpush1.msra.mxu0 0.0
        %1996 = vmatprep.subr.mxu0 0.0
        %1997 = vmatpush1.msra.mxu0 0.0
        %1998 = vmatprep.subr.mxu0 0.0
        %1999 = vmatpush1.msra.mxu0 0.0
        %2000 = vmatprep.subr.mxu0 0.0
        %2001 = vmatpush1.msra.mxu0 0.0
        %2002 = vmatprep.subr.mxu0 0.0
        %2003 = vmatpush1.msra.mxu0 0.0
        %2004 = vmatprep.subr.mxu0 0.0
        %2005 = vmatpush1.msra.mxu0 0.0
        %2006 = vmatprep.subr.mxu0 0.0
        %2007 = vmatpush1.msra.mxu0 0.0
        %2008 = vmatprep.subr.mxu0 0.0
        %2009 = vmatpush1.msra.mxu0 0.0
        %2010 = vmatprep.subr.mxu0 0.0
        %2011 = vmatpush1.msra.mxu0 0.0
        %2012 = vmatprep.subr.mxu0 0.0
        %2013 = vmatpush1.msra.mxu0 0.0
        %2014 = vmatprep.subr.mxu0 0.0
        %2015 = vmatpush1.msra.mxu0 0.0
        %2016 = vmatprep.subr.mxu0 0.0
        %2017 = vmatpush1.msra.mxu0 0.0
        %2018 = vmatprep.subr.mxu0 0.0
        %2019 = vmatpush1.msra.mxu0 0.0
        %2020 = vmatprep.subr.mxu0 0.0
        %2021 = vmatpush1.msra.mxu0 0.0
        %2022 = vmatprep.subr.mxu0 0.0
        %2023 = vmatpush1.msra.mxu0 0.0
        %2024 = vmatprep.subr.mxu0 0.0
        %2025 = vmatpush1.msra.mxu0 0.0
        %2026 = vmatprep.subr.mxu0 0.0
        %2027 = vmatpush1.msra.mxu0 0.0
        %2028 = vmatprep.subr.mxu0 0.0
        %2029 = vmatpush1.msra.mxu0 0.0
        %2030 = vmatprep.subr.mxu0 0.0
        %2031 = vmatpush1.msra.mxu0 0.0
        %2032 = vmatprep.subr.mxu0 0.0
        %2033 = vmatpush1.msra.mxu0 0.0
        %2034 = vmatprep.subr.mxu0 0.0
        %2035 = vmatpush1.msra.mxu0 0.0
        %2036 = vmatprep.subr.mxu0 0.0
        %2037 = vmatpush1.msra.mxu0 0.0
        %2038 = vmatprep.subr.mxu0 0.0
        %2039 = vmatpush1.msra.mxu0 0.0
        %2040 = vmatprep.subr.mxu0 0.0
        %2041 = vmatpush1.msra.mxu0 0.0
        %2042 = vmatprep.subr.mxu0 0.0
        %2043 = vmatpush1.msra.mxu0 0.0
        %2044 = vmatprep.subr.mxu0 0.0
        %2045 = vmatpush1.msra.mxu0 0.0
        %2046 = vmatprep.subr.mxu0 0.0
        %2047 = vmatpush1.msra.mxu0 0.0
        %2048 = vmatprep.subr.mxu0 0.0
        %2049 = vmatpush1.msra.mxu0 0.0
        %2050 = vmatprep.mubr.f32.mxu0 0.0
        %2051 = vmatmul.mubr.f32.gmra.mrb[0].mxu0 %v1891
        %v2052 = vpop.f32.mrb[0].mxu0
        %v2053 = vadd.f32 0.0, %v2052
        %v2054 = vpop.f32.mrb[0].mxu0
        %2055 = vmatprep.mubr.f32.mxu0 0.0
        %2056 = vmatmul.mubr.f32.gmra.mrb[0].mxu0 %v1894
        %v2057 = vpop.f32.mrb[0].mxu0
        %v2058 = vadd.f32 0.0, %v2057
        %v2059 = vpop.f32.mrb[0].mxu0
        %2060 = vmatprep.mubr.f32.mxu0 0.0
        %2061 = vmatmul.mubr.f32.gmra.mrb[0].mxu0 %v1897
        %v2062 = vpop.f32.mrb[0].mxu0
        %v2063 = vadd.f32 0.0, %v2062
        %v2064 = vpop.f32.mrb[0].mxu0
        %2065 = vmatprep.mubr.f32.mxu0 0.0
        %2066 = vmatmul.mubr.f32.gmra.mrb[0].mxu0 %v1900
        %v2067 = vpop.f32.mrb[0].mxu0
        %v2068 = vadd.f32 0.0, %v2067
        %v2069 = vpop.f32.mrb[0].mxu0
        %2070 = vmatprep.mubr.f32.mxu0 0.0
        %2071 = vmatmul.mubr.f32.gmra.mrb[0].mxu0 %v1903
        %v2072 = vpop.f32.mrb[0].mxu0
        %v2073 = vadd.f32 0.0, %v2072
        %v2074 = vpop.f32.mrb[0].mxu0
        %2075 = vmatprep.mubr.f32.mxu0 0.0
        %2076 = vmatmul.mubr.f32.gmra.mrb[0].mxu0 %v1906
        %v2077 = vpop.f32.mrb[0].mxu0
        %v2078 = vadd.f32 0.0, %v2077
        %v2079 = vpop.f32.mrb[0].mxu0
        %2080 = vmatprep.mubr.f32.mxu0 0.0
        %2081 = vmatmul.mubr.f32.gmra.mrb[0].mxu0 %v1909
        %v2082 = vpop.f32.mrb[0].mxu0
        %v2083 = vadd.f32 0.0, %v2082
        %v2084 = vpop.f32.mrb[0].mxu0
        %2085 = vmatprep.mubr.f32.mxu0 0.0
        %2086 = vmatmul.mubr.f32.gmra.mrb[0].mxu0 %v1912
        %v2087 = vpop.f32.mrb[0].mxu0
        %v2088 = vadd.f32 0.0, %v2087
        %v2089 = vpop.f32.mrb[0].mxu0
        %2090 = vmatprep.mubr.f32.mxu0 0.0
        %2091 = vmatmul.mubr.f32.gmra.mrb[0].mxu0 %v1915
        %v2092 = vpop.f32.mrb[0].mxu0
        %v2093 = vadd.f32 0.0, %v2092
        %v2094 = vpop.f32.mrb[0].mxu0
        %2095 = vmatprep.mubr.f32.mxu0 0.0
        %2096 = vmatmul.mubr.f32.gmra.mrb[0].mxu0 %v1918
        %v2097 = vpop.f32.mrb[0].mxu0
        %v2098 = vadd.f32 0.0, %v2097
        %v2099 = vpop.f32.mrb[0].mxu0
        %2100 = vmatprep.mubr.f32.mxu0 0.0
        %2101 = vmatmul.mubr.f32.gmra.mrb[0].mxu0 %v1921
        %v2102 = vpop.f32.mrb[0].mxu0
        %v2103 = vadd.f32 0.0, %v2102
        %v2104 = vpop.f32.mrb[0].mxu0
        %2105 = vmatprep.mubr.f32.mxu0 0.0
        %2106 = vmatmul.mubr.f32.gmra.mrb[0].mxu0 %v1924
        %v2107 = vpop.f32.mrb[0].mxu0
        %v2108 = vadd.f32 0.0, %v2107
        %v2109 = vpop.f32.mrb[0].mxu0
        %2110 = vmatprep.mubr.f32.mxu0 0.0
        %2111 = vmatmul.mubr.f32.gmra.mrb[0].mxu0 %v1927
        %v2112 = vpop.f32.mrb[0].mxu0
        %v2113 = vadd.f32 0.0, %v2112
        %v2114 = vpop.f32.mrb[0].mxu0
        %2115 = vmatprep.mubr.f32.mxu0 0.0
        %2116 = vmatmul.mubr.f32.gmra.mrb[0].mxu0 %v1930
        %v2117 = vpop.f32.mrb[0].mxu0
        %v2118 = vadd.f32 0.0, %v2117
        %v2119 = vpop.f32.mrb[0].mxu0
        %2120 = vmatprep.mubr.f32.mxu0 0.0
        %2121 = vmatmul.mubr.f32.gmra.mrb[0].mxu0 %v1933
        %v2122 = vpop.f32.mrb[0].mxu0
        %v2123 = vadd.f32 0.0, %v2122
        %v2124 = vpop.f32.mrb[0].mxu0
        %2125 = vmatprep.mubr.f32.mxu0 0.0
        %2126 = vmatmul.mubr.f32.gmra.mrb[0].mxu0 %v1936
        %v2127 = vpop.f32.mrb[0].mxu0
        %v2128 = vadd.f32 0.0, %v2127
        %v2129 = vpop.f32.mrb[0].mxu0
        %2130 = vmatprep.mubr.f32.mxu0 0.0
        %2131 = vmatmul.mubr.f32.gmra.mrb[0].mxu0 %v1939
        %v2132 = vpop.f32.mrb[0].mxu0
        %v2133 = vadd.f32 0.0, %v2132
        %v2134 = vpop.f32.mrb[0].mxu0
        %2135 = vmatprep.mubr.f32.mxu0 0.0
        %2136 = vmatmul.mubr.f32.gmra.mrb[0].mxu0 %v1942
        %v2137 = vpop.f32.mrb[0].mxu0
        %v2138 = vadd.f32 0.0, %v2137
        %v2139 = vpop.f32.mrb[0].mxu0
        %2140 = vmatprep.mubr.f32.mxu0 0.0
        %2141 = vmatmul.mubr.f32.gmra.mrb[0].mxu0 %v1945
        %v2142 = vpop.f32.mrb[0].mxu0
        %v2143 = vadd.f32 0.0, %v2142
        %v2144 = vpop.f32.mrb[0].mxu0
        %2145 = vmatprep.mubr.f32.mxu0 0.0
        %2146 = vmatmul.mubr.f32.gmra.mrb[0].mxu0 %v1948
        %v2147 = vpop.f32.mrb[0].mxu0
        %v2148 = vadd.f32 0.0, %v2147
        %v2149 = vpop.f32.mrb[0].mxu0
        %2150 = vmatprep.mubr.f32.mxu0 0.0
        %2151 = vmatmul.mubr.f32.gmra.mrb[0].mxu0 %v1951
        %v2152 = vpop.f32.mrb[0].mxu0
        %v2153 = vadd.f32 0.0, %v2152
        %v2154 = vpop.f32.mrb[0].mxu0
        %2155 = vmatprep.mubr.f32.mxu0 0.0
        %2156 = vmatmul.mubr.f32.gmra.mrb[0].mxu0 %v1954
        %v2157 = vpop.f32.mrb[0].mxu0
        %v2158 = vadd.f32 0.0, %v2157
        %v2159 = vpop.f32.mrb[0].mxu0
        %2160 = vmatprep.mubr.f32.mxu0 0.0
        %2161 = vmatmul.mubr.f32.gmra.mrb[0].mxu0 %v1957
        %v2162 = vpop.f32.mrb[0].mxu0
        %v2163 = vadd.f32 0.0, %v2162
        %v2164 = vpop.f32.mrb[0].mxu0
        %2165 = vmatprep.mubr.f32.mxu0 0.0
        %2166 = vmatmul.mubr.f32.gmra.mrb[0].mxu0 %v1960
        %v2167 = vpop.f32.mrb[0].mxu0
        %v2168 = vadd.f32 0.0, %v2167
        %v2169 = vpop.f32.mrb[0].mxu0
        %2170 = vmatprep.mubr.f32.mxu0 0.0
        %2171 = vmatmul.mubr.f32.gmra.mrb[0].mxu0 %v1963
        %v2172 = vpop.f32.mrb[0].mxu0
        %v2173 = vadd.f32 0.0, %v2172
        %v2174 = vpop.f32.mrb[0].mxu0
        %2175 = vmatprep.mubr.f32.mxu0 0.0
        %2176 = vmatmul.mubr.f32.gmra.mrb[0].mxu0 %v1966
        %v2177 = vpop.f32.mrb[0].mxu0
        %v2178 = vadd.f32 0.0, %v2177
        %v2179 = vpop.f32.mrb[0].mxu0
        %2180 = vmatprep.mubr.f32.mxu0 0.0
        %2181 = vmatmul.mubr.f32.gmra.mrb[0].mxu0 %v1969
        %v2182 = vpop.f32.mrb[0].mxu0
        %v2183 = vadd.f32 0.0, %v2182
        %v2184 = vpop.f32.mrb[0].mxu0
        %2185 = vmatprep.mubr.f32.mxu0 0.0
        %2186 = vmatmul.mubr.f32.gmra.mrb[0].mxu0 %v1972
        %v2187 = vpop.f32.mrb[0].mxu0
        %v2188 = vadd.f32 0.0, %v2187
        %v2189 = vpop.f32.mrb[0].mxu0
        %2190 = vmatprep.mubr.f32.mxu0 0.0
        %2191 = vmatmul.mubr.f32.gmra.mrb[0].mxu0 %v1975
        %v2192 = vpop.f32.mrb[0].mxu0
        %v2193 = vadd.f32 0.0, %v2192
        %v2194 = vpop.f32.mrb[0].mxu0
        %2195 = vmatprep.mubr.f32.mxu0 0.0
        %2196 = vmatmul.mubr.f32.gmra.mrb[0].mxu0 %v1978
        %v2197 = vpop.f32.mrb[0].mxu0
        %v2198 = vadd.f32 0.0, %v2197
        %v2199 = vpop.f32.mrb[0].mxu0
        %2200 = vmatprep.mubr.f32.mxu0 0.0
        %2201 = vmatmul.mubr.f32.gmra.mrb[0].mxu0 %v1981
        %v2202 = vpop.f32.mrb[0].mxu0
        %v2203 = vadd.f32 0.0, %v2202
        %v2204 = vpop.f32.mrb[0].mxu0
        %2205 = vmatprep.mubr.f32.mxu0 0.0
        %2206 = vmatmul.mubr.f32.gmra.mrb[0].mxu0 %v1984
        %v2207 = vpop.f32.mrb[0].mxu0
        %v2208 = vadd.f32 0.0, %v2207
        %v2209 = vpop.f32.mrb[0].mxu0
        %2210 = vdwg.mxu0
        %v2211 = vadd.f32 %v1824, %v2053
        %v2212 = vadd.f32 %v1825, %v2058
        %v2213 = vadd.f32 %v1826, %v2063
        %v2214 = vadd.f32 %v1827, %v2068
        %v2215 = vadd.f32 %v1828, %v2073
        %v2216 = vadd.f32 %v1829, %v2078
        %v2217 = vadd.f32 %v1830, %v2083
        %v2218 = vadd.f32 %v1831, %v2088
        %v2219 = vadd.f32 %v1832, %v2093
        %v2220 = vadd.f32 %v1833, %v2098
        %v2221 = vadd.f32 %v1834, %v2103
        %v2222 = vadd.f32 %v1835, %v2108
        %v2223 = vadd.f32 %v1836, %v2113
        %v2224 = vadd.f32 %v1837, %v2118
        %v2225 = vadd.f32 %v1838, %v2123
        %v2226 = vadd.f32 %v1839, %v2128
        %v2227 = vadd.f32 %v1840, %v2133
        %v2228 = vadd.f32 %v1841, %v2138
        %v2229 = vadd.f32 %v1842, %v2143
        %v2230 = vadd.f32 %v1843, %v2148
        %v2231 = vadd.f32 %v1844, %v2153
        %v2232 = vadd.f32 %v1845, %v2158
        %v2233 = vadd.f32 %v1846, %v2163
        %v2234 = vadd.f32 %v1847, %v2168
        %v2235 = vadd.f32 %v1848, %v2173
        %v2236 = vadd.f32 %v1849, %v2178
        %v2237 = vadd.f32 %v1850, %v2183
        %v2238 = vadd.f32 %v1851, %v2188
        %v2239 = vadd.f32 %v1852, %v2193
        %v2240 = vadd.f32 %v1853, %v2198
        %v2241 = vadd.f32 %v1854, %v2203
        %v2242 = vadd.f32 %v1855, %v2208
        %v2243 = vld [vmem:[%s727 + $0x1] sm:$0xff]
        %v2244 = vld [vmem:[%s727 + $0x9] sm:$0xff]
        %v2245 = vld [vmem:[%s727 + $0x19] sm:$0xff]
        %v2246 = vld [vmem:[%s727 + $0x21] sm:$0xff]
        %v2247 = vld [vmem:[%s727 + $0x31] sm:$0xff]
        %v2248 = vld [vmem:[%s727 + $0x39] sm:$0xff]
        %v2249 = vld [vmem:[%s727 + $0x49] sm:$0xff]
        %v2250 = vld [vmem:[%s727 + $0x51] sm:$0xff]
        %v2251 = vld [vmem:[%s727 + $0x61] sm:$0xff]
        %v2252 = vld [vmem:[%s727 + $0x69] sm:$0xff]
        %v2253 = vld [vmem:[%s727 + $0x79] sm:$0xff]
        %v2254 = vld [vmem:[%s727 + $0x81] sm:$0xff]
        %v2255 = vld [vmem:[%s727 + $0x91] sm:$0xff]
        %v2256 = vld [vmem:[%s727 + $0x99] sm:$0xff]
        %v2257 = vld [vmem:[%s727 + $0xa9] sm:$0xff]
        %v2258 = vld [vmem:[%s727 + $0xb1] sm:$0xff]
        %v2259 = vld [vmem:[%s727 + $0xc1] sm:$0xff]
        %v2260 = vld [vmem:[%s727 + $0xc9] sm:$0xff]
        %v2261 = vld [vmem:[%s727 + $0xd9] sm:$0xff]
        %v2262 = vld [vmem:[%s727 + $0xe1] sm:$0xff]
        %v2263 = vld [vmem:[%s727 + $0xf1] sm:$0xff]
        %v2264 = vld [vmem:[%s727 + $0xf9] sm:$0xff]
        %v2265 = vld [vmem:[%s727 + $0x109] sm:$0xff]
        %v2266 = vld [vmem:[%s727 + $0x111] sm:$0xff]
        %v2267 = vld [vmem:[%s727 + $0x121] sm:$0xff]
        %v2268 = vld [vmem:[%s727 + $0x129] sm:$0xff]
        %v2269 = vld [vmem:[%s727 + $0x139] sm:$0xff]
        %v2270 = vld [vmem:[%s727 + $0x141] sm:$0xff]
        %v2271 = vld [vmem:[%s727 + $0x151] sm:$0xff]
        %v2272 = vld [vmem:[%s727 + $0x159] sm:$0xff]
        %v2273 = vld [vmem:[%s727 + $0x169] sm:$0xff]
        %v2274 = vld [vmem:[%s727 + $0x171] sm:$0xff]
        %s2275 = scalar_lea.vmem [#allocation7], 32
        %v2276 = vld [vmem:[%s2275] sm:$0xff]
        %v2278 = vsel %vm274, %v2243, 0
        %v2281 = vsel %vm274, %v2244, 0
        %v2284 = vsel %vm274, %v2245, 0
        %v2287 = vsel %vm274, %v2246, 0
        %v2290 = vsel %vm274, %v2247, 0
        %v2293 = vsel %vm274, %v2248, 0
        %v2296 = vsel %vm274, %v2249, 0
        %v2299 = vsel %vm274, %v2250, 0
        %v2302 = vsel %vm274, %v2251, 0
        %v2305 = vsel %vm274, %v2252, 0
        %v2308 = vsel %vm274, %v2253, 0
        %v2311 = vsel %vm274, %v2254, 0
        %v2314 = vsel %vm274, %v2255, 0
        %v2317 = vsel %vm274, %v2256, 0
        %v2320 = vsel %vm274, %v2257, 0
        %v2323 = vsel %vm274, %v2258, 0
        %v2326 = vsel %vm274, %v2259, 0
        %v2329 = vsel %vm274, %v2260, 0
        %v2332 = vsel %vm274, %v2261, 0
        %v2335 = vsel %vm274, %v2262, 0
        %v2338 = vsel %vm274, %v2263, 0
        %v2341 = vsel %vm274, %v2264, 0
        %v2344 = vsel %vm274, %v2265, 0
        %v2347 = vsel %vm274, %v2266, 0
        %v2350 = vsel %vm274, %v2267, 0
        %v2353 = vsel %vm274, %v2268, 0
        %v2356 = vsel %vm274, %v2269, 0
        %v2359 = vsel %vm274, %v2270, 0
        %v2362 = vsel %vm274, %v2271, 0
        %v2365 = vsel %vm274, %v2272, 0
        %v2368 = vsel %vm274, %v2273, 0
        %v2371 = vsel %vm274, %v2274, 0
        %2373 = vmatprep.subr.mxu0 0.0
        %2374 = vmatpush1.msra.mxu0 %v2276
        %2375 = vmatprep.subr.mxu0 0.0
        %2376 = vmatpush1.msra.mxu0 0.0
        %2377 = vmatprep.subr.mxu0 0.0
        %2378 = vmatpush1.msra.mxu0 0.0
        %2379 = vmatprep.subr.mxu0 0.0
        %2380 = vmatpush1.msra.mxu0 0.0
        %2381 = vmatprep.subr.mxu0 0.0
        %2382 = vmatpush1.msra.mxu0 0.0
        %2383 = vmatprep.subr.mxu0 0.0
        %2384 = vmatpush1.msra.mxu0 0.0
        %2385 = vmatprep.subr.mxu0 0.0
        %2386 = vmatpush1.msra.mxu0 0.0
        %2387 = vmatprep.subr.mxu0 0.0
        %2388 = vmatpush1.msra.mxu0 0.0
        %2389 = vmatprep.subr.mxu0 0.0
        %2390 = vmatpush1.msra.mxu0 0.0
        %2391 = vmatprep.subr.mxu0 0.0
        %2392 = vmatpush1.msra.mxu0 0.0
        %2393 = vmatprep.subr.mxu0 0.0
        %2394 = vmatpush1.msra.mxu0 0.0
        %2395 = vmatprep.subr.mxu0 0.0
        %2396 = vmatpush1.msra.mxu0 0.0
        %2397 = vmatprep.subr.mxu0 0.0
        %2398 = vmatpush1.msra.mxu0 0.0
        %2399 = vmatprep.subr.mxu0 0.0
        %2400 = vmatpush1.msra.mxu0 0.0
        %2401 = vmatprep.subr.mxu0 0.0
        %2402 = vmatpush1.msra.mxu0 0.0
        %2403 = vmatprep.subr.mxu0 0.0
        %2404 = vmatpush1.msra.mxu0 0.0
        %2405 = vmatprep.subr.mxu0 0.0
        %2406 = vmatpush1.msra.mxu0 0.0
        %2407 = vmatprep.subr.mxu0 0.0
        %2408 = vmatpush1.msra.mxu0 0.0
        %2409 = vmatprep.subr.mxu0 0.0
        %2410 = vmatpush1.msra.mxu0 0.0
        %2411 = vmatprep.subr.mxu0 0.0
        %2412 = vmatpush1.msra.mxu0 0.0
        %2413 = vmatprep.subr.mxu0 0.0
        %2414 = vmatpush1.msra.mxu0 0.0
        %2415 = vmatprep.subr.mxu0 0.0
        %2416 = vmatpush1.msra.mxu0 0.0
        %2417 = vmatprep.subr.mxu0 0.0
        %2418 = vmatpush1.msra.mxu0 0.0
        %2419 = vmatprep.subr.mxu0 0.0
        %2420 = vmatpush1.msra.mxu0 0.0
        %2421 = vmatprep.subr.mxu0 0.0
        %2422 = vmatpush1.msra.mxu0 0.0
        %2423 = vmatprep.subr.mxu0 0.0
        %2424 = vmatpush1.msra.mxu0 0.0
        %2425 = vmatprep.subr.mxu0 0.0
        %2426 = vmatpush1.msra.mxu0 0.0
        %2427 = vmatprep.subr.mxu0 0.0
        %2428 = vmatpush1.msra.mxu0 0.0
        %2429 = vmatprep.subr.mxu0 0.0
        %2430 = vmatpush1.msra.mxu0 0.0
        %2431 = vmatprep.subr.mxu0 0.0
        %2432 = vmatpush1.msra.mxu0 0.0
        %2433 = vmatprep.subr.mxu0 0.0
        %2434 = vmatpush1.msra.mxu0 0.0
        %2435 = vmatprep.subr.mxu0 0.0
        %2436 = vmatpush1.msra.mxu0 0.0
        %2437 = vmatprep.mubr.f32.mxu0 0.0
        %2438 = vmatmul.mubr.f32.gmra.mrb[0].mxu0 %v2278
        %v2439 = vpop.f32.mrb[0].mxu0
        %v2440 = vadd.f32 0.0, %v2439
        %v2441 = vpop.f32.mrb[0].mxu0
        %2442 = vmatprep.mubr.f32.mxu0 0.0
        %2443 = vmatmul.mubr.f32.gmra.mrb[0].mxu0 %v2281
        %v2444 = vpop.f32.mrb[0].mxu0
        %v2445 = vadd.f32 0.0, %v2444
        %v2446 = vpop.f32.mrb[0].mxu0
        %2447 = vmatprep.mubr.f32.mxu0 0.0
        %2448 = vmatmul.mubr.f32.gmra.mrb[0].mxu0 %v2284
        %v2449 = vpop.f32.mrb[0].mxu0
        %v2450 = vadd.f32 0.0, %v2449
        %v2451 = vpop.f32.mrb[0].mxu0
        %2452 = vmatprep.mubr.f32.mxu0 0.0
        %2453 = vmatmul.mubr.f32.gmra.mrb[0].mxu0 %v2287
        %v2454 = vpop.f32.mrb[0].mxu0
        %v2455 = vadd.f32 0.0, %v2454
        %v2456 = vpop.f32.mrb[0].mxu0
        %2457 = vmatprep.mubr.f32.mxu0 0.0
        %2458 = vmatmul.mubr.f32.gmra.mrb[0].mxu0 %v2290
        %v2459 = vpop.f32.mrb[0].mxu0
        %v2460 = vadd.f32 0.0, %v2459
        %v2461 = vpop.f32.mrb[0].mxu0
        %2462 = vmatprep.mubr.f32.mxu0 0.0
        %2463 = vmatmul.mubr.f32.gmra.mrb[0].mxu0 %v2293
        %v2464 = vpop.f32.mrb[0].mxu0
        %v2465 = vadd.f32 0.0, %v2464
        %v2466 = vpop.f32.mrb[0].mxu0
        %2467 = vmatprep.mubr.f32.mxu0 0.0
        %2468 = vmatmul.mubr.f32.gmra.mrb[0].mxu0 %v2296
        %v2469 = vpop.f32.mrb[0].mxu0
        %v2470 = vadd.f32 0.0, %v2469
        %v2471 = vpop.f32.mrb[0].mxu0
        %2472 = vmatprep.mubr.f32.mxu0 0.0
        %2473 = vmatmul.mubr.f32.gmra.mrb[0].mxu0 %v2299
        %v2474 = vpop.f32.mrb[0].mxu0
        %v2475 = vadd.f32 0.0, %v2474
        %v2476 = vpop.f32.mrb[0].mxu0
        %2477 = vmatprep.mubr.f32.mxu0 0.0
        %2478 = vmatmul.mubr.f32.gmra.mrb[0].mxu0 %v2302
        %v2479 = vpop.f32.mrb[0].mxu0
        %v2480 = vadd.f32 0.0, %v2479
        %v2481 = vpop.f32.mrb[0].mxu0
        %2482 = vmatprep.mubr.f32.mxu0 0.0
        %2483 = vmatmul.mubr.f32.gmra.mrb[0].mxu0 %v2305
        %v2484 = vpop.f32.mrb[0].mxu0
        %v2485 = vadd.f32 0.0, %v2484
        %v2486 = vpop.f32.mrb[0].mxu0
        %2487 = vmatprep.mubr.f32.mxu0 0.0
        %2488 = vmatmul.mubr.f32.gmra.mrb[0].mxu0 %v2308
        %v2489 = vpop.f32.mrb[0].mxu0
        %v2490 = vadd.f32 0.0, %v2489
        %v2491 = vpop.f32.mrb[0].mxu0
        %2492 = vmatprep.mubr.f32.mxu0 0.0
        %2493 = vmatmul.mubr.f32.gmra.mrb[0].mxu0 %v2311
        %v2494 = vpop.f32.mrb[0].mxu0
        %v2495 = vadd.f32 0.0, %v2494
        %v2496 = vpop.f32.mrb[0].mxu0
        %2497 = vmatprep.mubr.f32.mxu0 0.0
        %2498 = vmatmul.mubr.f32.gmra.mrb[0].mxu0 %v2314
        %v2499 = vpop.f32.mrb[0].mxu0
        %v2500 = vadd.f32 0.0, %v2499
        %v2501 = vpop.f32.mrb[0].mxu0
        %2502 = vmatprep.mubr.f32.mxu0 0.0
        %2503 = vmatmul.mubr.f32.gmra.mrb[0].mxu0 %v2317
        %v2504 = vpop.f32.mrb[0].mxu0
        %v2505 = vadd.f32 0.0, %v2504
        %v2506 = vpop.f32.mrb[0].mxu0
        %2507 = vmatprep.mubr.f32.mxu0 0.0
        %2508 = vmatmul.mubr.f32.gmra.mrb[0].mxu0 %v2320
        %v2509 = vpop.f32.mrb[0].mxu0
        %v2510 = vadd.f32 0.0, %v2509
        %v2511 = vpop.f32.mrb[0].mxu0
        %2512 = vmatprep.mubr.f32.mxu0 0.0
        %2513 = vmatmul.mubr.f32.gmra.mrb[0].mxu0 %v2323
        %v2514 = vpop.f32.mrb[0].mxu0
        %v2515 = vadd.f32 0.0, %v2514
        %v2516 = vpop.f32.mrb[0].mxu0
        %2517 = vmatprep.mubr.f32.mxu0 0.0
        %2518 = vmatmul.mubr.f32.gmra.mrb[0].mxu0 %v2326
        %v2519 = vpop.f32.mrb[0].mxu0
        %v2520 = vadd.f32 0.0, %v2519
        %v2521 = vpop.f32.mrb[0].mxu0
        %2522 = vmatprep.mubr.f32.mxu0 0.0
        %2523 = vmatmul.mubr.f32.gmra.mrb[0].mxu0 %v2329
        %v2524 = vpop.f32.mrb[0].mxu0
        %v2525 = vadd.f32 0.0, %v2524
        %v2526 = vpop.f32.mrb[0].mxu0
        %2527 = vmatprep.mubr.f32.mxu0 0.0
        %2528 = vmatmul.mubr.f32.gmra.mrb[0].mxu0 %v2332
        %v2529 = vpop.f32.mrb[0].mxu0
        %v2530 = vadd.f32 0.0, %v2529
        %v2531 = vpop.f32.mrb[0].mxu0
        %2532 = vmatprep.mubr.f32.mxu0 0.0
        %2533 = vmatmul.mubr.f32.gmra.mrb[0].mxu0 %v2335
        %v2534 = vpop.f32.mrb[0].mxu0
        %v2535 = vadd.f32 0.0, %v2534
        %v2536 = vpop.f32.mrb[0].mxu0
        %2537 = vmatprep.mubr.f32.mxu0 0.0
        %2538 = vmatmul.mubr.f32.gmra.mrb[0].mxu0 %v2338
        %v2539 = vpop.f32.mrb[0].mxu0
        %v2540 = vadd.f32 0.0, %v2539
        %v2541 = vpop.f32.mrb[0].mxu0
        %2542 = vmatprep.mubr.f32.mxu0 0.0
        %2543 = vmatmul.mubr.f32.gmra.mrb[0].mxu0 %v2341
        %v2544 = vpop.f32.mrb[0].mxu0
        %v2545 = vadd.f32 0.0, %v2544
        %v2546 = vpop.f32.mrb[0].mxu0
        %2547 = vmatprep.mubr.f32.mxu0 0.0
        %2548 = vmatmul.mubr.f32.gmra.mrb[0].mxu0 %v2344
        %v2549 = vpop.f32.mrb[0].mxu0
        %v2550 = vadd.f32 0.0, %v2549
        %v2551 = vpop.f32.mrb[0].mxu0
        %2552 = vmatprep.mubr.f32.mxu0 0.0
        %2553 = vmatmul.mubr.f32.gmra.mrb[0].mxu0 %v2347
        %v2554 = vpop.f32.mrb[0].mxu0
        %v2555 = vadd.f32 0.0, %v2554
        %v2556 = vpop.f32.mrb[0].mxu0
        %2557 = vmatprep.mubr.f32.mxu0 0.0
        %2558 = vmatmul.mubr.f32.gmra.mrb[0].mxu0 %v2350
        %v2559 = vpop.f32.mrb[0].mxu0
        %v2560 = vadd.f32 0.0, %v2559
        %v2561 = vpop.f32.mrb[0].mxu0
        %2562 = vmatprep.mubr.f32.mxu0 0.0
        %2563 = vmatmul.mubr.f32.gmra.mrb[0].mxu0 %v2353
        %v2564 = vpop.f32.mrb[0].mxu0
        %v2565 = vadd.f32 0.0, %v2564
        %v2566 = vpop.f32.mrb[0].mxu0
        %2567 = vmatprep.mubr.f32.mxu0 0.0
        %2568 = vmatmul.mubr.f32.gmra.mrb[0].mxu0 %v2356
        %v2569 = vpop.f32.mrb[0].mxu0
        %v2570 = vadd.f32 0.0, %v2569
        %v2571 = vpop.f32.mrb[0].mxu0
        %2572 = vmatprep.mubr.f32.mxu0 0.0
        %2573 = vmatmul.mubr.f32.gmra.mrb[0].mxu0 %v2359
        %v2574 = vpop.f32.mrb[0].mxu0
        %v2575 = vadd.f32 0.0, %v2574
        %v2576 = vpop.f32.mrb[0].mxu0
        %2577 = vmatprep.mubr.f32.mxu0 0.0
        %2578 = vmatmul.mubr.f32.gmra.mrb[0].mxu0 %v2362
        %v2579 = vpop.f32.mrb[0].mxu0
        %v2580 = vadd.f32 0.0, %v2579
        %v2581 = vpop.f32.mrb[0].mxu0
        %2582 = vmatprep.mubr.f32.mxu0 0.0
        %2583 = vmatmul.mubr.f32.gmra.mrb[0].mxu0 %v2365
        %v2584 = vpop.f32.mrb[0].mxu0
        %v2585 = vadd.f32 0.0, %v2584
        %v2586 = vpop.f32.mrb[0].mxu0
        %2587 = vmatprep.mubr.f32.mxu0 0.0
        %2588 = vmatmul.mubr.f32.gmra.mrb[0].mxu0 %v2368
        %v2589 = vpop.f32.mrb[0].mxu0
        %v2590 = vadd.f32 0.0, %v2589
        %v2591 = vpop.f32.mrb[0].mxu0
        %2592 = vmatprep.mubr.f32.mxu0 0.0
        %2593 = vmatmul.mubr.f32.gmra.mrb[0].mxu0 %v2371
        %v2594 = vpop.f32.mrb[0].mxu0
        %v2595 = vadd.f32 0.0, %v2594
        %v2596 = vpop.f32.mrb[0].mxu0
        %2597 = vdwg.mxu0
        %v2598 = vadd.f32 %v2211, %v2440
        %v2599 = vadd.f32 %v2212, %v2445
        %v2600 = vadd.f32 %v2213, %v2450
        %v2601 = vadd.f32 %v2214, %v2455
        %v2602 = vadd.f32 %v2215, %v2460
        %v2603 = vadd.f32 %v2216, %v2465
        %v2604 = vadd.f32 %v2217, %v2470
        %v2605 = vadd.f32 %v2218, %v2475
        %v2606 = vadd.f32 %v2219, %v2480
        %v2607 = vadd.f32 %v2220, %v2485
        %v2608 = vadd.f32 %v2221, %v2490
        %v2609 = vadd.f32 %v2222, %v2495
        %v2610 = vadd.f32 %v2223, %v2500
        %v2611 = vadd.f32 %v2224, %v2505
        %v2612 = vadd.f32 %v2225, %v2510
        %v2613 = vadd.f32 %v2226, %v2515
        %v2614 = vadd.f32 %v2227, %v2520
        %v2615 = vadd.f32 %v2228, %v2525
        %v2616 = vadd.f32 %v2229, %v2530
        %v2617 = vadd.f32 %v2230, %v2535
        %v2618 = vadd.f32 %v2231, %v2540
        %v2619 = vadd.f32 %v2232, %v2545
        %v2620 = vadd.f32 %v2233, %v2550
        %v2621 = vadd.f32 %v2234, %v2555
        %v2622 = vadd.f32 %v2235, %v2560
        %v2623 = vadd.f32 %v2236, %v2565
        %v2624 = vadd.f32 %v2237, %v2570
        %v2625 = vadd.f32 %v2238, %v2575
        %v2626 = vadd.f32 %v2239, %v2580
        %v2627 = vadd.f32 %v2240, %v2585
        %v2628 = vadd.f32 %v2241, %v2590
        %v2629 = vadd.f32 %v2242, %v2595
        %v2630 = vld [vmem:[%s727 + $0x2] sm:$0xff]
        %v2631 = vld [vmem:[%s727 + $0xa] sm:$0xff]
        %v2632 = vld [vmem:[%s727 + $0x1a] sm:$0xff]
        %v2633 = vld [vmem:[%s727 + $0x22] sm:$0xff]
        %v2634 = vld [vmem:[%s727 + $0x32] sm:$0xff]
        %v2635 = vld [vmem:[%s727 + $0x3a] sm:$0xff]
        %v2636 = vld [vmem:[%s727 + $0x4a] sm:$0xff]
        %v2637 = vld [vmem:[%s727 + $0x52] sm:$0xff]
        %v2638 = vld [vmem:[%s727 + $0x62] sm:$0xff]
        %v2639 = vld [vmem:[%s727 + $0x6a] sm:$0xff]
        %v2640 = vld [vmem:[%s727 + $0x7a] sm:$0xff]
        %v2641 = vld [vmem:[%s727 + $0x82] sm:$0xff]
        %v2642 = vld [vmem:[%s727 + $0x92] sm:$0xff]
        %v2643 = vld [vmem:[%s727 + $0x9a] sm:$0xff]
        %v2644 = vld [vmem:[%s727 + $0xaa] sm:$0xff]
        %v2645 = vld [vmem:[%s727 + $0xb2] sm:$0xff]
        %v2646 = vld [vmem:[%s727 + $0xc2] sm:$0xff]
        %v2647 = vld [vmem:[%s727 + $0xca] sm:$0xff]
        %v2648 = vld [vmem:[%s727 + $0xda] sm:$0xff]
        %v2649 = vld [vmem:[%s727 + $0xe2] sm:$0xff]
        %v2650 = vld [vmem:[%s727 + $0xf2] sm:$0xff]
        %v2651 = vld [vmem:[%s727 + $0xfa] sm:$0xff]
        %v2652 = vld [vmem:[%s727 + $0x10a] sm:$0xff]
        %v2653 = vld [vmem:[%s727 + $0x112] sm:$0xff]
        %v2654 = vld [vmem:[%s727 + $0x122] sm:$0xff]
        %v2655 = vld [vmem:[%s727 + $0x12a] sm:$0xff]
        %v2656 = vld [vmem:[%s727 + $0x13a] sm:$0xff]
        %v2657 = vld [vmem:[%s727 + $0x142] sm:$0xff]
        %v2658 = vld [vmem:[%s727 + $0x152] sm:$0xff]
        %v2659 = vld [vmem:[%s727 + $0x15a] sm:$0xff]
        %v2660 = vld [vmem:[%s727 + $0x16a] sm:$0xff]
        %v2661 = vld [vmem:[%s727 + $0x172] sm:$0xff]
        %s2662 = scalar_lea.vmem [#allocation7], 40
        %v2663 = vld [vmem:[%s2662] sm:$0xff]
        %v2665 = vsel %vm274, %v2630, 0
        %v2668 = vsel %vm274, %v2631, 0
        %v2671 = vsel %vm274, %v2632, 0
        %v2674 = vsel %vm274, %v2633, 0
        %v2677 = vsel %vm274, %v2634, 0
        %v2680 = vsel %vm274, %v2635, 0
        %v2683 = vsel %vm274, %v2636, 0
        %v2686 = vsel %vm274, %v2637, 0
        %v2689 = vsel %vm274, %v2638, 0
        %v2692 = vsel %vm274, %v2639, 0
        %v2695 = vsel %vm274, %v2640, 0
        %v2698 = vsel %vm274, %v2641, 0
        %v2701 = vsel %vm274, %v2642, 0
        %v2704 = vsel %vm274, %v2643, 0
        %v2707 = vsel %vm274, %v2644, 0
        %v2710 = vsel %vm274, %v2645, 0
        %v2713 = vsel %vm274, %v2646, 0
        %v2716 = vsel %vm274, %v2647, 0
        %v2719 = vsel %vm274, %v2648, 0
        %v2722 = vsel %vm274, %v2649, 0
        %v2725 = vsel %vm274, %v2650, 0
        %v2728 = vsel %vm274, %v2651, 0
        %v2731 = vsel %vm274, %v2652, 0
        %v2734 = vsel %vm274, %v2653, 0
        %v2737 = vsel %vm274, %v2654, 0
        %v2740 = vsel %vm274, %v2655, 0
        %v2743 = vsel %vm274, %v2656, 0
        %v2746 = vsel %vm274, %v2657, 0
        %v2749 = vsel %vm274, %v2658, 0
        %v2752 = vsel %vm274, %v2659, 0
        %v2755 = vsel %vm274, %v2660, 0
        %v2758 = vsel %vm274, %v2661, 0
        %2760 = vmatprep.subr.mxu0 0.0
        %2761 = vmatpush1.msra.mxu0 %v2663
        %2762 = vmatprep.subr.mxu0 0.0
        %2763 = vmatpush1.msra.mxu0 0.0
        %2764 = vmatprep.subr.mxu0 0.0
        %2765 = vmatpush1.msra.mxu0 0.0
        %2766 = vmatprep.subr.mxu0 0.0
        %2767 = vmatpush1.msra.mxu0 0.0
        %2768 = vmatprep.subr.mxu0 0.0
        %2769 = vmatpush1.msra.mxu0 0.0
        %2770 = vmatprep.subr.mxu0 0.0
        %2771 = vmatpush1.msra.mxu0 0.0
        %2772 = vmatprep.subr.mxu0 0.0
        %2773 = vmatpush1.msra.mxu0 0.0
        %2774 = vmatprep.subr.mxu0 0.0
        %2775 = vmatpush1.msra.mxu0 0.0
        %2776 = vmatprep.subr.mxu0 0.0
        %2777 = vmatpush1.msra.mxu0 0.0
        %2778 = vmatprep.subr.mxu0 0.0
        %2779 = vmatpush1.msra.mxu0 0.0
        %2780 = vmatprep.subr.mxu0 0.0
        %2781 = vmatpush1.msra.mxu0 0.0
        %2782 = vmatprep.subr.mxu0 0.0
        %2783 = vmatpush1.msra.mxu0 0.0
        %2784 = vmatprep.subr.mxu0 0.0
        %2785 = vmatpush1.msra.mxu0 0.0
        %2786 = vmatprep.subr.mxu0 0.0
        %2787 = vmatpush1.msra.mxu0 0.0
        %2788 = vmatprep.subr.mxu0 0.0
        %2789 = vmatpush1.msra.mxu0 0.0
        %2790 = vmatprep.subr.mxu0 0.0
        %2791 = vmatpush1.msra.mxu0 0.0
        %2792 = vmatprep.subr.mxu0 0.0
        %2793 = vmatpush1.msra.mxu0 0.0
        %2794 = vmatprep.subr.mxu0 0.0
        %2795 = vmatpush1.msra.mxu0 0.0
        %2796 = vmatprep.subr.mxu0 0.0
        %2797 = vmatpush1.msra.mxu0 0.0
        %2798 = vmatprep.subr.mxu0 0.0
        %2799 = vmatpush1.msra.mxu0 0.0
        %2800 = vmatprep.subr.mxu0 0.0
        %2801 = vmatpush1.msra.mxu0 0.0
        %2802 = vmatprep.subr.mxu0 0.0
        %2803 = vmatpush1.msra.mxu0 0.0
        %2804 = vmatprep.subr.mxu0 0.0
        %2805 = vmatpush1.msra.mxu0 0.0
        %2806 = vmatprep.subr.mxu0 0.0
        %2807 = vmatpush1.msra.mxu0 0.0
        %2808 = vmatprep.subr.mxu0 0.0
        %2809 = vmatpush1.msra.mxu0 0.0
        %2810 = vmatprep.subr.mxu0 0.0
        %2811 = vmatpush1.msra.mxu0 0.0
        %2812 = vmatprep.subr.mxu0 0.0
        %2813 = vmatpush1.msra.mxu0 0.0
        %2814 = vmatprep.subr.mxu0 0.0
        %2815 = vmatpush1.msra.mxu0 0.0
        %2816 = vmatprep.subr.mxu0 0.0
        %2817 = vmatpush1.msra.mxu0 0.0
        %2818 = vmatprep.subr.mxu0 0.0
        %2819 = vmatpush1.msra.mxu0 0.0
        %2820 = vmatprep.subr.mxu0 0.0
        %2821 = vmatpush1.msra.mxu0 0.0
        %2822 = vmatprep.subr.mxu0 0.0
        %2823 = vmatpush1.msra.mxu0 0.0
        %2824 = vmatprep.mubr.f32.mxu0 0.0
        %2825 = vmatmul.mubr.f32.gmra.mrb[0].mxu0 %v2665
        %v2826 = vpop.f32.mrb[0].mxu0
        %v2827 = vadd.f32 0.0, %v2826
        %v2828 = vpop.f32.mrb[0].mxu0
        %2829 = vmatprep.mubr.f32.mxu0 0.0
        %2830 = vmatmul.mubr.f32.gmra.mrb[0].mxu0 %v2668
        %v2831 = vpop.f32.mrb[0].mxu0
        %v2832 = vadd.f32 0.0, %v2831
        %v2833 = vpop.f32.mrb[0].mxu0
        %2834 = vmatprep.mubr.f32.mxu0 0.0
        %2835 = vmatmul.mubr.f32.gmra.mrb[0].mxu0 %v2671
        %v2836 = vpop.f32.mrb[0].mxu0
        %v2837 = vadd.f32 0.0, %v2836
        %v2838 = vpop.f32.mrb[0].mxu0
        %2839 = vmatprep.mubr.f32.mxu0 0.0
        %2840 = vmatmul.mubr.f32.gmra.mrb[0].mxu0 %v2674
        %v2841 = vpop.f32.mrb[0].mxu0
        %v2842 = vadd.f32 0.0, %v2841
        %v2843 = vpop.f32.mrb[0].mxu0
        %2844 = vmatprep.mubr.f32.mxu0 0.0
        %2845 = vmatmul.mubr.f32.gmra.mrb[0].mxu0 %v2677
        %v2846 = vpop.f32.mrb[0].mxu0
        %v2847 = vadd.f32 0.0, %v2846
        %v2848 = vpop.f32.mrb[0].mxu0
        %2849 = vmatprep.mubr.f32.mxu0 0.0
        %2850 = vmatmul.mubr.f32.gmra.mrb[0].mxu0 %v2680
        %v2851 = vpop.f32.mrb[0].mxu0
        %v2852 = vadd.f32 0.0, %v2851
        %v2853 = vpop.f32.mrb[0].mxu0
        %2854 = vmatprep.mubr.f32.mxu0 0.0
        %2855 = vmatmul.mubr.f32.gmra.mrb[0].mxu0 %v2683
        %v2856 = vpop.f32.mrb[0].mxu0
        %v2857 = vadd.f32 0.0, %v2856
        %v2858 = vpop.f32.mrb[0].mxu0
        %2859 = vmatprep.mubr.f32.mxu0 0.0
        %2860 = vmatmul.mubr.f32.gmra.mrb[0].mxu0 %v2686
        %v2861 = vpop.f32.mrb[0].mxu0
        %v2862 = vadd.f32 0.0, %v2861
        %v2863 = vpop.f32.mrb[0].mxu0
        %2864 = vmatprep.mubr.f32.mxu0 0.0
        %2865 = vmatmul.mubr.f32.gmra.mrb[0].mxu0 %v2689
        %v2866 = vpop.f32.mrb[0].mxu0
        %v2867 = vadd.f32 0.0, %v2866
        %v2868 = vpop.f32.mrb[0].mxu0
        %2869 = vmatprep.mubr.f32.mxu0 0.0
        %2870 = vmatmul.mubr.f32.gmra.mrb[0].mxu0 %v2692
        %v2871 = vpop.f32.mrb[0].mxu0
        %v2872 = vadd.f32 0.0, %v2871
        %v2873 = vpop.f32.mrb[0].mxu0
        %2874 = vmatprep.mubr.f32.mxu0 0.0
        %2875 = vmatmul.mubr.f32.gmra.mrb[0].mxu0 %v2695
        %v2876 = vpop.f32.mrb[0].mxu0
        %v2877 = vadd.f32 0.0, %v2876
        %v2878 = vpop.f32.mrb[0].mxu0
        %2879 = vmatprep.mubr.f32.mxu0 0.0
        %2880 = vmatmul.mubr.f32.gmra.mrb[0].mxu0 %v2698
        %v2881 = vpop.f32.mrb[0].mxu0
        %v2882 = vadd.f32 0.0, %v2881
        %v2883 = vpop.f32.mrb[0].mxu0
        %2884 = vmatprep.mubr.f32.mxu0 0.0
        %2885 = vmatmul.mubr.f32.gmra.mrb[0].mxu0 %v2701
        %v2886 = vpop.f32.mrb[0].mxu0
        %v2887 = vadd.f32 0.0, %v2886
        %v2888 = vpop.f32.mrb[0].mxu0
        %2889 = vmatprep.mubr.f32.mxu0 0.0
        %2890 = vmatmul.mubr.f32.gmra.mrb[0].mxu0 %v2704
        %v2891 = vpop.f32.mrb[0].mxu0
        %v2892 = vadd.f32 0.0, %v2891
        %v2893 = vpop.f32.mrb[0].mxu0
        %2894 = vmatprep.mubr.f32.mxu0 0.0
        %2895 = vmatmul.mubr.f32.gmra.mrb[0].mxu0 %v2707
        %v2896 = vpop.f32.mrb[0].mxu0
        %v2897 = vadd.f32 0.0, %v2896
        %v2898 = vpop.f32.mrb[0].mxu0
        %2899 = vmatprep.mubr.f32.mxu0 0.0
        %2900 = vmatmul.mubr.f32.gmra.mrb[0].mxu0 %v2710
        %v2901 = vpop.f32.mrb[0].mxu0
        %v2902 = vadd.f32 0.0, %v2901
        %v2903 = vpop.f32.mrb[0].mxu0
        %2904 = vmatprep.mubr.f32.mxu0 0.0
        %2905 = vmatmul.mubr.f32.gmra.mrb[0].mxu0 %v2713
        %v2906 = vpop.f32.mrb[0].mxu0
        %v2907 = vadd.f32 0.0, %v2906
        %v2908 = vpop.f32.mrb[0].mxu0
        %2909 = vmatprep.mubr.f32.mxu0 0.0
        %2910 = vmatmul.mubr.f32.gmra.mrb[0].mxu0 %v2716
        %v2911 = vpop.f32.mrb[0].mxu0
        %v2912 = vadd.f32 0.0, %v2911
        %v2913 = vpop.f32.mrb[0].mxu0
        %2914 = vmatprep.mubr.f32.mxu0 0.0
        %2915 = vmatmul.mubr.f32.gmra.mrb[0].mxu0 %v2719
        %v2916 = vpop.f32.mrb[0].mxu0
        %v2917 = vadd.f32 0.0, %v2916
        %v2918 = vpop.f32.mrb[0].mxu0
        %2919 = vmatprep.mubr.f32.mxu0 0.0
        %2920 = vmatmul.mubr.f32.gmra.mrb[0].mxu0 %v2722
        %v2921 = vpop.f32.mrb[0].mxu0
        %v2922 = vadd.f32 0.0, %v2921
        %v2923 = vpop.f32.mrb[0].mxu0
        %2924 = vmatprep.mubr.f32.mxu0 0.0
        %2925 = vmatmul.mubr.f32.gmra.mrb[0].mxu0 %v2725
        %v2926 = vpop.f32.mrb[0].mxu0
        %v2927 = vadd.f32 0.0, %v2926
        %v2928 = vpop.f32.mrb[0].mxu0
        %2929 = vmatprep.mubr.f32.mxu0 0.0
        %2930 = vmatmul.mubr.f32.gmra.mrb[0].mxu0 %v2728
        %v2931 = vpop.f32.mrb[0].mxu0
        %v2932 = vadd.f32 0.0, %v2931
        %v2933 = vpop.f32.mrb[0].mxu0
        %2934 = vmatprep.mubr.f32.mxu0 0.0
        %2935 = vmatmul.mubr.f32.gmra.mrb[0].mxu0 %v2731
        %v2936 = vpop.f32.mrb[0].mxu0
        %v2937 = vadd.f32 0.0, %v2936
        %v2938 = vpop.f32.mrb[0].mxu0
        %2939 = vmatprep.mubr.f32.mxu0 0.0
        %2940 = vmatmul.mubr.f32.gmra.mrb[0].mxu0 %v2734
        %v2941 = vpop.f32.mrb[0].mxu0
        %v2942 = vadd.f32 0.0, %v2941
        %v2943 = vpop.f32.mrb[0].mxu0
        %2944 = vmatprep.mubr.f32.mxu0 0.0
        %2945 = vmatmul.mubr.f32.gmra.mrb[0].mxu0 %v2737
        %v2946 = vpop.f32.mrb[0].mxu0
        %v2947 = vadd.f32 0.0, %v2946
        %v2948 = vpop.f32.mrb[0].mxu0
        %2949 = vmatprep.mubr.f32.mxu0 0.0
        %2950 = vmatmul.mubr.f32.gmra.mrb[0].mxu0 %v2740
        %v2951 = vpop.f32.mrb[0].mxu0
        %v2952 = vadd.f32 0.0, %v2951
        %v2953 = vpop.f32.mrb[0].mxu0
        %2954 = vmatprep.mubr.f32.mxu0 0.0
        %2955 = vmatmul.mubr.f32.gmra.mrb[0].mxu0 %v2743
        %v2956 = vpop.f32.mrb[0].mxu0
        %v2957 = vadd.f32 0.0, %v2956
        %v2958 = vpop.f32.mrb[0].mxu0
        %2959 = vmatprep.mubr.f32.mxu0 0.0
        %2960 = vmatmul.mubr.f32.gmra.mrb[0].mxu0 %v2746
        %v2961 = vpop.f32.mrb[0].mxu0
        %v2962 = vadd.f32 0.0, %v2961
        %v2963 = vpop.f32.mrb[0].mxu0
        %2964 = vmatprep.mubr.f32.mxu0 0.0
        %2965 = vmatmul.mubr.f32.gmra.mrb[0].mxu0 %v2749
        %v2966 = vpop.f32.mrb[0].mxu0
        %v2967 = vadd.f32 0.0, %v2966
        %v2968 = vpop.f32.mrb[0].mxu0
        %2969 = vmatprep.mubr.f32.mxu0 0.0
        %2970 = vmatmul.mubr.f32.gmra.mrb[0].mxu0 %v2752
        %v2971 = vpop.f32.mrb[0].mxu0
        %v2972 = vadd.f32 0.0, %v2971
        %v2973 = vpop.f32.mrb[0].mxu0
        %2974 = vmatprep.mubr.f32.mxu0 0.0
        %2975 = vmatmul.mubr.f32.gmra.mrb[0].mxu0 %v2755
        %v2976 = vpop.f32.mrb[0].mxu0
        %v2977 = vadd.f32 0.0, %v2976
        %v2978 = vpop.f32.mrb[0].mxu0
        %2979 = vmatprep.mubr.f32.mxu0 0.0
        %2980 = vmatmul.mubr.f32.gmra.mrb[0].mxu0 %v2758
        %v2981 = vpop.f32.mrb[0].mxu0
        %v2982 = vadd.f32 0.0, %v2981
        %v2983 = vpop.f32.mrb[0].mxu0
        %2984 = vdwg.mxu0
        %v2985 = vadd.f32 %v2598, %v2827
        %v2986 = vadd.f32 %v2599, %v2832
        %v2987 = vadd.f32 %v2600, %v2837
        %v2988 = vadd.f32 %v2601, %v2842
        %v2989 = vadd.f32 %v2602, %v2847
        %v2990 = vadd.f32 %v2603, %v2852
        %v2991 = vadd.f32 %v2604, %v2857
        %v2992 = vadd.f32 %v2605, %v2862
        %v2993 = vadd.f32 %v2606, %v2867
        %v2994 = vadd.f32 %v2607, %v2872
        %v2995 = vadd.f32 %v2608, %v2877
        %v2996 = vadd.f32 %v2609, %v2882
        %v2997 = vadd.f32 %v2610, %v2887
        %v2998 = vadd.f32 %v2611, %v2892
        %v2999 = vadd.f32 %v2612, %v2897
        %v3000 = vadd.f32 %v2613, %v2902
        %v3001 = vadd.f32 %v2614, %v2907
        %v3002 = vadd.f32 %v2615, %v2912
        %v3003 = vadd.f32 %v2616, %v2917
        %v3004 = vadd.f32 %v2617, %v2922
        %v3005 = vadd.f32 %v2618, %v2927
        %v3006 = vadd.f32 %v2619, %v2932
        %v3007 = vadd.f32 %v2620, %v2937
        %v3008 = vadd.f32 %v2621, %v2942
        %v3009 = vadd.f32 %v2622, %v2947
        %v3010 = vadd.f32 %v2623, %v2952
        %v3011 = vadd.f32 %v2624, %v2957
        %v3012 = vadd.f32 %v2625, %v2962
        %v3013 = vadd.f32 %v2626, %v2967
        %v3014 = vadd.f32 %v2627, %v2972
        %v3015 = vadd.f32 %v2628, %v2977
        %v3016 = vadd.f32 %v2629, %v2982
        %s3017 = scalar_lea.vmem [#allocation2], 48
        %v3018 = vld [vmem:[%s3017] sm:$0xff]
        %v3019 = vld [vmem:[%s3017 + $0x8] sm:$0xff]
        %v3020 = vld [vmem:[%s3017 + $0x18] sm:$0xff]
        %v3021 = vld [vmem:[%s3017 + $0x20] sm:$0xff]
        %v3022 = vld [vmem:[%s3017 + $0x30] sm:$0xff]
        %v3023 = vld [vmem:[%s3017 + $0x38] sm:$0xff]
        %v3024 = vld [vmem:[%s3017 + $0x48] sm:$0xff]
        %v3025 = vld [vmem:[%s3017 + $0x50] sm:$0xff]
        %v3026 = vld [vmem:[%s3017 + $0x60] sm:$0xff]
        %v3027 = vld [vmem:[%s3017 + $0x68] sm:$0xff]
        %v3028 = vld [vmem:[%s3017 + $0x78] sm:$0xff]
        %v3029 = vld [vmem:[%s3017 + $0x80] sm:$0xff]
        %v3030 = vld [vmem:[%s3017 + $0x90] sm:$0xff]
        %v3031 = vld [vmem:[%s3017 + $0x98] sm:$0xff]
        %v3032 = vld [vmem:[%s3017 + $0xa8] sm:$0xff]
        %v3033 = vld [vmem:[%s3017 + $0xb0] sm:$0xff]
        %v3034 = vld [vmem:[%s3017 + $0xc0] sm:$0xff]
        %v3035 = vld [vmem:[%s3017 + $0xc8] sm:$0xff]
        %v3036 = vld [vmem:[%s3017 + $0xd8] sm:$0xff]
        %v3037 = vld [vmem:[%s3017 + $0xe0] sm:$0xff]
        %v3038 = vld [vmem:[%s3017 + $0xf0] sm:$0xff]
        %v3039 = vld [vmem:[%s3017 + $0xf8] sm:$0xff]
        %v3040 = vld [vmem:[%s3017 + $0x108] sm:$0xff]
        %v3041 = vld [vmem:[%s3017 + $0x110] sm:$0xff]
        %v3042 = vld [vmem:[%s3017 + $0x120] sm:$0xff]
        %v3043 = vld [vmem:[%s3017 + $0x128] sm:$0xff]
        %v3044 = vld [vmem:[%s3017 + $0x138] sm:$0xff]
        %v3045 = vld [vmem:[%s3017 + $0x140] sm:$0xff]
        %v3046 = vld [vmem:[%s3017 + $0x150] sm:$0xff]
        %v3047 = vld [vmem:[%s3017 + $0x158] sm:$0xff]
        %v3048 = vld [vmem:[%s3017 + $0x168] sm:$0xff]
        %v3049 = vld [vmem:[%s3017 + $0x170] sm:$0xff]
        %s3050 = scalar_lea.vmem [#allocation7], 48
        %v3051 = vld [vmem:[%s3050] sm:$0xff]
        %v3053 = vsel %vm274, %v3018, 0
        %v3056 = vsel %vm274, %v3019, 0
        %v3059 = vsel %vm274, %v3020, 0
        %v3062 = vsel %vm274, %v3021, 0
        %v3065 = vsel %vm274, %v3022, 0
        %v3068 = vsel %vm274, %v3023, 0
        %v3071 = vsel %vm274, %v3024, 0
        %v3074 = vsel %vm274, %v3025, 0
        %v3077 = vsel %vm274, %v3026, 0
        %v3080 = vsel %vm274, %v3027, 0
        %v3083 = vsel %vm274, %v3028, 0
        %v3086 = vsel %vm274, %v3029, 0
        %v3089 = vsel %vm274, %v3030, 0
        %v3092 = vsel %vm274, %v3031, 0
        %v3095 = vsel %vm274, %v3032, 0
        %v3098 = vsel %vm274, %v3033, 0
        %v3101 = vsel %vm274, %v3034, 0
        %v3104 = vsel %vm274, %v3035, 0
        %v3107 = vsel %vm274, %v3036, 0
        %v3110 = vsel %vm274, %v3037, 0
        %v3113 = vsel %vm274, %v3038, 0
        %v3116 = vsel %vm274, %v3039, 0
        %v3119 = vsel %vm274, %v3040, 0
        %v3122 = vsel %vm274, %v3041, 0
        %v3125 = vsel %vm274, %v3042, 0
        %v3128 = vsel %vm274, %v3043, 0
        %v3131 = vsel %vm274, %v3044, 0
        %v3134 = vsel %vm274, %v3045, 0
        %v3137 = vsel %vm274, %v3046, 0
        %v3140 = vsel %vm274, %v3047, 0
        %v3143 = vsel %vm274, %v3048, 0
        %v3146 = vsel %vm274, %v3049, 0
        %3148 = vmatprep.subr.mxu0 0.0
        %3149 = vmatpush1.msra.mxu0 %v3051
        %3150 = vmatprep.subr.mxu0 0.0
        %3151 = vmatpush1.msra.mxu0 0.0
        %3152 = vmatprep.subr.mxu0 0.0
        %3153 = vmatpush1.msra.mxu0 0.0
        %3154 = vmatprep.subr.mxu0 0.0
        %3155 = vmatpush1.msra.mxu0 0.0
        %3156 = vmatprep.subr.mxu0 0.0
        %3157 = vmatpush1.msra.mxu0 0.0
        %3158 = vmatprep.subr.mxu0 0.0
        %3159 = vmatpush1.msra.mxu0 0.0
        %3160 = vmatprep.subr.mxu0 0.0
        %3161 = vmatpush1.msra.mxu0 0.0
        %3162 = vmatprep.subr.mxu0 0.0
        %3163 = vmatpush1.msra.mxu0 0.0
        %3164 = vmatprep.subr.mxu0 0.0
        %3165 = vmatpush1.msra.mxu0 0.0
        %3166 = vmatprep.subr.mxu0 0.0
        %3167 = vmatpush1.msra.mxu0 0.0
        %3168 = vmatprep.subr.mxu0 0.0
        %3169 = vmatpush1.msra.mxu0 0.0
        %3170 = vmatprep.subr.mxu0 0.0
        %3171 = vmatpush1.msra.mxu0 0.0
        %3172 = vmatprep.subr.mxu0 0.0
        %3173 = vmatpush1.msra.mxu0 0.0
        %3174 = vmatprep.subr.mxu0 0.0
        %3175 = vmatpush1.msra.mxu0 0.0
        %3176 = vmatprep.subr.mxu0 0.0
        %3177 = vmatpush1.msra.mxu0 0.0
        %3178 = vmatprep.subr.mxu0 0.0
        %3179 = vmatpush1.msra.mxu0 0.0
        %3180 = vmatprep.subr.mxu0 0.0
        %3181 = vmatpush1.msra.mxu0 0.0
        %3182 = vmatprep.subr.mxu0 0.0
        %3183 = vmatpush1.msra.mxu0 0.0
        %3184 = vmatprep.subr.mxu0 0.0
        %3185 = vmatpush1.msra.mxu0 0.0
        %3186 = vmatprep.subr.mxu0 0.0
        %3187 = vmatpush1.msra.mxu0 0.0
        %3188 = vmatprep.subr.mxu0 0.0
        %3189 = vmatpush1.msra.mxu0 0.0
        %3190 = vmatprep.subr.mxu0 0.0
        %3191 = vmatpush1.msra.mxu0 0.0
        %3192 = vmatprep.subr.mxu0 0.0
        %3193 = vmatpush1.msra.mxu0 0.0
        %3194 = vmatprep.subr.mxu0 0.0
        %3195 = vmatpush1.msra.mxu0 0.0
        %3196 = vmatprep.subr.mxu0 0.0
        %3197 = vmatpush1.msra.mxu0 0.0
        %3198 = vmatprep.subr.mxu0 0.0
        %3199 = vmatpush1.msra.mxu0 0.0
        %3200 = vmatprep.subr.mxu0 0.0
        %3201 = vmatpush1.msra.mxu0 0.0
        %3202 = vmatprep.subr.mxu0 0.0
        %3203 = vmatpush1.msra.mxu0 0.0
        %3204 = vmatprep.subr.mxu0 0.0
        %3205 = vmatpush1.msra.mxu0 0.0
        %3206 = vmatprep.subr.mxu0 0.0
        %3207 = vmatpush1.msra.mxu0 0.0
        %3208 = vmatprep.subr.mxu0 0.0
        %3209 = vmatpush1.msra.mxu0 0.0
        %3210 = vmatprep.subr.mxu0 0.0
        %3211 = vmatpush1.msra.mxu0 0.0
        %3212 = vmatprep.mubr.f32.mxu0 0.0
        %3213 = vmatmul.mubr.f32.gmra.mrb[0].mxu0 %v3053
        %v3214 = vpop.f32.mrb[0].mxu0
        %v3215 = vadd.f32 0.0, %v3214
        %v3216 = vpop.f32.mrb[0].mxu0
        %3217 = vmatprep.mubr.f32.mxu0 0.0
        %3218 = vmatmul.mubr.f32.gmra.mrb[0].mxu0 %v3056
        %v3219 = vpop.f32.mrb[0].mxu0
        %v3220 = vadd.f32 0.0, %v3219
        %v3221 = vpop.f32.mrb[0].mxu0
        %3222 = vmatprep.mubr.f32.mxu0 0.0
        %3223 = vmatmul.mubr.f32.gmra.mrb[0].mxu0 %v3059
        %v3224 = vpop.f32.mrb[0].mxu0
        %v3225 = vadd.f32 0.0, %v3224
        %v3226 = vpop.f32.mrb[0].mxu0
        %3227 = vmatprep.mubr.f32.mxu0 0.0
        %3228 = vmatmul.mubr.f32.gmra.mrb[0].mxu0 %v3062
        %v3229 = vpop.f32.mrb[0].mxu0
        %v3230 = vadd.f32 0.0, %v3229
        %v3231 = vpop.f32.mrb[0].mxu0
        %3232 = vmatprep.mubr.f32.mxu0 0.0
        %3233 = vmatmul.mubr.f32.gmra.mrb[0].mxu0 %v3065
        %v3234 = vpop.f32.mrb[0].mxu0
        %v3235 = vadd.f32 0.0, %v3234
        %v3236 = vpop.f32.mrb[0].mxu0
        %3237 = vmatprep.mubr.f32.mxu0 0.0
        %3238 = vmatmul.mubr.f32.gmra.mrb[0].mxu0 %v3068
        %v3239 = vpop.f32.mrb[0].mxu0
        %v3240 = vadd.f32 0.0, %v3239
        %v3241 = vpop.f32.mrb[0].mxu0
        %3242 = vmatprep.mubr.f32.mxu0 0.0
        %3243 = vmatmul.mubr.f32.gmra.mrb[0].mxu0 %v3071
        %v3244 = vpop.f32.mrb[0].mxu0
        %v3245 = vadd.f32 0.0, %v3244
        %v3246 = vpop.f32.mrb[0].mxu0
        %3247 = vmatprep.mubr.f32.mxu0 0.0
        %3248 = vmatmul.mubr.f32.gmra.mrb[0].mxu0 %v3074
        %v3249 = vpop.f32.mrb[0].mxu0
        %v3250 = vadd.f32 0.0, %v3249
        %v3251 = vpop.f32.mrb[0].mxu0
        %3252 = vmatprep.mubr.f32.mxu0 0.0
        %3253 = vmatmul.mubr.f32.gmra.mrb[0].mxu0 %v3077
        %v3254 = vpop.f32.mrb[0].mxu0
        %v3255 = vadd.f32 0.0, %v3254
        %v3256 = vpop.f32.mrb[0].mxu0
        %3257 = vmatprep.mubr.f32.mxu0 0.0
        %3258 = vmatmul.mubr.f32.gmra.mrb[0].mxu0 %v3080
        %v3259 = vpop.f32.mrb[0].mxu0
        %v3260 = vadd.f32 0.0, %v3259
        %v3261 = vpop.f32.mrb[0].mxu0
        %3262 = vmatprep.mubr.f32.mxu0 0.0
        %3263 = vmatmul.mubr.f32.gmra.mrb[0].mxu0 %v3083
        %v3264 = vpop.f32.mrb[0].mxu0
        %v3265 = vadd.f32 0.0, %v3264
        %v3266 = vpop.f32.mrb[0].mxu0
        %3267 = vmatprep.mubr.f32.mxu0 0.0
        %3268 = vmatmul.mubr.f32.gmra.mrb[0].mxu0 %v3086
        %v3269 = vpop.f32.mrb[0].mxu0
        %v3270 = vadd.f32 0.0, %v3269
        %v3271 = vpop.f32.mrb[0].mxu0
        %3272 = vmatprep.mubr.f32.mxu0 0.0
        %3273 = vmatmul.mubr.f32.gmra.mrb[0].mxu0 %v3089
        %v3274 = vpop.f32.mrb[0].mxu0
        %v3275 = vadd.f32 0.0, %v3274
        %v3276 = vpop.f32.mrb[0].mxu0
        %3277 = vmatprep.mubr.f32.mxu0 0.0
        %3278 = vmatmul.mubr.f32.gmra.mrb[0].mxu0 %v3092
        %v3279 = vpop.f32.mrb[0].mxu0
        %v3280 = vadd.f32 0.0, %v3279
        %v3281 = vpop.f32.mrb[0].mxu0
        %3282 = vmatprep.mubr.f32.mxu0 0.0
        %3283 = vmatmul.mubr.f32.gmra.mrb[0].mxu0 %v3095
        %v3284 = vpop.f32.mrb[0].mxu0
        %v3285 = vadd.f32 0.0, %v3284
        %v3286 = vpop.f32.mrb[0].mxu0
        %3287 = vmatprep.mubr.f32.mxu0 0.0
        %3288 = vmatmul.mubr.f32.gmra.mrb[0].mxu0 %v3098
        %v3289 = vpop.f32.mrb[0].mxu0
        %v3290 = vadd.f32 0.0, %v3289
        %v3291 = vpop.f32.mrb[0].mxu0
        %3292 = vmatprep.mubr.f32.mxu0 0.0
        %3293 = vmatmul.mubr.f32.gmra.mrb[0].mxu0 %v3101
        %v3294 = vpop.f32.mrb[0].mxu0
        %v3295 = vadd.f32 0.0, %v3294
        %v3296 = vpop.f32.mrb[0].mxu0
        %3297 = vmatprep.mubr.f32.mxu0 0.0
        %3298 = vmatmul.mubr.f32.gmra.mrb[0].mxu0 %v3104
        %v3299 = vpop.f32.mrb[0].mxu0
        %v3300 = vadd.f32 0.0, %v3299
        %v3301 = vpop.f32.mrb[0].mxu0
        %3302 = vmatprep.mubr.f32.mxu0 0.0
        %3303 = vmatmul.mubr.f32.gmra.mrb[0].mxu0 %v3107
        %v3304 = vpop.f32.mrb[0].mxu0
        %v3305 = vadd.f32 0.0, %v3304
        %v3306 = vpop.f32.mrb[0].mxu0
        %3307 = vmatprep.mubr.f32.mxu0 0.0
        %3308 = vmatmul.mubr.f32.gmra.mrb[0].mxu0 %v3110
        %v3309 = vpop.f32.mrb[0].mxu0
        %v3310 = vadd.f32 0.0, %v3309
        %v3311 = vpop.f32.mrb[0].mxu0
        %3312 = vmatprep.mubr.f32.mxu0 0.0
        %3313 = vmatmul.mubr.f32.gmra.mrb[0].mxu0 %v3113
        %v3314 = vpop.f32.mrb[0].mxu0
        %v3315 = vadd.f32 0.0, %v3314
        %v3316 = vpop.f32.mrb[0].mxu0
        %3317 = vmatprep.mubr.f32.mxu0 0.0
        %3318 = vmatmul.mubr.f32.gmra.mrb[0].mxu0 %v3116
        %v3319 = vpop.f32.mrb[0].mxu0
        %v3320 = vadd.f32 0.0, %v3319
        %v3321 = vpop.f32.mrb[0].mxu0
        %3322 = vmatprep.mubr.f32.mxu0 0.0
        %3323 = vmatmul.mubr.f32.gmra.mrb[0].mxu0 %v3119
        %v3324 = vpop.f32.mrb[0].mxu0
        %v3325 = vadd.f32 0.0, %v3324
        %v3326 = vpop.f32.mrb[0].mxu0
        %3327 = vmatprep.mubr.f32.mxu0 0.0
        %3328 = vmatmul.mubr.f32.gmra.mrb[0].mxu0 %v3122
        %v3329 = vpop.f32.mrb[0].mxu0
        %v3330 = vadd.f32 0.0, %v3329
        %v3331 = vpop.f32.mrb[0].mxu0
        %3332 = vmatprep.mubr.f32.mxu0 0.0
        %3333 = vmatmul.mubr.f32.gmra.mrb[0].mxu0 %v3125
        %v3334 = vpop.f32.mrb[0].mxu0
        %v3335 = vadd.f32 0.0, %v3334
        %v3336 = vpop.f32.mrb[0].mxu0
        %3337 = vmatprep.mubr.f32.mxu0 0.0
        %3338 = vmatmul.mubr.f32.gmra.mrb[0].mxu0 %v3128
        %v3339 = vpop.f32.mrb[0].mxu0
        %v3340 = vadd.f32 0.0, %v3339
        %v3341 = vpop.f32.mrb[0].mxu0
        %3342 = vmatprep.mubr.f32.mxu0 0.0
        %3343 = vmatmul.mubr.f32.gmra.mrb[0].mxu0 %v3131
        %v3344 = vpop.f32.mrb[0].mxu0
        %v3345 = vadd.f32 0.0, %v3344
        %v3346 = vpop.f32.mrb[0].mxu0
        %3347 = vmatprep.mubr.f32.mxu0 0.0
        %3348 = vmatmul.mubr.f32.gmra.mrb[0].mxu0 %v3134
        %v3349 = vpop.f32.mrb[0].mxu0
        %v3350 = vadd.f32 0.0, %v3349
        %v3351 = vpop.f32.mrb[0].mxu0
        %3352 = vmatprep.mubr.f32.mxu0 0.0
        %3353 = vmatmul.mubr.f32.gmra.mrb[0].mxu0 %v3137
        %v3354 = vpop.f32.mrb[0].mxu0
        %v3355 = vadd.f32 0.0, %v3354
        %v3356 = vpop.f32.mrb[0].mxu0
        %3357 = vmatprep.mubr.f32.mxu0 0.0
        %3358 = vmatmul.mubr.f32.gmra.mrb[0].mxu0 %v3140
        %v3359 = vpop.f32.mrb[0].mxu0
        %v3360 = vadd.f32 0.0, %v3359
        %v3361 = vpop.f32.mrb[0].mxu0
        %3362 = vmatprep.mubr.f32.mxu0 0.0
        %3363 = vmatmul.mubr.f32.gmra.mrb[0].mxu0 %v3143
        %v3364 = vpop.f32.mrb[0].mxu0
        %v3365 = vadd.f32 0.0, %v3364
        %v3366 = vpop.f32.mrb[0].mxu0
        %3367 = vmatprep.mubr.f32.mxu0 0.0
        %3368 = vmatmul.mubr.f32.gmra.mrb[0].mxu0 %v3146
        %v3369 = vpop.f32.mrb[0].mxu0
        %v3370 = vadd.f32 0.0, %v3369
        %v3371 = vpop.f32.mrb[0].mxu0
        %3372 = vdwg.mxu0
        %v3373 = vadd.f32 %v2985, %v3215
        %v3374 = vadd.f32 %v2986, %v3220
        %v3375 = vadd.f32 %v2987, %v3225
        %v3376 = vadd.f32 %v2988, %v3230
        %v3377 = vadd.f32 %v2989, %v3235
        %v3378 = vadd.f32 %v2990, %v3240
        %v3379 = vadd.f32 %v2991, %v3245
        %v3380 = vadd.f32 %v2992, %v3250
        %v3381 = vadd.f32 %v2993, %v3255
        %v3382 = vadd.f32 %v2994, %v3260
        %v3383 = vadd.f32 %v2995, %v3265
        %v3384 = vadd.f32 %v2996, %v3270
        %v3385 = vadd.f32 %v2997, %v3275
        %v3386 = vadd.f32 %v2998, %v3280
        %v3387 = vadd.f32 %v2999, %v3285
        %v3388 = vadd.f32 %v3000, %v3290
        %v3389 = vadd.f32 %v3001, %v3295
        %v3390 = vadd.f32 %v3002, %v3300
        %v3391 = vadd.f32 %v3003, %v3305
        %v3392 = vadd.f32 %v3004, %v3310
        %v3393 = vadd.f32 %v3005, %v3315
        %v3394 = vadd.f32 %v3006, %v3320
        %v3395 = vadd.f32 %v3007, %v3325
        %v3396 = vadd.f32 %v3008, %v3330
        %v3397 = vadd.f32 %v3009, %v3335
        %v3398 = vadd.f32 %v3010, %v3340
        %v3399 = vadd.f32 %v3011, %v3345
        %v3400 = vadd.f32 %v3012, %v3350
        %v3401 = vadd.f32 %v3013, %v3355
        %v3402 = vadd.f32 %v3014, %v3360
        %v3403 = vadd.f32 %v3015, %v3365
        %v3404 = vadd.f32 %v3016, %v3370
        %v3405 = vld [vmem:[%s3017 + $0x1] sm:$0xff]
        %v3406 = vld [vmem:[%s3017 + $0x9] sm:$0xff]
        %v3407 = vld [vmem:[%s3017 + $0x19] sm:$0xff]
        %v3408 = vld [vmem:[%s3017 + $0x21] sm:$0xff]
        %v3409 = vld [vmem:[%s3017 + $0x31] sm:$0xff]
        %v3410 = vld [vmem:[%s3017 + $0x39] sm:$0xff]
        %v3411 = vld [vmem:[%s3017 + $0x49] sm:$0xff]
        %v3412 = vld [vmem:[%s3017 + $0x51] sm:$0xff]
        %v3413 = vld [vmem:[%s3017 + $0x61] sm:$0xff]
        %v3414 = vld [vmem:[%s3017 + $0x69] sm:$0xff]
        %v3415 = vld [vmem:[%s3017 + $0x79] sm:$0xff]
        %v3416 = vld [vmem:[%s3017 + $0x81] sm:$0xff]
        %v3417 = vld [vmem:[%s3017 + $0x91] sm:$0xff]
        %v3418 = vld [vmem:[%s3017 + $0x99] sm:$0xff]
        %v3419 = vld [vmem:[%s3017 + $0xa9] sm:$0xff]
        %v3420 = vld [vmem:[%s3017 + $0xb1] sm:$0xff]
        %v3421 = vld [vmem:[%s3017 + $0xc1] sm:$0xff]
        %v3422 = vld [vmem:[%s3017 + $0xc9] sm:$0xff]
        %v3423 = vld [vmem:[%s3017 + $0xd9] sm:$0xff]
        %v3424 = vld [vmem:[%s3017 + $0xe1] sm:$0xff]
        %v3425 = vld [vmem:[%s3017 + $0xf1] sm:$0xff]
        %v3426 = vld [vmem:[%s3017 + $0xf9] sm:$0xff]
        %v3427 = vld [vmem:[%s3017 + $0x109] sm:$0xff]
        %v3428 = vld [vmem:[%s3017 + $0x111] sm:$0xff]
        %v3429 = vld [vmem:[%s3017 + $0x121] sm:$0xff]
        %v3430 = vld [vmem:[%s3017 + $0x129] sm:$0xff]
        %v3431 = vld [vmem:[%s3017 + $0x139] sm:$0xff]
        %v3432 = vld [vmem:[%s3017 + $0x141] sm:$0xff]
        %v3433 = vld [vmem:[%s3017 + $0x151] sm:$0xff]
        %v3434 = vld [vmem:[%s3017 + $0x159] sm:$0xff]
        %v3435 = vld [vmem:[%s3017 + $0x169] sm:$0xff]
        %v3436 = vld [vmem:[%s3017 + $0x171] sm:$0xff]
        %s3437 = scalar_lea.vmem [#allocation7], 56
        %v3438 = vld [vmem:[%s3437] sm:$0xff]
        %v3440 = vsel %vm274, %v3405, 0
        %v3443 = vsel %vm274, %v3406, 0
        %v3446 = vsel %vm274, %v3407, 0
        %v3449 = vsel %vm274, %v3408, 0
        %v3452 = vsel %vm274, %v3409, 0
        %v3455 = vsel %vm274, %v3410, 0
        %v3458 = vsel %vm274, %v3411, 0
        %v3461 = vsel %vm274, %v3412, 0
        %v3464 = vsel %vm274, %v3413, 0
        %v3467 = vsel %vm274, %v3414, 0
        %v3470 = vsel %vm274, %v3415, 0
        %v3473 = vsel %vm274, %v3416, 0
        %v3476 = vsel %vm274, %v3417, 0
        %v3479 = vsel %vm274, %v3418, 0
        %v3482 = vsel %vm274, %v3419, 0
        %v3485 = vsel %vm274, %v3420, 0
        %v3488 = vsel %vm274, %v3421, 0
        %v3491 = vsel %vm274, %v3422, 0
        %v3494 = vsel %vm274, %v3423, 0
        %v3497 = vsel %vm274, %v3424, 0
        %v3500 = vsel %vm274, %v3425, 0
        %v3503 = vsel %vm274, %v3426, 0
        %v3506 = vsel %vm274, %v3427, 0
        %v3509 = vsel %vm274, %v3428, 0
        %v3512 = vsel %vm274, %v3429, 0
        %v3515 = vsel %vm274, %v3430, 0
        %v3518 = vsel %vm274, %v3431, 0
        %v3521 = vsel %vm274, %v3432, 0
        %v3524 = vsel %vm274, %v3433, 0
        %v3527 = vsel %vm274, %v3434, 0
        %v3530 = vsel %vm274, %v3435, 0
        %v3533 = vsel %vm274, %v3436, 0
        %3535 = vmatprep.subr.mxu0 0.0
        %3536 = vmatpush1.msra.mxu0 %v3438
        %3537 = vmatprep.subr.mxu0 0.0
        %3538 = vmatpush1.msra.mxu0 0.0
        %3539 = vmatprep.subr.mxu0 0.0
        %3540 = vmatpush1.msra.mxu0 0.0
        %3541 = vmatprep.subr.mxu0 0.0
        %3542 = vmatpush1.msra.mxu0 0.0
        %3543 = vmatprep.subr.mxu0 0.0
        %3544 = vmatpush1.msra.mxu0 0.0
        %3545 = vmatprep.subr.mxu0 0.0
        %3546 = vmatpush1.msra.mxu0 0.0
        %3547 = vmatprep.subr.mxu0 0.0
        %3548 = vmatpush1.msra.mxu0 0.0
        %3549 = vmatprep.subr.mxu0 0.0
        %3550 = vmatpush1.msra.mxu0 0.0
        %3551 = vmatprep.subr.mxu0 0.0
        %3552 = vmatpush1.msra.mxu0 0.0
        %3553 = vmatprep.subr.mxu0 0.0
        %3554 = vmatpush1.msra.mxu0 0.0
        %3555 = vmatprep.subr.mxu0 0.0
        %3556 = vmatpush1.msra.mxu0 0.0
        %3557 = vmatprep.subr.mxu0 0.0
        %3558 = vmatpush1.msra.mxu0 0.0
        %3559 = vmatprep.subr.mxu0 0.0
        %3560 = vmatpush1.msra.mxu0 0.0
        %3561 = vmatprep.subr.mxu0 0.0
        %3562 = vmatpush1.msra.mxu0 0.0
        %3563 = vmatprep.subr.mxu0 0.0
        %3564 = vmatpush1.msra.mxu0 0.0
        %3565 = vmatprep.subr.mxu0 0.0
        %3566 = vmatpush1.msra.mxu0 0.0
        %3567 = vmatprep.subr.mxu0 0.0
        %3568 = vmatpush1.msra.mxu0 0.0
        %3569 = vmatprep.subr.mxu0 0.0
        %3570 = vmatpush1.msra.mxu0 0.0
        %3571 = vmatprep.subr.mxu0 0.0
        %3572 = vmatpush1.msra.mxu0 0.0
        %3573 = vmatprep.subr.mxu0 0.0
        %3574 = vmatpush1.msra.mxu0 0.0
        %3575 = vmatprep.subr.mxu0 0.0
        %3576 = vmatpush1.msra.mxu0 0.0
        %3577 = vmatprep.subr.mxu0 0.0
        %3578 = vmatpush1.msra.mxu0 0.0
        %3579 = vmatprep.subr.mxu0 0.0
        %3580 = vmatpush1.msra.mxu0 0.0
        %3581 = vmatprep.subr.mxu0 0.0
        %3582 = vmatpush1.msra.mxu0 0.0
        %3583 = vmatprep.subr.mxu0 0.0
        %3584 = vmatpush1.msra.mxu0 0.0
        %3585 = vmatprep.subr.mxu0 0.0
        %3586 = vmatpush1.msra.mxu0 0.0
        %3587 = vmatprep.subr.mxu0 0.0
        %3588 = vmatpush1.msra.mxu0 0.0
        %3589 = vmatprep.subr.mxu0 0.0
        %3590 = vmatpush1.msra.mxu0 0.0
        %3591 = vmatprep.subr.mxu0 0.0
        %3592 = vmatpush1.msra.mxu0 0.0
        %3593 = vmatprep.subr.mxu0 0.0
        %3594 = vmatpush1.msra.mxu0 0.0
        %3595 = vmatprep.subr.mxu0 0.0
        %3596 = vmatpush1.msra.mxu0 0.0
        %3597 = vmatprep.subr.mxu0 0.0
        %3598 = vmatpush1.msra.mxu0 0.0
        %3599 = vmatprep.mubr.f32.mxu0 0.0
        %3600 = vmatmul.mubr.f32.gmra.mrb[0].mxu0 %v3440
        %v3601 = vpop.f32.mrb[0].mxu0
        %v3602 = vadd.f32 0.0, %v3601
        %v3603 = vpop.f32.mrb[0].mxu0
        %3604 = vmatprep.mubr.f32.mxu0 0.0
        %3605 = vmatmul.mubr.f32.gmra.mrb[0].mxu0 %v3443
        %v3606 = vpop.f32.mrb[0].mxu0
        %v3607 = vadd.f32 0.0, %v3606
        %v3608 = vpop.f32.mrb[0].mxu0
        %3609 = vmatprep.mubr.f32.mxu0 0.0
        %3610 = vmatmul.mubr.f32.gmra.mrb[0].mxu0 %v3446
        %v3611 = vpop.f32.mrb[0].mxu0
        %v3612 = vadd.f32 0.0, %v3611
        %v3613 = vpop.f32.mrb[0].mxu0
        %3614 = vmatprep.mubr.f32.mxu0 0.0
        %3615 = vmatmul.mubr.f32.gmra.mrb[0].mxu0 %v3449
        %v3616 = vpop.f32.mrb[0].mxu0
        %v3617 = vadd.f32 0.0, %v3616
        %v3618 = vpop.f32.mrb[0].mxu0
        %3619 = vmatprep.mubr.f32.mxu0 0.0
        %3620 = vmatmul.mubr.f32.gmra.mrb[0].mxu0 %v3452
        %v3621 = vpop.f32.mrb[0].mxu0
        %v3622 = vadd.f32 0.0, %v3621
        %v3623 = vpop.f32.mrb[0].mxu0
        %3624 = vmatprep.mubr.f32.mxu0 0.0
        %3625 = vmatmul.mubr.f32.gmra.mrb[0].mxu0 %v3455
        %v3626 = vpop.f32.mrb[0].mxu0
        %v3627 = vadd.f32 0.0, %v3626
        %v3628 = vpop.f32.mrb[0].mxu0
        %3629 = vmatprep.mubr.f32.mxu0 0.0
        %3630 = vmatmul.mubr.f32.gmra.mrb[0].mxu0 %v3458
        %v3631 = vpop.f32.mrb[0].mxu0
        %v3632 = vadd.f32 0.0, %v3631
        %v3633 = vpop.f32.mrb[0].mxu0
        %3634 = vmatprep.mubr.f32.mxu0 0.0
        %3635 = vmatmul.mubr.f32.gmra.mrb[0].mxu0 %v3461
        %v3636 = vpop.f32.mrb[0].mxu0
        %v3637 = vadd.f32 0.0, %v3636
        %v3638 = vpop.f32.mrb[0].mxu0
        %3639 = vmatprep.mubr.f32.mxu0 0.0
        %3640 = vmatmul.mubr.f32.gmra.mrb[0].mxu0 %v3464
        %v3641 = vpop.f32.mrb[0].mxu0
        %v3642 = vadd.f32 0.0, %v3641
        %v3643 = vpop.f32.mrb[0].mxu0
        %3644 = vmatprep.mubr.f32.mxu0 0.0
        %3645 = vmatmul.mubr.f32.gmra.mrb[0].mxu0 %v3467
        %v3646 = vpop.f32.mrb[0].mxu0
        %v3647 = vadd.f32 0.0, %v3646
        %v3648 = vpop.f32.mrb[0].mxu0
        %3649 = vmatprep.mubr.f32.mxu0 0.0
        %3650 = vmatmul.mubr.f32.gmra.mrb[0].mxu0 %v3470
        %v3651 = vpop.f32.mrb[0].mxu0
        %v3652 = vadd.f32 0.0, %v3651
        %v3653 = vpop.f32.mrb[0].mxu0
        %3654 = vmatprep.mubr.f32.mxu0 0.0
        %3655 = vmatmul.mubr.f32.gmra.mrb[0].mxu0 %v3473
        %v3656 = vpop.f32.mrb[0].mxu0
        %v3657 = vadd.f32 0.0, %v3656
        %v3658 = vpop.f32.mrb[0].mxu0
        %3659 = vmatprep.mubr.f32.mxu0 0.0
        %3660 = vmatmul.mubr.f32.gmra.mrb[0].mxu0 %v3476
        %v3661 = vpop.f32.mrb[0].mxu0
        %v3662 = vadd.f32 0.0, %v3661
        %v3663 = vpop.f32.mrb[0].mxu0
        %3664 = vmatprep.mubr.f32.mxu0 0.0
        %3665 = vmatmul.mubr.f32.gmra.mrb[0].mxu0 %v3479
        %v3666 = vpop.f32.mrb[0].mxu0
        %v3667 = vadd.f32 0.0, %v3666
        %v3668 = vpop.f32.mrb[0].mxu0
        %3669 = vmatprep.mubr.f32.mxu0 0.0
        %3670 = vmatmul.mubr.f32.gmra.mrb[0].mxu0 %v3482
        %v3671 = vpop.f32.mrb[0].mxu0
        %v3672 = vadd.f32 0.0, %v3671
        %v3673 = vpop.f32.mrb[0].mxu0
        %3674 = vmatprep.mubr.f32.mxu0 0.0
        %3675 = vmatmul.mubr.f32.gmra.mrb[0].mxu0 %v3485
        %v3676 = vpop.f32.mrb[0].mxu0
        %v3677 = vadd.f32 0.0, %v3676
        %v3678 = vpop.f32.mrb[0].mxu0
        %3679 = vmatprep.mubr.f32.mxu0 0.0
        %3680 = vmatmul.mubr.f32.gmra.mrb[0].mxu0 %v3488
        %v3681 = vpop.f32.mrb[0].mxu0
        %v3682 = vadd.f32 0.0, %v3681
        %v3683 = vpop.f32.mrb[0].mxu0
        %3684 = vmatprep.mubr.f32.mxu0 0.0
        %3685 = vmatmul.mubr.f32.gmra.mrb[0].mxu0 %v3491
        %v3686 = vpop.f32.mrb[0].mxu0
        %v3687 = vadd.f32 0.0, %v3686
        %v3688 = vpop.f32.mrb[0].mxu0
        %3689 = vmatprep.mubr.f32.mxu0 0.0
        %3690 = vmatmul.mubr.f32.gmra.mrb[0].mxu0 %v3494
        %v3691 = vpop.f32.mrb[0].mxu0
        %v3692 = vadd.f32 0.0, %v3691
        %v3693 = vpop.f32.mrb[0].mxu0
        %3694 = vmatprep.mubr.f32.mxu0 0.0
        %3695 = vmatmul.mubr.f32.gmra.mrb[0].mxu0 %v3497
        %v3696 = vpop.f32.mrb[0].mxu0
        %v3697 = vadd.f32 0.0, %v3696
        %v3698 = vpop.f32.mrb[0].mxu0
        %3699 = vmatprep.mubr.f32.mxu0 0.0
        %3700 = vmatmul.mubr.f32.gmra.mrb[0].mxu0 %v3500
        %v3701 = vpop.f32.mrb[0].mxu0
        %v3702 = vadd.f32 0.0, %v3701
        %v3703 = vpop.f32.mrb[0].mxu0
        %3704 = vmatprep.mubr.f32.mxu0 0.0
        %3705 = vmatmul.mubr.f32.gmra.mrb[0].mxu0 %v3503
        %v3706 = vpop.f32.mrb[0].mxu0
        %v3707 = vadd.f32 0.0, %v3706
        %v3708 = vpop.f32.mrb[0].mxu0
        %3709 = vmatprep.mubr.f32.mxu0 0.0
        %3710 = vmatmul.mubr.f32.gmra.mrb[0].mxu0 %v3506
        %v3711 = vpop.f32.mrb[0].mxu0
        %v3712 = vadd.f32 0.0, %v3711
        %v3713 = vpop.f32.mrb[0].mxu0
        %3714 = vmatprep.mubr.f32.mxu0 0.0
        %3715 = vmatmul.mubr.f32.gmra.mrb[0].mxu0 %v3509
        %v3716 = vpop.f32.mrb[0].mxu0
        %v3717 = vadd.f32 0.0, %v3716
        %v3718 = vpop.f32.mrb[0].mxu0
        %3719 = vmatprep.mubr.f32.mxu0 0.0
        %3720 = vmatmul.mubr.f32.gmra.mrb[0].mxu0 %v3512
        %v3721 = vpop.f32.mrb[0].mxu0
        %v3722 = vadd.f32 0.0, %v3721
        %v3723 = vpop.f32.mrb[0].mxu0
        %3724 = vmatprep.mubr.f32.mxu0 0.0
        %3725 = vmatmul.mubr.f32.gmra.mrb[0].mxu0 %v3515
        %v3726 = vpop.f32.mrb[0].mxu0
        %v3727 = vadd.f32 0.0, %v3726
        %v3728 = vpop.f32.mrb[0].mxu0
        %3729 = vmatprep.mubr.f32.mxu0 0.0
        %3730 = vmatmul.mubr.f32.gmra.mrb[0].mxu0 %v3518
        %v3731 = vpop.f32.mrb[0].mxu0
        %v3732 = vadd.f32 0.0, %v3731
        %v3733 = vpop.f32.mrb[0].mxu0
        %3734 = vmatprep.mubr.f32.mxu0 0.0
        %3735 = vmatmul.mubr.f32.gmra.mrb[0].mxu0 %v3521
        %v3736 = vpop.f32.mrb[0].mxu0
        %v3737 = vadd.f32 0.0, %v3736
        %v3738 = vpop.f32.mrb[0].mxu0
        %3739 = vmatprep.mubr.f32.mxu0 0.0
        %3740 = vmatmul.mubr.f32.gmra.mrb[0].mxu0 %v3524
        %v3741 = vpop.f32.mrb[0].mxu0
        %v3742 = vadd.f32 0.0, %v3741
        %v3743 = vpop.f32.mrb[0].mxu0
        %3744 = vmatprep.mubr.f32.mxu0 0.0
        %3745 = vmatmul.mubr.f32.gmra.mrb[0].mxu0 %v3527
        %v3746 = vpop.f32.mrb[0].mxu0
        %v3747 = vadd.f32 0.0, %v3746
        %v3748 = vpop.f32.mrb[0].mxu0
        %3749 = vmatprep.mubr.f32.mxu0 0.0
        %3750 = vmatmul.mubr.f32.gmra.mrb[0].mxu0 %v3530
        %v3751 = vpop.f32.mrb[0].mxu0
        %v3752 = vadd.f32 0.0, %v3751
        %v3753 = vpop.f32.mrb[0].mxu0
        %3754 = vmatprep.mubr.f32.mxu0 0.0
        %3755 = vmatmul.mubr.f32.gmra.mrb[0].mxu0 %v3533
        %v3756 = vpop.f32.mrb[0].mxu0
        %v3757 = vadd.f32 0.0, %v3756
        %v3758 = vpop.f32.mrb[0].mxu0
        %3759 = vdwg.mxu0
        %v3760 = vadd.f32 %v3373, %v3602
        %v3761 = vadd.f32 %v3374, %v3607
        %v3762 = vadd.f32 %v3375, %v3612
        %v3763 = vadd.f32 %v3376, %v3617
        %v3764 = vadd.f32 %v3377, %v3622
        %v3765 = vadd.f32 %v3378, %v3627
        %v3766 = vadd.f32 %v3379, %v3632
        %v3767 = vadd.f32 %v3380, %v3637
        %v3768 = vadd.f32 %v3381, %v3642
        %v3769 = vadd.f32 %v3382, %v3647
        %v3770 = vadd.f32 %v3383, %v3652
        %v3771 = vadd.f32 %v3384, %v3657
        %v3772 = vadd.f32 %v3385, %v3662
        %v3773 = vadd.f32 %v3386, %v3667
        %v3774 = vadd.f32 %v3387, %v3672
        %v3775 = vadd.f32 %v3388, %v3677
        %v3776 = vadd.f32 %v3389, %v3682
        %v3777 = vadd.f32 %v3390, %v3687
        %v3778 = vadd.f32 %v3391, %v3692
        %v3779 = vadd.f32 %v3392, %v3697
        %v3780 = vadd.f32 %v3393, %v3702
        %v3781 = vadd.f32 %v3394, %v3707
        %v3782 = vadd.f32 %v3395, %v3712
        %v3783 = vadd.f32 %v3396, %v3717
        %v3784 = vadd.f32 %v3397, %v3722
        %v3785 = vadd.f32 %v3398, %v3727
        %v3786 = vadd.f32 %v3399, %v3732
        %v3787 = vadd.f32 %v3400, %v3737
        %v3788 = vadd.f32 %v3401, %v3742
        %v3789 = vadd.f32 %v3402, %v3747
        %v3790 = vadd.f32 %v3403, %v3752
        %v3791 = vadd.f32 %v3404, %v3757
        %v3792 = vld [vmem:[%s3017 + $0x2] sm:$0xff]
        %v3793 = vld [vmem:[%s3017 + $0xa] sm:$0xff]
        %v3794 = vld [vmem:[%s3017 + $0x1a] sm:$0xff]
        %v3795 = vld [vmem:[%s3017 + $0x22] sm:$0xff]
        %v3796 = vld [vmem:[%s3017 + $0x32] sm:$0xff]
        %v3797 = vld [vmem:[%s3017 + $0x3a] sm:$0xff]
        %v3798 = vld [vmem:[%s3017 + $0x4a] sm:$0xff]
        %v3799 = vld [vmem:[%s3017 + $0x52] sm:$0xff]
        %v3800 = vld [vmem:[%s3017 + $0x62] sm:$0xff]
        %v3801 = vld [vmem:[%s3017 + $0x6a] sm:$0xff]
        %v3802 = vld [vmem:[%s3017 + $0x7a] sm:$0xff]
        %v3803 = vld [vmem:[%s3017 + $0x82] sm:$0xff]
        %v3804 = vld [vmem:[%s3017 + $0x92] sm:$0xff]
        %v3805 = vld [vmem:[%s3017 + $0x9a] sm:$0xff]
        %v3806 = vld [vmem:[%s3017 + $0xaa] sm:$0xff]
        %v3807 = vld [vmem:[%s3017 + $0xb2] sm:$0xff]
        %v3808 = vld [vmem:[%s3017 + $0xc2] sm:$0xff]
        %v3809 = vld [vmem:[%s3017 + $0xca] sm:$0xff]
        %v3810 = vld [vmem:[%s3017 + $0xda] sm:$0xff]
        %v3811 = vld [vmem:[%s3017 + $0xe2] sm:$0xff]
        %v3812 = vld [vmem:[%s3017 + $0xf2] sm:$0xff]
        %v3813 = vld [vmem:[%s3017 + $0xfa] sm:$0xff]
        %v3814 = vld [vmem:[%s3017 + $0x10a] sm:$0xff]
        %v3815 = vld [vmem:[%s3017 + $0x112] sm:$0xff]
        %v3816 = vld [vmem:[%s3017 + $0x122] sm:$0xff]
        %v3817 = vld [vmem:[%s3017 + $0x12a] sm:$0xff]
        %v3818 = vld [vmem:[%s3017 + $0x13a] sm:$0xff]
        %v3819 = vld [vmem:[%s3017 + $0x142] sm:$0xff]
        %v3820 = vld [vmem:[%s3017 + $0x152] sm:$0xff]
        %v3821 = vld [vmem:[%s3017 + $0x15a] sm:$0xff]
        %v3822 = vld [vmem:[%s3017 + $0x16a] sm:$0xff]
        %v3823 = vld [vmem:[%s3017 + $0x172] sm:$0xff]
        %s3824 = scalar_lea.vmem [#allocation7], 64
        %v3825 = vld [vmem:[%s3824] sm:$0xff]
        %v3827 = vsel %vm274, %v3792, 0
        %v3830 = vsel %vm274, %v3793, 0
        %v3833 = vsel %vm274, %v3794, 0
        %v3836 = vsel %vm274, %v3795, 0
        %v3839 = vsel %vm274, %v3796, 0
        %v3842 = vsel %vm274, %v3797, 0
        %v3845 = vsel %vm274, %v3798, 0
        %v3848 = vsel %vm274, %v3799, 0
        %v3851 = vsel %vm274, %v3800, 0
        %v3854 = vsel %vm274, %v3801, 0
        %v3857 = vsel %vm274, %v3802, 0
        %v3860 = vsel %vm274, %v3803, 0
        %v3863 = vsel %vm274, %v3804, 0
        %v3866 = vsel %vm274, %v3805, 0
        %v3869 = vsel %vm274, %v3806, 0
        %v3872 = vsel %vm274, %v3807, 0
        %v3875 = vsel %vm274, %v3808, 0
        %v3878 = vsel %vm274, %v3809, 0
        %v3881 = vsel %vm274, %v3810, 0
        %v3884 = vsel %vm274, %v3811, 0
        %v3887 = vsel %vm274, %v3812, 0
        %v3890 = vsel %vm274, %v3813, 0
        %v3893 = vsel %vm274, %v3814, 0
        %v3896 = vsel %vm274, %v3815, 0
        %v3899 = vsel %vm274, %v3816, 0
        %v3902 = vsel %vm274, %v3817, 0
        %v3905 = vsel %vm274, %v3818, 0
        %v3908 = vsel %vm274, %v3819, 0
        %v3911 = vsel %vm274, %v3820, 0
        %v3914 = vsel %vm274, %v3821, 0
        %v3917 = vsel %vm274, %v3822, 0
        %v3920 = vsel %vm274, %v3823, 0
        %3922 = vmatprep.subr.mxu0 0.0
        %3923 = vmatpush1.msra.mxu0 %v3825
        %3924 = vmatprep.subr.mxu0 0.0
        %3925 = vmatpush1.msra.mxu0 0.0
        %3926 = vmatprep.subr.mxu0 0.0
        %3927 = vmatpush1.msra.mxu0 0.0
        %3928 = vmatprep.subr.mxu0 0.0
        %3929 = vmatpush1.msra.mxu0 0.0
        %3930 = vmatprep.subr.mxu0 0.0
        %3931 = vmatpush1.msra.mxu0 0.0
        %3932 = vmatprep.subr.mxu0 0.0
        %3933 = vmatpush1.msra.mxu0 0.0
        %3934 = vmatprep.subr.mxu0 0.0
        %3935 = vmatpush1.msra.mxu0 0.0
        %3936 = vmatprep.subr.mxu0 0.0
        %3937 = vmatpush1.msra.mxu0 0.0
        %3938 = vmatprep.subr.mxu0 0.0
        %3939 = vmatpush1.msra.mxu0 0.0
        %3940 = vmatprep.subr.mxu0 0.0
        %3941 = vmatpush1.msra.mxu0 0.0
        %3942 = vmatprep.subr.mxu0 0.0
        %3943 = vmatpush1.msra.mxu0 0.0
        %3944 = vmatprep.subr.mxu0 0.0
        %3945 = vmatpush1.msra.mxu0 0.0
        %3946 = vmatprep.subr.mxu0 0.0
        %3947 = vmatpush1.msra.mxu0 0.0
        %3948 = vmatprep.subr.mxu0 0.0
        %3949 = vmatpush1.msra.mxu0 0.0
        %3950 = vmatprep.subr.mxu0 0.0
        %3951 = vmatpush1.msra.mxu0 0.0
        %3952 = vmatprep.subr.mxu0 0.0
        %3953 = vmatpush1.msra.mxu0 0.0
        %3954 = vmatprep.subr.mxu0 0.0
        %3955 = vmatpush1.msra.mxu0 0.0
        %3956 = vmatprep.subr.mxu0 0.0
        %3957 = vmatpush1.msra.mxu0 0.0
        %3958 = vmatprep.subr.mxu0 0.0
        %3959 = vmatpush1.msra.mxu0 0.0
        %3960 = vmatprep.subr.mxu0 0.0
        %3961 = vmatpush1.msra.mxu0 0.0
        %3962 = vmatprep.subr.mxu0 0.0
        %3963 = vmatpush1.msra.mxu0 0.0
        %3964 = vmatprep.subr.mxu0 0.0
        %3965 = vmatpush1.msra.mxu0 0.0
        %3966 = vmatprep.subr.mxu0 0.0
        %3967 = vmatpush1.msra.mxu0 0.0
        %3968 = vmatprep.subr.mxu0 0.0
        %3969 = vmatpush1.msra.mxu0 0.0
        %3970 = vmatprep.subr.mxu0 0.0
        %3971 = vmatpush1.msra.mxu0 0.0
        %3972 = vmatprep.subr.mxu0 0.0
        %3973 = vmatpush1.msra.mxu0 0.0
        %3974 = vmatprep.subr.mxu0 0.0
        %3975 = vmatpush1.msra.mxu0 0.0
        %3976 = vmatprep.subr.mxu0 0.0
        %3977 = vmatpush1.msra.mxu0 0.0
        %3978 = vmatprep.subr.mxu0 0.0
        %3979 = vmatpush1.msra.mxu0 0.0
        %3980 = vmatprep.subr.mxu0 0.0
        %3981 = vmatpush1.msra.mxu0 0.0
        %3982 = vmatprep.subr.mxu0 0.0
        %3983 = vmatpush1.msra.mxu0 0.0
        %3984 = vmatprep.subr.mxu0 0.0
        %3985 = vmatpush1.msra.mxu0 0.0
        %3986 = vmatprep.mubr.f32.mxu0 0.0
        %3987 = vmatmul.mubr.f32.gmra.mrb[0].mxu0 %v3827
        %v3988 = vpop.f32.mrb[0].mxu0
        %v3989 = vadd.f32 0.0, %v3988
        %v3990 = vpop.f32.mrb[0].mxu0
        %3991 = vmatprep.mubr.f32.mxu0 0.0
        %3992 = vmatmul.mubr.f32.gmra.mrb[0].mxu0 %v3830
        %v3993 = vpop.f32.mrb[0].mxu0
        %v3994 = vadd.f32 0.0, %v3993
        %v3995 = vpop.f32.mrb[0].mxu0
        %3996 = vmatprep.mubr.f32.mxu0 0.0
        %3997 = vmatmul.mubr.f32.gmra.mrb[0].mxu0 %v3833
        %v3998 = vpop.f32.mrb[0].mxu0
        %v3999 = vadd.f32 0.0, %v3998
        %v4000 = vpop.f32.mrb[0].mxu0
        %4001 = vmatprep.mubr.f32.mxu0 0.0
        %4002 = vmatmul.mubr.f32.gmra.mrb[0].mxu0 %v3836
        %v4003 = vpop.f32.mrb[0].mxu0
        %v4004 = vadd.f32 0.0, %v4003
        %v4005 = vpop.f32.mrb[0].mxu0
        %4006 = vmatprep.mubr.f32.mxu0 0.0
        %4007 = vmatmul.mubr.f32.gmra.mrb[0].mxu0 %v3839
        %v4008 = vpop.f32.mrb[0].mxu0
        %v4009 = vadd.f32 0.0, %v4008
        %v4010 = vpop.f32.mrb[0].mxu0
        %4011 = vmatprep.mubr.f32.mxu0 0.0
        %4012 = vmatmul.mubr.f32.gmra.mrb[0].mxu0 %v3842
        %v4013 = vpop.f32.mrb[0].mxu0
        %v4014 = vadd.f32 0.0, %v4013
        %v4015 = vpop.f32.mrb[0].mxu0
        %4016 = vmatprep.mubr.f32.mxu0 0.0
        %4017 = vmatmul.mubr.f32.gmra.mrb[0].mxu0 %v3845
        %v4018 = vpop.f32.mrb[0].mxu0
        %v4019 = vadd.f32 0.0, %v4018
        %v4020 = vpop.f32.mrb[0].mxu0
        %4021 = vmatprep.mubr.f32.mxu0 0.0
        %4022 = vmatmul.mubr.f32.gmra.mrb[0].mxu0 %v3848
        %v4023 = vpop.f32.mrb[0].mxu0
        %v4024 = vadd.f32 0.0, %v4023
        %v4025 = vpop.f32.mrb[0].mxu0
        %4026 = vmatprep.mubr.f32.mxu0 0.0
        %4027 = vmatmul.mubr.f32.gmra.mrb[0].mxu0 %v3851
        %v4028 = vpop.f32.mrb[0].mxu0
        %v4029 = vadd.f32 0.0, %v4028
        %v4030 = vpop.f32.mrb[0].mxu0
        %4031 = vmatprep.mubr.f32.mxu0 0.0
        %4032 = vmatmul.mubr.f32.gmra.mrb[0].mxu0 %v3854
        %v4033 = vpop.f32.mrb[0].mxu0
        %v4034 = vadd.f32 0.0, %v4033
        %v4035 = vpop.f32.mrb[0].mxu0
        %4036 = vmatprep.mubr.f32.mxu0 0.0
        %4037 = vmatmul.mubr.f32.gmra.mrb[0].mxu0 %v3857
        %v4038 = vpop.f32.mrb[0].mxu0
        %v4039 = vadd.f32 0.0, %v4038
        %v4040 = vpop.f32.mrb[0].mxu0
        %4041 = vmatprep.mubr.f32.mxu0 0.0
        %4042 = vmatmul.mubr.f32.gmra.mrb[0].mxu0 %v3860
        %v4043 = vpop.f32.mrb[0].mxu0
        %v4044 = vadd.f32 0.0, %v4043
        %v4045 = vpop.f32.mrb[0].mxu0
        %4046 = vmatprep.mubr.f32.mxu0 0.0
        %4047 = vmatmul.mubr.f32.gmra.mrb[0].mxu0 %v3863
        %v4048 = vpop.f32.mrb[0].mxu0
        %v4049 = vadd.f32 0.0, %v4048
        %v4050 = vpop.f32.mrb[0].mxu0
        %4051 = vmatprep.mubr.f32.mxu0 0.0
        %4052 = vmatmul.mubr.f32.gmra.mrb[0].mxu0 %v3866
        %v4053 = vpop.f32.mrb[0].mxu0
        %v4054 = vadd.f32 0.0, %v4053
        %v4055 = vpop.f32.mrb[0].mxu0
        %4056 = vmatprep.mubr.f32.mxu0 0.0
        %4057 = vmatmul.mubr.f32.gmra.mrb[0].mxu0 %v3869
        %v4058 = vpop.f32.mrb[0].mxu0
        %v4059 = vadd.f32 0.0, %v4058
        %v4060 = vpop.f32.mrb[0].mxu0
        %4061 = vmatprep.mubr.f32.mxu0 0.0
        %4062 = vmatmul.mubr.f32.gmra.mrb[0].mxu0 %v3872
        %v4063 = vpop.f32.mrb[0].mxu0
        %v4064 = vadd.f32 0.0, %v4063
        %v4065 = vpop.f32.mrb[0].mxu0
        %4066 = vmatprep.mubr.f32.mxu0 0.0
        %4067 = vmatmul.mubr.f32.gmra.mrb[0].mxu0 %v3875
        %v4068 = vpop.f32.mrb[0].mxu0
        %v4069 = vadd.f32 0.0, %v4068
        %v4070 = vpop.f32.mrb[0].mxu0
        %4071 = vmatprep.mubr.f32.mxu0 0.0
        %4072 = vmatmul.mubr.f32.gmra.mrb[0].mxu0 %v3878
        %v4073 = vpop.f32.mrb[0].mxu0
        %v4074 = vadd.f32 0.0, %v4073
        %v4075 = vpop.f32.mrb[0].mxu0
        %4076 = vmatprep.mubr.f32.mxu0 0.0
        %4077 = vmatmul.mubr.f32.gmra.mrb[0].mxu0 %v3881
        %v4078 = vpop.f32.mrb[0].mxu0
        %v4079 = vadd.f32 0.0, %v4078
        %v4080 = vpop.f32.mrb[0].mxu0
        %4081 = vmatprep.mubr.f32.mxu0 0.0
        %4082 = vmatmul.mubr.f32.gmra.mrb[0].mxu0 %v3884
        %v4083 = vpop.f32.mrb[0].mxu0
        %v4084 = vadd.f32 0.0, %v4083
        %v4085 = vpop.f32.mrb[0].mxu0
        %4086 = vmatprep.mubr.f32.mxu0 0.0
        %4087 = vmatmul.mubr.f32.gmra.mrb[0].mxu0 %v3887
        %v4088 = vpop.f32.mrb[0].mxu0
        %v4089 = vadd.f32 0.0, %v4088
        %v4090 = vpop.f32.mrb[0].mxu0
        %4091 = vmatprep.mubr.f32.mxu0 0.0
        %4092 = vmatmul.mubr.f32.gmra.mrb[0].mxu0 %v3890
        %v4093 = vpop.f32.mrb[0].mxu0
        %v4094 = vadd.f32 0.0, %v4093
        %v4095 = vpop.f32.mrb[0].mxu0
        %4096 = vmatprep.mubr.f32.mxu0 0.0
        %4097 = vmatmul.mubr.f32.gmra.mrb[0].mxu0 %v3893
        %v4098 = vpop.f32.mrb[0].mxu0
        %v4099 = vadd.f32 0.0, %v4098
        %v4100 = vpop.f32.mrb[0].mxu0
        %4101 = vmatprep.mubr.f32.mxu0 0.0
        %4102 = vmatmul.mubr.f32.gmra.mrb[0].mxu0 %v3896
        %v4103 = vpop.f32.mrb[0].mxu0
        %v4104 = vadd.f32 0.0, %v4103
        %v4105 = vpop.f32.mrb[0].mxu0
        %4106 = vmatprep.mubr.f32.mxu0 0.0
        %4107 = vmatmul.mubr.f32.gmra.mrb[0].mxu0 %v3899
        %v4108 = vpop.f32.mrb[0].mxu0
        %v4109 = vadd.f32 0.0, %v4108
        %v4110 = vpop.f32.mrb[0].mxu0
        %4111 = vmatprep.mubr.f32.mxu0 0.0
        %4112 = vmatmul.mubr.f32.gmra.mrb[0].mxu0 %v3902
        %v4113 = vpop.f32.mrb[0].mxu0
        %v4114 = vadd.f32 0.0, %v4113
        %v4115 = vpop.f32.mrb[0].mxu0
        %4116 = vmatprep.mubr.f32.mxu0 0.0
        %4117 = vmatmul.mubr.f32.gmra.mrb[0].mxu0 %v3905
        %v4118 = vpop.f32.mrb[0].mxu0
        %v4119 = vadd.f32 0.0, %v4118
        %v4120 = vpop.f32.mrb[0].mxu0
        %4121 = vmatprep.mubr.f32.mxu0 0.0
        %4122 = vmatmul.mubr.f32.gmra.mrb[0].mxu0 %v3908
        %v4123 = vpop.f32.mrb[0].mxu0
        %v4124 = vadd.f32 0.0, %v4123
        %v4125 = vpop.f32.mrb[0].mxu0
        %4126 = vmatprep.mubr.f32.mxu0 0.0
        %4127 = vmatmul.mubr.f32.gmra.mrb[0].mxu0 %v3911
        %v4128 = vpop.f32.mrb[0].mxu0
        %v4129 = vadd.f32 0.0, %v4128
        %v4130 = vpop.f32.mrb[0].mxu0
        %4131 = vmatprep.mubr.f32.mxu0 0.0
        %4132 = vmatmul.mubr.f32.gmra.mrb[0].mxu0 %v3914
        %v4133 = vpop.f32.mrb[0].mxu0
        %v4134 = vadd.f32 0.0, %v4133
        %v4135 = vpop.f32.mrb[0].mxu0
        %4136 = vmatprep.mubr.f32.mxu0 0.0
        %4137 = vmatmul.mubr.f32.gmra.mrb[0].mxu0 %v3917
        %v4138 = vpop.f32.mrb[0].mxu0
        %v4139 = vadd.f32 0.0, %v4138
        %v4140 = vpop.f32.mrb[0].mxu0
        %4141 = vmatprep.mubr.f32.mxu0 0.0
        %4142 = vmatmul.mubr.f32.gmra.mrb[0].mxu0 %v3920
        %v4143 = vpop.f32.mrb[0].mxu0
        %v4144 = vadd.f32 0.0, %v4143
        %v4145 = vpop.f32.mrb[0].mxu0
        %4146 = vdwg.mxu0
        %v4147 = vadd.f32 %v3760, %v3989
        %v4148 = vadd.f32 %v3761, %v3994
        %v4149 = vadd.f32 %v3762, %v3999
        %v4150 = vadd.f32 %v3763, %v4004
        %v4151 = vadd.f32 %v3764, %v4009
        %v4152 = vadd.f32 %v3765, %v4014
        %v4153 = vadd.f32 %v3766, %v4019
        %v4154 = vadd.f32 %v3767, %v4024
        %v4155 = vadd.f32 %v3768, %v4029
        %v4156 = vadd.f32 %v3769, %v4034
        %v4157 = vadd.f32 %v3770, %v4039
        %v4158 = vadd.f32 %v3771, %v4044
        %v4159 = vadd.f32 %v3772, %v4049
        %v4160 = vadd.f32 %v3773, %v4054
        %v4161 = vadd.f32 %v3774, %v4059
        %v4162 = vadd.f32 %v3775, %v4064
        %v4163 = vadd.f32 %v3776, %v4069
        %v4164 = vadd.f32 %v3777, %v4074
        %v4165 = vadd.f32 %v3778, %v4079
        %v4166 = vadd.f32 %v3779, %v4084
        %v4167 = vadd.f32 %v3780, %v4089
        %v4168 = vadd.f32 %v3781, %v4094
        %v4169 = vadd.f32 %v3782, %v4099
        %v4170 = vadd.f32 %v3783, %v4104
        %v4171 = vadd.f32 %v3784, %v4109
        %v4172 = vadd.f32 %v3785, %v4114
        %v4173 = vadd.f32 %v3786, %v4119
        %v4174 = vadd.f32 %v3787, %v4124
        %v4175 = vadd.f32 %v3788, %v4129
        %v4176 = vadd.f32 %v3789, %v4134
        %v4177 = vadd.f32 %v3790, %v4139
        %v4178 = vadd.f32 %v3791, %v4144
        %v4179 = vld [vmem:[%s4] sm:$0x1]
        %v4181 = vlaneseq
        %v4182 = vshrl.u32 %v4181, 7
        %v4183 = vsub.s32 0, %v4182
        %v4184 = vrot.slane %v4179, %v4183
        %v4186 = vadd.f32 %v4147, %v4184
        %v4187 = vadd.f32 %v4148, %v4184
        %v4188 = vadd.f32 %v4149, %v4184
        %v4189 = vadd.f32 %v4150, %v4184
        %v4190 = vadd.f32 %v4151, %v4184
        %v4191 = vadd.f32 %v4152, %v4184
        %v4192 = vadd.f32 %v4153, %v4184
        %v4193 = vadd.f32 %v4154, %v4184
        %v4194 = vadd.f32 %v4155, %v4184
        %v4195 = vadd.f32 %v4156, %v4184
        %v4196 = vadd.f32 %v4157, %v4184
        %v4197 = vadd.f32 %v4158, %v4184
        %v4198 = vadd.f32 %v4159, %v4184
        %v4199 = vadd.f32 %v4160, %v4184
        %v4200 = vadd.f32 %v4161, %v4184
        %v4201 = vadd.f32 %v4162, %v4184
        %v4202 = vadd.f32 %v4163, %v4184
        %v4203 = vadd.f32 %v4164, %v4184
        %v4204 = vadd.f32 %v4165, %v4184
        %v4205 = vadd.f32 %v4166, %v4184
        %v4206 = vadd.f32 %v4167, %v4184
        %v4207 = vadd.f32 %v4168, %v4184
        %v4208 = vadd.f32 %v4169, %v4184
        %v4209 = vadd.f32 %v4170, %v4184
        %v4210 = vadd.f32 %v4171, %v4184
        %v4211 = vadd.f32 %v4172, %v4184
        %v4212 = vadd.f32 %v4173, %v4184
        %v4213 = vadd.f32 %v4174, %v4184
        %v4214 = vadd.f32 %v4175, %v4184
        %v4215 = vadd.f32 %v4176, %v4184
        %v4216 = vadd.f32 %v4177, %v4184
        %v4217 = vadd.f32 %v4178, %v4184
        %v4218 = vmax.f32 %v4186, 0.0
        %v4219 = vmax.f32 %v4187, 0.0
        %v4220 = vmax.f32 %v4188, 0.0
        %v4221 = vmax.f32 %v4189, 0.0
        %v4222 = vmax.f32 %v4190, 0.0
        %v4223 = vmax.f32 %v4191, 0.0
        %v4224 = vmax.f32 %v4192, 0.0
        %v4225 = vmax.f32 %v4193, 0.0
        %v4226 = vmax.f32 %v4194, 0.0
        %v4227 = vmax.f32 %v4195, 0.0
        %v4228 = vmax.f32 %v4196, 0.0
        %v4229 = vmax.f32 %v4197, 0.0
        %v4230 = vmax.f32 %v4198, 0.0
        %v4231 = vmax.f32 %v4199, 0.0
        %v4232 = vmax.f32 %v4200, 0.0
        %v4233 = vmax.f32 %v4201, 0.0
        %v4234 = vmax.f32 %v4202, 0.0
        %v4235 = vmax.f32 %v4203, 0.0
        %v4236 = vmax.f32 %v4204, 0.0
        %v4237 = vmax.f32 %v4205, 0.0
        %v4238 = vmax.f32 %v4206, 0.0
        %v4239 = vmax.f32 %v4207, 0.0
        %v4240 = vmax.f32 %v4208, 0.0
        %v4241 = vmax.f32 %v4209, 0.0
        %v4242 = vmax.f32 %v4210, 0.0
        %v4243 = vmax.f32 %v4211, 0.0
        %v4244 = vmax.f32 %v4212, 0.0
        %v4245 = vmax.f32 %v4213, 0.0
        %v4246 = vmax.f32 %v4214, 0.0
        %v4247 = vmax.f32 %v4215, 0.0
        %v4248 = vmax.f32 %v4216, 0.0
        %v4249 = vmax.f32 %v4217, 0.0
        %4250 = vst.msk [vmem:[%s273] sm:$0xff] %vm274, %v4218
        %4251 = vst.msk [vmem:[%s273 + $0x8] sm:$0xff] %vm274, %v4219
        %4252 = vst.msk [vmem:[%s273 + $0x10] sm:$0xff] %vm274, %v4220
        %4253 = vst.msk [vmem:[%s273 + $0x18] sm:$0xff] %vm274, %v4221
        %4254 = vst.msk [vmem:[%s273 + $0x20] sm:$0xff] %vm274, %v4222
        %4255 = vst.msk [vmem:[%s273 + $0x28] sm:$0xff] %vm274, %v4223
        %4256 = vst.msk [vmem:[%s273 + $0x30] sm:$0xff] %vm274, %v4224
        %4257 = vst.msk [vmem:[%s273 + $0x38] sm:$0xff] %vm274, %v4225
        %4258 = vst.msk [vmem:[%s273 + $0x40] sm:$0xff] %vm274, %v4226
        %4259 = vst.msk [vmem:[%s273 + $0x48] sm:$0xff] %vm274, %v4227
        %4260 = vst.msk [vmem:[%s273 + $0x50] sm:$0xff] %vm274, %v4228
        %4261 = vst.msk [vmem:[%s273 + $0x58] sm:$0xff] %vm274, %v4229
        %4262 = vst.msk [vmem:[%s273 + $0x60] sm:$0xff] %vm274, %v4230
        %4263 = vst.msk [vmem:[%s273 + $0x68] sm:$0xff] %vm274, %v4231
        %4264 = vst.msk [vmem:[%s273 + $0x70] sm:$0xff] %vm274, %v4232
        %4265 = vst.msk [vmem:[%s273 + $0x78] sm:$0xff] %vm274, %v4233
        %4266 = vst.msk [vmem:[%s273 + $0x80] sm:$0xff] %vm274, %v4234
        %4267 = vst.msk [vmem:[%s273 + $0x88] sm:$0xff] %vm274, %v4235
        %4268 = vst.msk [vmem:[%s273 + $0x90] sm:$0xff] %vm274, %v4236
        %4269 = vst.msk [vmem:[%s273 + $0x98] sm:$0xff] %vm274, %v4237
        %4270 = vst.msk [vmem:[%s273 + $0xa0] sm:$0xff] %vm274, %v4238
        %4271 = vst.msk [vmem:[%s273 + $0xa8] sm:$0xff] %vm274, %v4239
        %4272 = vst.msk [vmem:[%s273 + $0xb0] sm:$0xff] %vm274, %v4240
        %4273 = vst.msk [vmem:[%s273 + $0xb8] sm:$0xff] %vm274, %v4241
        %4274 = vst.msk [vmem:[%s273 + $0xc0] sm:$0xff] %vm274, %v4242
        %4275 = vst.msk [vmem:[%s273 + $0xc8] sm:$0xff] %vm274, %v4243
        %4276 = vst.msk [vmem:[%s273 + $0xd0] sm:$0xff] %vm274, %v4244
        %4277 = vst.msk [vmem:[%s273 + $0xd8] sm:$0xff] %vm274, %v4245
        %4278 = vst.msk [vmem:[%s273 + $0xe0] sm:$0xff] %vm274, %v4246
        %4279 = vst.msk [vmem:[%s273 + $0xe8] sm:$0xff] %vm274, %v4247
        %4280 = vst.msk [vmem:[%s273 + $0xf0] sm:$0xff] %vm274, %v4248
        %4281 = vst.msk [vmem:[%s273 + $0xf8] sm:$0xff] %vm274, %v4249
        %p4282 = scmp.lt.s32.totalorder %s20, 1
        %s4283 = scalar_select %p4282, %s20, 1
        %s4284 = smul.addr %s4283, 32
        %s4285 = smul.addr %s4284, 8
        %s4286 = scalar_lea.vmem %s5, %s4285
        // Predicated region
        $region53: #{_lambda_.2} parent=39 // pred_check
          %p4287 = pneg %p148
        $region54: #{_lambda_.2} parent=39 // pred_check_branch
          %4289 = sbr.rel (%p4287) target = $region56
        $region55: #{_lambda_.2} parent=39 // pred_region
          _
        $region56: #{_lambda_.2} parent=39 // pred_fallthru
          _
      $region40: #{_lambda_.2} parent=5 // pred_fallthru
        _
      %p4290 = scmp.le.s32.totalorder 2, %s15
      // Predicated region
      $region57: #{_lambda_.2} parent=5 // pred_check
        %p4291 = pneg %p4290
      $region58: #{_lambda_.2} parent=5 // pred_check_branch
        %4293 = sbr.rel (%p4291) target = $region60
      $region59: #{_lambda_.2} parent=5 // pred_region
        %s4294 = ssub.s32 %s15, 2
        // Predicated region
        $region61: #{_lambda_.2} parent=59 // pred_check
          %p4295 = pneg %p154
        $region62: #{_lambda_.2} parent=59 // pred_check_branch
          %4297 = sbr.rel (%p4295) target = $region64
        $region63: #{_lambda_.2} parent=59 // pred_region
          %p4298 = scmp.lt.s32.totalorder %s21, 1
          %s4299 = scalar_select %p4298, %s21, 1
          %s4300 = smul.addr %s4299, 32
          %s4301 = smul.addr %s4300, 8
          %s4302 = scalar_lea.vmem %s5, %s4301
        $region64: #{_lambda_.2} parent=59 // pred_fallthru
          _
      $region60: #{_lambda_.2} parent=5 // pred_fallthru
        _
    $region6: #{_lambda_.2} parent=1 // loop_footer
      %s19 = sadd.s32 1, %s15
    $region7: #{_lambda_.2} parent=1 // loop_footer_branch
      %14 = sbr.rel target = $region3
    $region8: #{_lambda_.2} parent=1 // loop_exit
      _
    %4303 = vsyncpa [#allocation4], 1
    %s4304 = scalar_lea.sflag [#allocation4], 1
    %4305 = vsyncpa %s4304, 1
    %4306 = vsyncpa [#allocation6], 1

</llo_original>
